<compile_context>
chip_gen: v6e
topology: v6e:2x2x1
jax: 0.10.0
libtpu: 0.0.40
codegen_flags: <defaults>
</compile_context>

<pallas_src>
import jax
import jax.numpy as jnp
import numpy as np
from jax.experimental import pallas as pl
from jax.experimental.pallas import tpu as pltpu

RESIDUAL_KERNELS = 32   # config.RESIDUAL_KERNELS
NUM_RESIDUALS = 2
BOARD_SIZE = 8
BATCH = 2
BN_EPS = 1e-5

# MXU-boundary dtype (weights pre-cast at init, activations cast at jnp.dot).
MXU_DTYPE = jnp.bfloat16


def _vmem_specs(k):
    return [pl.BlockSpec(memory_space=pltpu.MemorySpace.VMEM) for _ in range(k)]


# ---------------------------------------------------------------------------
# Fused forward kernel.
#   x_ref   : (B, H, W*3)        input, NHWC with (w, c) folded into lanes
#   in_w    : (3, Wp*3, W*K)     bottom conv block-Toeplitz weights (BN folded)
#   in_b    : (1, W*K)           bottom BN shift, tiled over w
#   res_w   : (2*NR, 3, Wp*K, W*K)  residual conv Toeplitz weights (BN folded)
#   res_b   : (2*NR, 1, W*K)
#   hc_w    : (W*K, W*3)         fused policy+value 1x1 conv, block-diagonal
#   hc_b    : (1, W*3)
#   mask    : (B*H, H*W*3)       0/1 row-ownership mask (fold -> flat on MXU)
#   sel     : (B, B*H)           0/1 batch selector
#   lin_w   : (H*W*3, n+K)       fused policy Linear + value Linear1
#   lin_b   : (1, n+K)
#   v2_w/b  : (K, 1) / (1, 1)    value Linear2
#   outputs : policy (B, n), value (B, 1)
#   scratch : xin  (B, Hp, Wp*3) zero-padded input buffer
#             xbuf (B, Hp, Wp*K) zero-padded trunk buffer
# Folded-buffer convention: valid pixels live at row slots 1..H and column
# pixel-slots 0..W-1; row slots 0, Hp-1 and pixel-slots W, W+1 are always zero
# and realize the conv zero padding (the Toeplitz weights map the "-1" pixel
# onto the last zero slot via mod-Wp indexing).
# ---------------------------------------------------------------------------
def fused_forward_kernel(x_ref, in_w_ref, in_b_ref, res_w_ref, res_b_ref,
                         hc_w_ref, hc_b_ref, mask_ref, sel_ref,
                         lin_w_ref, lin_b_ref, v2_w_ref, v2_b_ref,
                         policy_ref, value_ref, xin_ref, xbuf_ref):
    B, H, WC_in = x_ref.shape
    _, Hp, WpK = xbuf_ref.shape
    W = H                       # square board
    Wp = W + 2
    K = WpK // Wp               # trunk channels
    WK = W * K                  # folded trunk row width (lanes)
    M = B * H                   # folded row count
    n = H * W                   # board squares

    def mxdot(a, b):
        return jnp.dot(a.astype(MXU_DTYPE), b.astype(MXU_DTYPE),
                       preferred_element_type=jnp.float32)

    def conv3x3(buf_ref, get_w, bias, skip=None):
        # Folded block-Toeplitz 3x3 conv: 3 matmuls (one per dh tap), no
        # im2col gather/concat.  buf_ref: (B, Hp, Wp*Cin) zero-padded scratch.
        wpc = buf_ref.shape[2]
        acc = None
        for dh in range(3):
            a = buf_ref[:, dh:dh + H, :].reshape(M, wpc)   # (M, Wp*Cin)
            t = mxdot(a, get_w(dh))                        # (M, W*K), f32 acc
            acc = t if acc is None else acc + t
        y = acc + bias
        if skip is not None:
            y = y + skip
        return jnp.maximum(y, 0.0)

    # ---- bottom conv (in-kernel zero padding, 3 input channels) -----------
    xin_ref[...] = jnp.zeros(xin_ref.shape, xin_ref.dtype)
    xin_ref[:, 1:H + 1, 0:WC_in] = x_ref[...]
    act = conv3x3(xin_ref, lambda dh: in_w_ref[dh], in_b_ref[...])    # (M, WK)

    # ---- residual tower ----------------------------------------------------
    xbuf_ref[...] = jnp.zeros(xbuf_ref.shape, xbuf_ref.dtype)
    num_blocks = res_w_ref.shape[0] // 2
    for blk in range(num_blocks):
        l0, l1 = 2 * blk, 2 * blk + 1
        xbuf_ref[:, 1:H + 1, 0:WK] = act.reshape(B, H, WK)
        hmid = conv3x3(xbuf_ref, lambda dh, l=l0: res_w_ref[l, dh],
                       res_b_ref[l0])
        xbuf_ref[:, 1:H + 1, 0:WK] = hmid.reshape(B, H, WK)
        act = conv3x3(xbuf_ref, lambda dh, l=l1: res_w_ref[l, dh],
                      res_b_ref[l1], skip=act)

    # ---- heads -------------------------------------------------------------
    # Fused policy(2ch)+value(1ch) 1x1 conv: one block-diagonal matmul.
    ph = jnp.maximum(mxdot(act, hc_w_ref[...]) + hc_b_ref[...], 0.0)  # (M, W*3)
    # Fold -> per-batch flat features on the MXU (no minor-dim reshape):
    # lane-tile, mask to the owning row, contract rows with the batch selector.
    ph_t = jnp.concatenate([ph] * H, axis=-1) * mask_ref[...]         # (M, H*W*3)
    flat = mxdot(sel_ref[...], ph_t)                                  # (B, H*W*3)
    out = mxdot(flat, lin_w_ref[...]) + lin_b_ref[...]                # (B, n+K)

    logits = out[:, 0:n]
    u = jnp.maximum(out[:, n:], 0.0)                                  # (B, K)
    value = jnp.tanh(mxdot(u, v2_w_ref[...]) + v2_b_ref[...])         # (B, 1)
    value_ref[...] = value.astype(value_ref.dtype)

    mx = jnp.max(logits, axis=-1, keepdims=True)
    e = jnp.exp(logits - mx)
    policy_ref[...] = (e / jnp.sum(e, axis=-1, keepdims=True)).astype(
        policy_ref.dtype)


# ---------------------------------------------------------------------------
# Deterministic parameter initialization (BN folded eval-mode, weights packed
# into the folded block-Toeplitz / block-diagonal / fused-linear layouts).
# ---------------------------------------------------------------------------
def _bn_fold(key, c):
    kg, kb, km, kv = jax.random.split(key, 4)
    gamma = 1.0 + 0.1 * jax.random.normal(kg, (c,), jnp.float32)
    beta = 0.1 * jax.random.normal(kb, (c,), jnp.float32)
    mean = 0.1 * jax.random.normal(km, (c,), jnp.float32)
    var = 1.0 + 0.1 * jax.random.uniform(kv, (c,), jnp.float32)
    scale = gamma / jnp.sqrt(var + BN_EPS)
    shift = beta - mean * scale
    return np.asarray(scale), np.asarray(shift)


def _toeplitz_pack(w3, wp, w):
    # w3: (3, 3, cin, cout) -> T (3, wp*cin, w*cout):
    # T[dh, s*cin+c, j*cout+o] = w3[dh, dw, c, o], s = (j+dw-1) mod wp.
    # Pixel slots s = w, w+1 of the folded buffer are always zero and realize
    # the left/right conv padding.
    _, _, cin, cout = w3.shape
    T = np.zeros((3, wp * cin, w * cout), np.float32)
    for dh in range(3):
        for j in range(w):
            for dw in range(3):
                s = (j + dw - 1) % wp
                T[dh, s * cin:(s + 1) * cin, j * cout:(j + 1) * cout] = w3[dh, dw]
    return T


def _conv3x3_toeplitz(key, cin, cout, w, wp):
    kw, kb = jax.random.split(key)
    w3 = np.asarray(jax.random.normal(kw, (3, 3, cin, cout), jnp.float32))
    w3 = w3 / np.sqrt(9.0 * cin)
    scale, shift = _bn_fold(kb, cout)
    w3 = w3 * scale[None, None, None, :]
    return _toeplitz_pack(w3, wp, w), np.tile(shift, w).reshape(1, w * cout)


def _conv1x1_folded(key, cin, cout):
    kw, kb = jax.random.split(key)
    wc = np.asarray(jax.random.normal(kw, (cin, cout), jnp.float32)) / np.sqrt(cin)
    scale, shift = _bn_fold(kb, cout)
    return wc * scale[None, :], shift


def _linear(key, fin, fout):
    kw, kb = jax.random.split(key)
    bound = float(1.0 / np.sqrt(fin))
    w = np.asarray(jax.random.uniform(kw, (fin, fout), jnp.float32, -bound, bound))
    b = np.asarray(jax.random.uniform(kb, (1, fout), jnp.float32, -bound, bound))
    return w, b


def init_params(key, num_residuals, board_size, batch):
    K = RESIDUAL_KERNELS
    H = W = board_size
    Wp = W + 2
    n = H * W
    keys = iter(jax.random.split(key, 6 + 2 * num_residuals))
    p = {}

    # bottom 3x3 conv (BN folded), block-Toeplitz packed over the folded W axis
    T, b = _conv3x3_toeplitz(next(keys), 3, K, W, Wp)
    p["in_w"] = jnp.asarray(T, MXU_DTYPE)                  # (3, Wp*3, W*K)
    p["in_b"] = jnp.asarray(b, jnp.float32)

    Ts, bs = [], []
    for _ in range(num_residuals):
        for _ in range(2):
            T, b = _conv3x3_toeplitz(next(keys), K, K, W, Wp)
            Ts.append(T)
            bs.append(b)
    p["res_w"] = jnp.asarray(np.stack(Ts), MXU_DTYPE)      # (2*NR, 3, Wp*K, W*K)
    p["res_b"] = jnp.asarray(np.stack(bs), jnp.float32)

    # policy (2ch) + value (1ch) 1x1 convs fused into one block-diagonal weight
    pcw, psh = _conv1x1_folded(next(keys), K, 2)
    pw, pb = _linear(next(keys), 2 * n, n)
    vcw, vsh = _conv1x1_folded(next(keys), K, 1)
    vw1, vb1 = _linear(next(keys), n, K)
    vw2, vb2 = _linear(next(keys), K, 1)

    wc = np.concatenate([pcw, vcw], axis=1)                # (K, 3): o=0,1 policy; o=2 value
    sh = np.concatenate([psh, vsh])                        # (3,)
    hc_w = np.zeros((W * K, W * 3), np.float32)
    for j in range(W):
        hc_w[j * K:(j + 1) * K, j * 3:(j + 1) * 3] = wc
    p["hc_w"] = jnp.asarray(hc_w, MXU_DTYPE)
    p["hc_b"] = jnp.asarray(np.tile(sh, W).reshape(1, W * 3), jnp.float32)

    # Fused Linear stage: rows follow the flattened folded layout (i, j, o)
    # (torch's channel-major flatten is baked into the row mapping), columns =
    # [policy logits (n) | value hidden (K)].
    lin_w = np.zeros((H * W * 3, n + K), np.float32)
    for i in range(H):
        for j in range(W):
            r = (i * W + j) * 3
            for o in range(2):
                lin_w[r + o, 0:n] = pw[o * n + i * W + j, :]
            lin_w[r + 2, n:n + K] = vw1[i * W + j, :]
    p["lin_w"] = jnp.asarray(lin_w, MXU_DTYPE)             # (H*W*3, n+K)
    p["lin_b"] = jnp.asarray(np.concatenate([pb, vb1], axis=1), jnp.float32)
    p["v2_w"] = jnp.asarray(vw2, MXU_DTYPE)
    p["v2_b"] = jnp.asarray(vb2, jnp.float32)

    # Static fold->flat helpers, precomputed host-side (no in-kernel builds).
    mask = np.zeros((batch * H, H * W * 3), np.float32)
    for r in range(batch * H):
        i = r % H
        mask[r, i * W * 3:(i + 1) * W * 3] = 1.0
    sel = np.zeros((batch, batch * H), np.float32)
    for b_ in range(batch):
        sel[b_, b_ * H:(b_ + 1) * H] = 1.0
    p["mask"] = jnp.asarray(mask, jnp.float32)
    p["sel"] = jnp.asarray(sel, jnp.float32)
    return p


# ---------------------------------------------------------------------------
# Forward pass: one tiny XLA prep (NCHW -> folded NHWC) + one fused kernel.
# ---------------------------------------------------------------------------
def residual_alpha_forward(x_nchw, params):
    B, cin, H, W = x_nchw.shape
    K = RESIDUAL_KERNELS
    Wp = W + 2
    n = H * W
    # Lane-fold (w, c); spatial zero padding happens inside the kernel.
    x = jnp.transpose(x_nchw, (0, 2, 3, 1)).reshape(B, H, W * cin)

    policy, value = pl.pallas_call(
        fused_forward_kernel,
        out_shape=(jax.ShapeDtypeStruct((B, n), jnp.float32),
                   jax.ShapeDtypeStruct((B, 1), jnp.float32)),
        in_specs=_vmem_specs(13),
        out_specs=tuple(_vmem_specs(2)),
        scratch_shapes=[pltpu.VMEM((B, H + 2, Wp * cin), jnp.float32),
                        pltpu.VMEM((B, H + 2, Wp * K), jnp.float32)],
    )(x,
      params["in_w"], params["in_b"], params["res_w"], params["res_b"],
      params["hc_w"], params["hc_b"], params["mask"], params["sel"],
      params["lin_w"], params["lin_b"], params["v2_w"], params["v2_b"])
    return policy, value


if __name__ == "__main__":
    key = jax.random.PRNGKey(0)
    kx, kp = jax.random.split(key)
    x = jax.random.normal(kx, (BATCH, 3, BOARD_SIZE, BOARD_SIZE), jnp.float32)
    params = init_params(kp, NUM_RESIDUALS, BOARD_SIZE, BATCH)

    fwd = jax.jit(residual_alpha_forward)
    policy, value = fwd(x, params)
    jax.block_until_ready((policy, value))

    assert policy.shape == (BATCH, BOARD_SIZE * BOARD_SIZE)
    assert value.shape == (BATCH, 1)
    assert bool(jnp.all(jnp.isfinite(policy))) and bool(jnp.all(jnp.isfinite(value)))
    # exact softmax normalization in-kernel
    assert bool(jnp.allclose(jnp.sum(policy, axis=1), 1.0, atol=1e-3))
    assert bool(jnp.all(jnp.abs(value) <= 1.0 + 1e-6))
    print("KERNEL_OK")
</pallas_src>

<mosaic_0001>
module attributes {stable_mosaic.version = 11 : i64} {
  func.func @fused_forward_kernel(%arg0: memref<2x8x24xf32, #tpu.memory_space<vmem>>, %arg1: memref<3x30x256xbf16, #tpu.memory_space<vmem>>, %arg2: memref<1x256xf32, #tpu.memory_space<vmem>>, %arg3: memref<4x3x320x256xbf16, #tpu.memory_space<vmem>>, %arg4: memref<4x1x256xf32, #tpu.memory_space<vmem>>, %arg5: memref<256x24xbf16, #tpu.memory_space<vmem>>, %arg6: memref<1x24xf32, #tpu.memory_space<vmem>>, %arg7: memref<16x192xf32, #tpu.memory_space<vmem>>, %arg8: memref<2x16xf32, #tpu.memory_space<vmem>>, %arg9: memref<192x96xbf16, #tpu.memory_space<vmem>>, %arg10: memref<1x96xf32, #tpu.memory_space<vmem>>, %arg11: memref<32x1xbf16, #tpu.memory_space<vmem>>, %arg12: memref<1x1xf32, #tpu.memory_space<vmem>>, %arg13: memref<2x64xf32, #tpu.memory_space<vmem>>, %arg14: memref<2x1xf32, #tpu.memory_space<vmem>>, %arg15: memref<2x10x30xf32, #tpu.memory_space<vmem>>, %arg16: memref<2x10x320xf32, #tpu.memory_space<vmem>>) attributes {dimension_semantics = [], scalar_prefetch = 0 : i64, scratch_operands = 2 : i64, tpu.core_type = #tpu.core_type<tc>} {
    %cst = arith.constant 0.000000e+00 : f32
    %0 = vector.broadcast %cst : f32 to vector<2x10x30xf32>
    %c0 = arith.constant 0 : index
    %c0_0 = arith.constant 0 : index
    %c0_1 = arith.constant 0 : index
    %1 = vector.load %arg15[%c0, %c0_0, %c0_1] : memref<2x10x30xf32, #tpu.memory_space<vmem>>, vector<2x10x30xf32>
    tpu.vector_store %arg15[%c0, %c0_0, %c0_1], %0 {strides = array<i32>} : memref<2x10x30xf32, #tpu.memory_space<vmem>>, vector<2x10x30xf32>,
    %c0_2 = arith.constant 0 : index
    %c0_3 = arith.constant 0 : index
    %c0_4 = arith.constant 0 : index
    %2 = vector.load %arg0[%c0_2, %c0_3, %c0_4] : memref<2x8x24xf32, #tpu.memory_space<vmem>>, vector<2x8x24xf32>
    %c0_5 = arith.constant 0 : index
    %c1 = arith.constant 1 : index
    %c0_6 = arith.constant 0 : index
    %3 = vector.load %arg15[%c0_5, %c1, %c0_6] : memref<2x10x30xf32, #tpu.memory_space<vmem>>, vector<2x8x24xf32>
    tpu.vector_store %arg15[%c0_5, %c1, %c0_6], %2 {strides = array<i32>} : memref<2x10x30xf32, #tpu.memory_space<vmem>>, vector<2x8x24xf32>,
    %c0_7 = arith.constant 0 : index
    %c0_8 = arith.constant 0 : index
    %4 = vector.load %arg2[%c0_7, %c0_8] : memref<1x256xf32, #tpu.memory_space<vmem>>, vector<1x256xf32>
    %c0_9 = arith.constant 0 : index
    %c0_10 = arith.constant 0 : index
    %c0_11 = arith.constant 0 : index
    %5 = vector.load %arg15[%c0_9, %c0_10, %c0_11] : memref<2x10x30xf32, #tpu.memory_space<vmem>>, vector<2x8x30xf32>
    %6 = vector.shape_cast %5 : vector<2x8x30xf32> to vector<16x30xf32>
    %c0_12 = arith.constant 0 : index
    %c0_13 = arith.constant 0 : index
    %c0_14 = arith.constant 0 : index
    %7 = vector.load %arg1[%c0_12, %c0_13, %c0_14] : memref<3x30x256xbf16, #tpu.memory_space<vmem>>, vector<1x30x256xbf16>
    %8 = vector.shape_cast %7 : vector<1x30x256xbf16> to vector<30x256xbf16>
    %9 = arith.truncf %6 : vector<16x30xf32> to vector<16x30xbf16>
    %cst_15 = arith.constant dense<0.000000e+00> : vector<16x256xf32>
    %10 = tpu.matmul %9, %8, %cst_15 {dimension_numbers = #tpu.dot_dimension_numbers<[1], [0], [0], [1], [0, 0, 1, 1], [], []>} : vector<16x30xbf16>, vector<30x256xbf16>, vector<16x256xf32> -> vector<16x256xf32>
    %c0_16 = arith.constant 0 : index
    %c1_17 = arith.constant 1 : index
    %c0_18 = arith.constant 0 : index
    %11 = vector.load %arg15[%c0_16, %c1_17, %c0_18] : memref<2x10x30xf32, #tpu.memory_space<vmem>>, vector<2x8x30xf32>
    %12 = vector.shape_cast %11 : vector<2x8x30xf32> to vector<16x30xf32>
    %c1_19 = arith.constant 1 : index
    %c0_20 = arith.constant 0 : index
    %c0_21 = arith.constant 0 : index
    %13 = vector.load %arg1[%c1_19, %c0_20, %c0_21] : memref<3x30x256xbf16, #tpu.memory_space<vmem>>, vector<1x30x256xbf16>
    %14 = vector.shape_cast %13 : vector<1x30x256xbf16> to vector<30x256xbf16>
    %15 = arith.truncf %12 : vector<16x30xf32> to vector<16x30xbf16>
    %cst_22 = arith.constant dense<0.000000e+00> : vector<16x256xf32>
    %16 = tpu.matmul %15, %14, %cst_22 {dimension_numbers = #tpu.dot_dimension_numbers<[1], [0], [0], [1], [0, 0, 1, 1], [], []>} : vector<16x30xbf16>, vector<30x256xbf16>, vector<16x256xf32> -> vector<16x256xf32>
    %17 = arith.addf %10, %16 : vector<16x256xf32>
    %c0_23 = arith.constant 0 : index
    %c2 = arith.constant 2 : index
    %c0_24 = arith.constant 0 : index
    %18 = vector.load %arg15[%c0_23, %c2, %c0_24] : memref<2x10x30xf32, #tpu.memory_space<vmem>>, vector<2x8x30xf32>
    %19 = vector.shape_cast %18 : vector<2x8x30xf32> to vector<16x30xf32>
    %c2_25 = arith.constant 2 : index
    %c0_26 = arith.constant 0 : index
    %c0_27 = arith.constant 0 : index
    %20 = vector.load %arg1[%c2_25, %c0_26, %c0_27] : memref<3x30x256xbf16, #tpu.memory_space<vmem>>, vector<1x30x256xbf16>
    %21 = vector.shape_cast %20 : vector<1x30x256xbf16> to vector<30x256xbf16>
    %22 = arith.truncf %19 : vector<16x30xf32> to vector<16x30xbf16>
    %cst_28 = arith.constant dense<0.000000e+00> : vector<16x256xf32>
    %23 = tpu.matmul %22, %21, %cst_28 {dimension_numbers = #tpu.dot_dimension_numbers<[1], [0], [0], [1], [0, 0, 1, 1], [], []>} : vector<16x30xbf16>, vector<30x256xbf16>, vector<16x256xf32> -> vector<16x256xf32>
    %24 = arith.addf %17, %23 : vector<16x256xf32>
    %25 = vector.broadcast %4 : vector<1x256xf32> to vector<16x256xf32>
    %26 = arith.addf %24, %25 : vector<16x256xf32>
    %cst_29 = arith.constant 0.000000e+00 : f32
    %27 = vector.broadcast %cst_29 : f32 to vector<16x256xf32>
    %28 = arith.maximumf %26, %27 : vector<16x256xf32>
    %cst_30 = arith.constant 0.000000e+00 : f32
    %29 = vector.broadcast %cst_30 : f32 to vector<2x10x320xf32>
    %c0_31 = arith.constant 0 : index
    %c0_32 = arith.constant 0 : index
    %c0_33 = arith.constant 0 : index
    %30 = vector.load %arg16[%c0_31, %c0_32, %c0_33] : memref<2x10x320xf32, #tpu.memory_space<vmem>>, vector<2x10x320xf32>
    tpu.vector_store %arg16[%c0_31, %c0_32, %c0_33], %29 {strides = array<i32>} : memref<2x10x320xf32, #tpu.memory_space<vmem>>, vector<2x10x320xf32>,
    %31 = vector.shape_cast %28 : vector<16x256xf32> to vector<2x8x256xf32>
    %c0_34 = arith.constant 0 : index
    %c1_35 = arith.constant 1 : index
    %c0_36 = arith.constant 0 : index
    %32 = vector.load %arg16[%c0_34, %c1_35, %c0_36] : memref<2x10x320xf32, #tpu.memory_space<vmem>>, vector<2x8x256xf32>
    tpu.vector_store %arg16[%c0_34, %c1_35, %c0_36], %31 {strides = array<i32>} : memref<2x10x320xf32, #tpu.memory_space<vmem>>, vector<2x8x256xf32>,
    %c0_37 = arith.constant 0 : index
    %c0_38 = arith.constant 0 : index
    %c0_39 = arith.constant 0 : index
    %33 = vector.load %arg4[%c0_37, %c0_38, %c0_39] : memref<4x1x256xf32, #tpu.memory_space<vmem>>, vector<1x1x256xf32>
    %34 = vector.shape_cast %33 : vector<1x1x256xf32> to vector<1x256xf32>
    %c0_40 = arith.constant 0 : index
    %c0_41 = arith.constant 0 : index
    %c0_42 = arith.constant 0 : index
    %35 = vector.load %arg16[%c0_40, %c0_41, %c0_42] : memref<2x10x320xf32, #tpu.memory_space<vmem>>, vector<2x8x320xf32>
    %36 = vector.shape_cast %35 : vector<2x8x320xf32> to vector<16x320xf32>
    %c0_43 = arith.constant 0 : index
    %c0_44 = arith.constant 0 : index
    %c0_45 = arith.constant 0 : index
    %c0_46 = arith.constant 0 : index
    %37 = vector.load %arg3[%c0_43, %c0_44, %c0_45, %c0_46] : memref<4x3x320x256xbf16, #tpu.memory_space<vmem>>, vector<1x1x320x256xbf16>
    %38 = vector.shape_cast %37 : vector<1x1x320x256xbf16> to vector<320x256xbf16>
    %39 = arith.truncf %36 : vector<16x320xf32> to vector<16x320xbf16>
    %cst_47 = arith.constant dense<0.000000e+00> : vector<16x256xf32>
    %40 = tpu.matmul %39, %38, %cst_47 {dimension_numbers = #tpu.dot_dimension_numbers<[1], [0], [0], [1], [0, 0, 1, 1], [], []>} : vector<16x320xbf16>, vector<320x256xbf16>, vector<16x256xf32> -> vector<16x256xf32>
    %c0_48 = arith.constant 0 : index
    %c1_49 = arith.constant 1 : index
    %c0_50 = arith.constant 0 : index
    %41 = vector.load %arg16[%c0_48, %c1_49, %c0_50] : memref<2x10x320xf32, #tpu.memory_space<vmem>>, vector<2x8x320xf32>
    %42 = vector.shape_cast %41 : vector<2x8x320xf32> to vector<16x320xf32>
    %c0_51 = arith.constant 0 : index
    %c1_52 = arith.constant 1 : index
    %c0_53 = arith.constant 0 : index
    %c0_54 = arith.constant 0 : index
    %43 = vector.load %arg3[%c0_51, %c1_52, %c0_53, %c0_54] : memref<4x3x320x256xbf16, #tpu.memory_space<vmem>>, vector<1x1x320x256xbf16>
    %44 = vector.shape_cast %43 : vector<1x1x320x256xbf16> to vector<320x256xbf16>
    %45 = arith.truncf %42 : vector<16x320xf32> to vector<16x320xbf16>
    %cst_55 = arith.constant dense<0.000000e+00> : vector<16x256xf32>
    %46 = tpu.matmul %45, %44, %cst_55 {dimension_numbers = #tpu.dot_dimension_numbers<[1], [0], [0], [1], [0, 0, 1, 1], [], []>} : vector<16x320xbf16>, vector<320x256xbf16>, vector<16x256xf32> -> vector<16x256xf32>
    %47 = arith.addf %40, %46 : vector<16x256xf32>
    %c0_56 = arith.constant 0 : index
    %c2_57 = arith.constant 2 : index
    %c0_58 = arith.constant 0 : index
    %48 = vector.load %arg16[%c0_56, %c2_57, %c0_58] : memref<2x10x320xf32, #tpu.memory_space<vmem>>, vector<2x8x320xf32>
    %49 = vector.shape_cast %48 : vector<2x8x320xf32> to vector<16x320xf32>
    %c0_59 = arith.constant 0 : index
    %c2_60 = arith.constant 2 : index
    %c0_61 = arith.constant 0 : index
    %c0_62 = arith.constant 0 : index
    %50 = vector.load %arg3[%c0_59, %c2_60, %c0_61, %c0_62] : memref<4x3x320x256xbf16, #tpu.memory_space<vmem>>, vector<1x1x320x256xbf16>
    %51 = vector.shape_cast %50 : vector<1x1x320x256xbf16> to vector<320x256xbf16>
    %52 = arith.truncf %49 : vector<16x320xf32> to vector<16x320xbf16>
    %cst_63 = arith.constant dense<0.000000e+00> : vector<16x256xf32>
    %53 = tpu.matmul %52, %51, %cst_63 {dimension_numbers = #tpu.dot_dimension_numbers<[1], [0], [0], [1], [0, 0, 1, 1], [], []>} : vector<16x320xbf16>, vector<320x256xbf16>, vector<16x256xf32> -> vector<16x256xf32>
    %54 = arith.addf %47, %53 : vector<16x256xf32>
    %55 = vector.broadcast %34 : vector<1x256xf32> to vector<16x256xf32>
    %56 = arith.addf %54, %55 : vector<16x256xf32>
    %cst_64 = arith.constant 0.000000e+00 : f32
    %57 = vector.broadcast %cst_64 : f32 to vector<16x256xf32>
    %58 = arith.maximumf %56, %57 : vector<16x256xf32>
    %59 = vector.shape_cast %58 : vector<16x256xf32> to vector<2x8x256xf32>
    %c0_65 = arith.constant 0 : index
    %c1_66 = arith.constant 1 : index
    %c0_67 = arith.constant 0 : index
    %60 = vector.load %arg16[%c0_65, %c1_66, %c0_67] : memref<2x10x320xf32, #tpu.memory_space<vmem>>, vector<2x8x256xf32>
    tpu.vector_store %arg16[%c0_65, %c1_66, %c0_67], %59 {strides = array<i32>} : memref<2x10x320xf32, #tpu.memory_space<vmem>>, vector<2x8x256xf32>,
    %c1_68 = arith.constant 1 : index
    %c0_69 = arith.constant 0 : index
    %c0_70 = arith.constant 0 : index
    %61 = vector.load %arg4[%c1_68, %c0_69, %c0_70] : memref<4x1x256xf32, #tpu.memory_space<vmem>>, vector<1x1x256xf32>
    %62 = vector.shape_cast %61 : vector<1x1x256xf32> to vector<1x256xf32>
    %c0_71 = arith.constant 0 : index
    %c0_72 = arith.constant 0 : index
    %c0_73 = arith.constant 0 : index
    %63 = vector.load %arg16[%c0_71, %c0_72, %c0_73] : memref<2x10x320xf32, #tpu.memory_space<vmem>>, vector<2x8x320xf32>
    %64 = vector.shape_cast %63 : vector<2x8x320xf32> to vector<16x320xf32>
    %c1_74 = arith.constant 1 : index
    %c0_75 = arith.constant 0 : index
    %c0_76 = arith.constant 0 : index
    %c0_77 = arith.constant 0 : index
    %65 = vector.load %arg3[%c1_74, %c0_75, %c0_76, %c0_77] : memref<4x3x320x256xbf16, #tpu.memory_space<vmem>>, vector<1x1x320x256xbf16>
    %66 = vector.shape_cast %65 : vector<1x1x320x256xbf16> to vector<320x256xbf16>
    %67 = arith.truncf %64 : vector<16x320xf32> to vector<16x320xbf16>
    %cst_78 = arith.constant dense<0.000000e+00> : vector<16x256xf32>
    %68 = tpu.matmul %67, %66, %cst_78 {dimension_numbers = #tpu.dot_dimension_numbers<[1], [0], [0], [1], [0, 0, 1, 1], [], []>} : vector<16x320xbf16>, vector<320x256xbf16>, vector<16x256xf32> -> vector<16x256xf32>
    %c0_79 = arith.constant 0 : index
    %c1_80 = arith.constant 1 : index
    %c0_81 = arith.constant 0 : index
    %69 = vector.load %arg16[%c0_79, %c1_80, %c0_81] : memref<2x10x320xf32, #tpu.memory_space<vmem>>, vector<2x8x320xf32>
    %70 = vector.shape_cast %69 : vector<2x8x320xf32> to vector<16x320xf32>
    %c1_82 = arith.constant 1 : index
    %c1_83 = arith.constant 1 : index
    %c0_84 = arith.constant 0 : index
    %c0_85 = arith.constant 0 : index
    %71 = vector.load %arg3[%c1_82, %c1_83, %c0_84, %c0_85] : memref<4x3x320x256xbf16, #tpu.memory_space<vmem>>, vector<1x1x320x256xbf16>
    %72 = vector.shape_cast %71 : vector<1x1x320x256xbf16> to vector<320x256xbf16>
    %73 = arith.truncf %70 : vector<16x320xf32> to vector<16x320xbf16>
    %cst_86 = arith.constant dense<0.000000e+00> : vector<16x256xf32>
    %74 = tpu.matmul %73, %72, %cst_86 {dimension_numbers = #tpu.dot_dimension_numbers<[1], [0], [0], [1], [0, 0, 1, 1], [], []>} : vector<16x320xbf16>, vector<320x256xbf16>, vector<16x256xf32> -> vector<16x256xf32>
    %75 = arith.addf %68, %74 : vector<16x256xf32>
    %c0_87 = arith.constant 0 : index
    %c2_88 = arith.constant 2 : index
    %c0_89 = arith.constant 0 : index
    %76 = vector.load %arg16[%c0_87, %c2_88, %c0_89] : memref<2x10x320xf32, #tpu.memory_space<vmem>>, vector<2x8x320xf32>
    %77 = vector.shape_cast %76 : vector<2x8x320xf32> to vector<16x320xf32>
    %c1_90 = arith.constant 1 : index
    %c2_91 = arith.constant 2 : index
    %c0_92 = arith.constant 0 : index
    %c0_93 = arith.constant 0 : index
    %78 = vector.load %arg3[%c1_90, %c2_91, %c0_92, %c0_93] : memref<4x3x320x256xbf16, #tpu.memory_space<vmem>>, vector<1x1x320x256xbf16>
    %79 = vector.shape_cast %78 : vector<1x1x320x256xbf16> to vector<320x256xbf16>
    %80 = arith.truncf %77 : vector<16x320xf32> to vector<16x320xbf16>
    %cst_94 = arith.constant dense<0.000000e+00> : vector<16x256xf32>
    %81 = tpu.matmul %80, %79, %cst_94 {dimension_numbers = #tpu.dot_dimension_numbers<[1], [0], [0], [1], [0, 0, 1, 1], [], []>} : vector<16x320xbf16>, vector<320x256xbf16>, vector<16x256xf32> -> vector<16x256xf32>
    %82 = arith.addf %75, %81 : vector<16x256xf32>
    %83 = vector.broadcast %62 : vector<1x256xf32> to vector<16x256xf32>
    %84 = arith.addf %82, %83 : vector<16x256xf32>
    %85 = arith.addf %84, %28 : vector<16x256xf32>
    %cst_95 = arith.constant 0.000000e+00 : f32
    %86 = vector.broadcast %cst_95 : f32 to vector<16x256xf32>
    %87 = arith.maximumf %85, %86 : vector<16x256xf32>
    %88 = vector.shape_cast %87 : vector<16x256xf32> to vector<2x8x256xf32>
    %c0_96 = arith.constant 0 : index
    %c1_97 = arith.constant 1 : index
    %c0_98 = arith.constant 0 : index
    %89 = vector.load %arg16[%c0_96, %c1_97, %c0_98] : memref<2x10x320xf32, #tpu.memory_space<vmem>>, vector<2x8x256xf32>
    tpu.vector_store %arg16[%c0_96, %c1_97, %c0_98], %88 {strides = array<i32>} : memref<2x10x320xf32, #tpu.memory_space<vmem>>, vector<2x8x256xf32>,
    %c2_99 = arith.constant 2 : index
    %c0_100 = arith.constant 0 : index
    %c0_101 = arith.constant 0 : index
    %90 = vector.load %arg4[%c2_99, %c0_100, %c0_101] : memref<4x1x256xf32, #tpu.memory_space<vmem>>, vector<1x1x256xf32>
    %91 = vector.shape_cast %90 : vector<1x1x256xf32> to vector<1x256xf32>
    %c0_102 = arith.constant 0 : index
    %c0_103 = arith.constant 0 : index
    %c0_104 = arith.constant 0 : index
    %92 = vector.load %arg16[%c0_102, %c0_103, %c0_104] : memref<2x10x320xf32, #tpu.memory_space<vmem>>, vector<2x8x320xf32>
    %93 = vector.shape_cast %92 : vector<2x8x320xf32> to vector<16x320xf32>
    %c2_105 = arith.constant 2 : index
    %c0_106 = arith.constant 0 : index
    %c0_107 = arith.constant 0 : index
    %c0_108 = arith.constant 0 : index
    %94 = vector.load %arg3[%c2_105, %c0_106, %c0_107, %c0_108] : memref<4x3x320x256xbf16, #tpu.memory_space<vmem>>, vector<1x1x320x256xbf16>
    %95 = vector.shape_cast %94 : vector<1x1x320x256xbf16> to vector<320x256xbf16>
    %96 = arith.truncf %93 : vector<16x320xf32> to vector<16x320xbf16>
    %cst_109 = arith.constant dense<0.000000e+00> : vector<16x256xf32>
    %97 = tpu.matmul %96, %95, %cst_109 {dimension_numbers = #tpu.dot_dimension_numbers<[1], [0], [0], [1], [0, 0, 1, 1], [], []>} : vector<16x320xbf16>, vector<320x256xbf16>, vector<16x256xf32> -> vector<16x256xf32>
    %c0_110 = arith.constant 0 : index
    %c1_111 = arith.constant 1 : index
    %c0_112 = arith.constant 0 : index
    %98 = vector.load %arg16[%c0_110, %c1_111, %c0_112] : memref<2x10x320xf32, #tpu.memory_space<vmem>>, vector<2x8x320xf32>
    %99 = vector.shape_cast %98 : vector<2x8x320xf32> to vector<16x320xf32>
    %c2_113 = arith.constant 2 : index
    %c1_114 = arith.constant 1 : index
    %c0_115 = arith.constant 0 : index
    %c0_116 = arith.constant 0 : index
    %100 = vector.load %arg3[%c2_113, %c1_114, %c0_115, %c0_116] : memref<4x3x320x256xbf16, #tpu.memory_space<vmem>>, vector<1x1x320x256xbf16>
    %101 = vector.shape_cast %100 : vector<1x1x320x256xbf16> to vector<320x256xbf16>
    %102 = arith.truncf %99 : vector<16x320xf32> to vector<16x320xbf16>
    %cst_117 = arith.constant dense<0.000000e+00> : vector<16x256xf32>
    %103 = tpu.matmul %102, %101, %cst_117 {dimension_numbers = #tpu.dot_dimension_numbers<[1], [0], [0], [1], [0, 0, 1, 1], [], []>} : vector<16x320xbf16>, vector<320x256xbf16>, vector<16x256xf32> -> vector<16x256xf32>
    %104 = arith.addf %97, %103 : vector<16x256xf32>
    %c0_118 = arith.constant 0 : index
    %c2_119 = arith.constant 2 : index
    %c0_120 = arith.constant 0 : index
    %105 = vector.load %arg16[%c0_118, %c2_119, %c0_120] : memref<2x10x320xf32, #tpu.memory_space<vmem>>, vector<2x8x320xf32>
    %106 = vector.shape_cast %105 : vector<2x8x320xf32> to vector<16x320xf32>
    %c2_121 = arith.constant 2 : index
    %c2_122 = arith.constant 2 : index
    %c0_123 = arith.constant 0 : index
    %c0_124 = arith.constant 0 : index
    %107 = vector.load %arg3[%c2_121, %c2_122, %c0_123, %c0_124] : memref<4x3x320x256xbf16, #tpu.memory_space<vmem>>, vector<1x1x320x256xbf16>
    %108 = vector.shape_cast %107 : vector<1x1x320x256xbf16> to vector<320x256xbf16>
    %109 = arith.truncf %106 : vector<16x320xf32> to vector<16x320xbf16>
    %cst_125 = arith.constant dense<0.000000e+00> : vector<16x256xf32>
    %110 = tpu.matmul %109, %108, %cst_125 {dimension_numbers = #tpu.dot_dimension_numbers<[1], [0], [0], [1], [0, 0, 1, 1], [], []>} : vector<16x320xbf16>, vector<320x256xbf16>, vector<16x256xf32> -> vector<16x256xf32>
    %111 = arith.addf %104, %110 : vector<16x256xf32>
    %112 = vector.broadcast %91 : vector<1x256xf32> to vector<16x256xf32>
    %113 = arith.addf %111, %112 : vector<16x256xf32>
    %cst_126 = arith.constant 0.000000e+00 : f32
    %114 = vector.broadcast %cst_126 : f32 to vector<16x256xf32>
    %115 = arith.maximumf %113, %114 : vector<16x256xf32>
    %116 = vector.shape_cast %115 : vector<16x256xf32> to vector<2x8x256xf32>
    %c0_127 = arith.constant 0 : index
    %c1_128 = arith.constant 1 : index
    %c0_129 = arith.constant 0 : index
    %117 = vector.load %arg16[%c0_127, %c1_128, %c0_129] : memref<2x10x320xf32, #tpu.memory_space<vmem>>, vector<2x8x256xf32>
    tpu.vector_store %arg16[%c0_127, %c1_128, %c0_129], %116 {strides = array<i32>} : memref<2x10x320xf32, #tpu.memory_space<vmem>>, vector<2x8x256xf32>,
    %c3 = arith.constant 3 : index
    %c0_130 = arith.constant 0 : index
    %c0_131 = arith.constant 0 : index
    %118 = vector.load %arg4[%c3, %c0_130, %c0_131] : memref<4x1x256xf32, #tpu.memory_space<vmem>>, vector<1x1x256xf32>
    %119 = vector.shape_cast %118 : vector<1x1x256xf32> to vector<1x256xf32>
    %c0_132 = arith.constant 0 : index
    %c0_133 = arith.constant 0 : index
    %c0_134 = arith.constant 0 : index
    %120 = vector.load %arg16[%c0_132, %c0_133, %c0_134] : memref<2x10x320xf32, #tpu.memory_space<vmem>>, vector<2x8x320xf32>
    %121 = vector.shape_cast %120 : vector<2x8x320xf32> to vector<16x320xf32>
    %c3_135 = arith.constant 3 : index
    %c0_136 = arith.constant 0 : index
    %c0_137 = arith.constant 0 : index
    %c0_138 = arith.constant 0 : index
    %122 = vector.load %arg3[%c3_135, %c0_136, %c0_137, %c0_138] : memref<4x3x320x256xbf16, #tpu.memory_space<vmem>>, vector<1x1x320x256xbf16>
    %123 = vector.shape_cast %122 : vector<1x1x320x256xbf16> to vector<320x256xbf16>
    %124 = arith.truncf %121 : vector<16x320xf32> to vector<16x320xbf16>
    %cst_139 = arith.constant dense<0.000000e+00> : vector<16x256xf32>
    %125 = tpu.matmul %124, %123, %cst_139 {dimension_numbers = #tpu.dot_dimension_numbers<[1], [0], [0], [1], [0, 0, 1, 1], [], []>} : vector<16x320xbf16>, vector<320x256xbf16>, vector<16x256xf32> -> vector<16x256xf32>
    %c0_140 = arith.constant 0 : index
    %c1_141 = arith.constant 1 : index
    %c0_142 = arith.constant 0 : index
    %126 = vector.load %arg16[%c0_140, %c1_141, %c0_142] : memref<2x10x320xf32, #tpu.memory_space<vmem>>, vector<2x8x320xf32>
    %127 = vector.shape_cast %126 : vector<2x8x320xf32> to vector<16x320xf32>
    %c3_143 = arith.constant 3 : index
    %c1_144 = arith.constant 1 : index
    %c0_145 = arith.constant 0 : index
    %c0_146 = arith.constant 0 : index
    %128 = vector.load %arg3[%c3_143, %c1_144, %c0_145, %c0_146] : memref<4x3x320x256xbf16, #tpu.memory_space<vmem>>, vector<1x1x320x256xbf16>
    %129 = vector.shape_cast %128 : vector<1x1x320x256xbf16> to vector<320x256xbf16>
    %130 = arith.truncf %127 : vector<16x320xf32> to vector<16x320xbf16>
    %cst_147 = arith.constant dense<0.000000e+00> : vector<16x256xf32>
    %131 = tpu.matmul %130, %129, %cst_147 {dimension_numbers = #tpu.dot_dimension_numbers<[1], [0], [0], [1], [0, 0, 1, 1], [], []>} : vector<16x320xbf16>, vector<320x256xbf16>, vector<16x256xf32> -> vector<16x256xf32>
    %132 = arith.addf %125, %131 : vector<16x256xf32>
    %c0_148 = arith.constant 0 : index
    %c2_149 = arith.constant 2 : index
    %c0_150 = arith.constant 0 : index
    %133 = vector.load %arg16[%c0_148, %c2_149, %c0_150] : memref<2x10x320xf32, #tpu.memory_space<vmem>>, vector<2x8x320xf32>
    %134 = vector.shape_cast %133 : vector<2x8x320xf32> to vector<16x320xf32>
    %c3_151 = arith.constant 3 : index
    %c2_152 = arith.constant 2 : index
    %c0_153 = arith.constant 0 : index
    %c0_154 = arith.constant 0 : index
    %135 = vector.load %arg3[%c3_151, %c2_152, %c0_153, %c0_154] : memref<4x3x320x256xbf16, #tpu.memory_space<vmem>>, vector<1x1x320x256xbf16>
    %136 = vector.shape_cast %135 : vector<1x1x320x256xbf16> to vector<320x256xbf16>
    %137 = arith.truncf %134 : vector<16x320xf32> to vector<16x320xbf16>
    %cst_155 = arith.constant dense<0.000000e+00> : vector<16x256xf32>
    %138 = tpu.matmul %137, %136, %cst_155 {dimension_numbers = #tpu.dot_dimension_numbers<[1], [0], [0], [1], [0, 0, 1, 1], [], []>} : vector<16x320xbf16>, vector<320x256xbf16>, vector<16x256xf32> -> vector<16x256xf32>
    %139 = arith.addf %132, %138 : vector<16x256xf32>
    %140 = vector.broadcast %119 : vector<1x256xf32> to vector<16x256xf32>
    %141 = arith.addf %139, %140 : vector<16x256xf32>
    %142 = arith.addf %141, %87 : vector<16x256xf32>
    %cst_156 = arith.constant 0.000000e+00 : f32
    %143 = vector.broadcast %cst_156 : f32 to vector<16x256xf32>
    %144 = arith.maximumf %142, %143 : vector<16x256xf32>
    %c0_157 = arith.constant 0 : index
    %c0_158 = arith.constant 0 : index
    %145 = vector.load %arg5[%c0_157, %c0_158] : memref<256x24xbf16, #tpu.memory_space<vmem>>, vector<256x24xbf16>
    %146 = arith.truncf %144 : vector<16x256xf32> to vector<16x256xbf16>
    %cst_159 = arith.constant dense<0.000000e+00> : vector<16x24xf32>
    %147 = tpu.matmul %146, %145, %cst_159 {dimension_numbers = #tpu.dot_dimension_numbers<[1], [0], [0], [1], [0, 0, 1, 1], [], []>} : vector<16x256xbf16>, vector<256x24xbf16>, vector<16x24xf32> -> vector<16x24xf32>
    %c0_160 = arith.constant 0 : index
    %c0_161 = arith.constant 0 : index
    %148 = vector.load %arg6[%c0_160, %c0_161] : memref<1x24xf32, #tpu.memory_space<vmem>>, vector<1x24xf32>
    %149 = vector.broadcast %148 : vector<1x24xf32> to vector<16x24xf32>
    %150 = arith.addf %147, %149 : vector<16x24xf32>
    %cst_162 = arith.constant 0.000000e+00 : f32
    %151 = vector.broadcast %cst_162 : f32 to vector<16x24xf32>
    %152 = arith.maximumf %150, %151 : vector<16x24xf32>
    %153 = tpu.concatenate %152, %152, %152, %152, %152, %152, %152, %152 in 1 : vector<16x24xf32>, vector<16x24xf32>, vector<16x24xf32>, vector<16x24xf32>, vector<16x24xf32>, vector<16x24xf32>, vector<16x24xf32>, vector<16x24xf32> -> vector<16x192xf32>
    %c0_163 = arith.constant 0 : index
    %c0_164 = arith.constant 0 : index
    %154 = vector.load %arg7[%c0_163, %c0_164] : memref<16x192xf32, #tpu.memory_space<vmem>>, vector<16x192xf32>
    %155 = arith.mulf %153, %154 : vector<16x192xf32>
    %c0_165 = arith.constant 0 : index
    %c0_166 = arith.constant 0 : index
    %156 = vector.load %arg8[%c0_165, %c0_166] : memref<2x16xf32, #tpu.memory_space<vmem>>, vector<2x16xf32>
    %157 = arith.truncf %156 : vector<2x16xf32> to vector<2x16xbf16>
    %158 = arith.truncf %155 : vector<16x192xf32> to vector<16x192xbf16>
    %cst_167 = arith.constant dense<0.000000e+00> : vector<2x192xf32>
    %159 = tpu.matmul %157, %158, %cst_167 {dimension_numbers = #tpu.dot_dimension_numbers<[1], [0], [0], [1], [0, 0, 1, 1], [], []>} : vector<2x16xbf16>, vector<16x192xbf16>, vector<2x192xf32> -> vector<2x192xf32>
    %c0_168 = arith.constant 0 : index
    %c0_169 = arith.constant 0 : index
    %160 = vector.load %arg9[%c0_168, %c0_169] : memref<192x96xbf16, #tpu.memory_space<vmem>>, vector<192x96xbf16>
    %161 = arith.truncf %159 : vector<2x192xf32> to vector<2x192xbf16>
    %cst_170 = arith.constant dense<0.000000e+00> : vector<2x96xf32>
    %162 = tpu.matmul %161, %160, %cst_170 {dimension_numbers = #tpu.dot_dimension_numbers<[1], [0], [0], [1], [0, 0, 1, 1], [], []>} : vector<2x192xbf16>, vector<192x96xbf16>, vector<2x96xf32> -> vector<2x96xf32>
    %c0_171 = arith.constant 0 : index
    %c0_172 = arith.constant 0 : index
    %163 = vector.load %arg10[%c0_171, %c0_172] : memref<1x96xf32, #tpu.memory_space<vmem>>, vector<1x96xf32>
    %164 = vector.broadcast %163 : vector<1x96xf32> to vector<2x96xf32>
    %165 = arith.addf %162, %164 : vector<2x96xf32>
    %166 = vector.extract_strided_slice %165 {offsets = [0, 0], sizes = [2, 64], strides = [1, 1]} : vector<2x96xf32> to vector<2x64xf32>
    %167 = vector.extract_strided_slice %165 {offsets = [0, 64], sizes = [2, 32], strides = [1, 1]} : vector<2x96xf32> to vector<2x32xf32>
    %cst_173 = arith.constant 0.000000e+00 : f32
    %168 = vector.broadcast %cst_173 : f32 to vector<2x32xf32>
    %169 = arith.maximumf %167, %168 : vector<2x32xf32>
    %c0_174 = arith.constant 0 : index
    %c0_175 = arith.constant 0 : index
    %170 = vector.load %arg11[%c0_174, %c0_175] : memref<32x1xbf16, #tpu.memory_space<vmem>>, vector<32x1xbf16>
    %171 = arith.truncf %169 : vector<2x32xf32> to vector<2x32xbf16>
    %cst_176 = arith.constant dense<0.000000e+00> : vector<2x1xf32>
    %172 = tpu.matmul %171, %170, %cst_176 {dimension_numbers = #tpu.dot_dimension_numbers<[1], [0], [0], [1], [0, 0, 1, 1], [], []>} : vector<2x32xbf16>, vector<32x1xbf16>, vector<2x1xf32> -> vector<2x1xf32>
    %c0_177 = arith.constant 0 : index
    %c0_178 = arith.constant 0 : index
    %173 = vector.load %arg12[%c0_177, %c0_178] : memref<1x1xf32, #tpu.memory_space<vmem>>, vector<1x1xf32>
    %174 = vector.broadcast %173 : vector<1x1xf32> to vector<2x1xf32>
    %175 = arith.addf %172, %174 : vector<2x1xf32>
    %176 = math.tanh %175 : vector<2x1xf32>
    %c0_179 = arith.constant 0 : index
    %c0_180 = arith.constant 0 : index
    %177 = vector.load %arg14[%c0_179, %c0_180] : memref<2x1xf32, #tpu.memory_space<vmem>>, vector<2x1xf32>
    tpu.vector_store %arg14[%c0_179, %c0_180], %176 {strides = array<i32>} : memref<2x1xf32, #tpu.memory_space<vmem>>, vector<2x1xf32>,
    %cst_181 = arith.constant dense<0xFF800000> : vector<2xf32>
    %178 = vector.multi_reduction <maximumf>, %166, %cst_181 [1] : vector<2x64xf32> to vector<2xf32>
    %179 = vector.shape_cast %178 : vector<2xf32> to vector<2x1xf32>
    %180 = vector.broadcast %179 : vector<2x1xf32> to vector<2x64xf32>
    %181 = arith.subf %166, %180 : vector<2x64xf32>
    %182 = math.exp %181 : vector<2x64xf32>
    %cst_182 = arith.constant dense<0.000000e+00> : vector<2xf32>
    %183 = vector.multi_reduction <add>, %182, %cst_182 [1] : vector<2x64xf32> to vector<2xf32>
    %184 = vector.shape_cast %183 : vector<2xf32> to vector<2x1xf32>
    %185 = vector.broadcast %184 : vector<2x1xf32> to vector<2x64xf32>
    %186 = arith.divf %182, %185 : vector<2x64xf32>
    %c0_183 = arith.constant 0 : index
    %c0_184 = arith.constant 0 : index
    %187 = vector.load %arg13[%c0_183, %c0_184] : memref<2x64xf32, #tpu.memory_space<vmem>>, vector<2x64xf32>
    tpu.vector_store %arg13[%c0_183, %c0_184], %186 {strides = array<i32>} : memref<2x64xf32, #tpu.memory_space<vmem>>, vector<2x64xf32>,
    return
  }
}

</mosaic_0001>

<llo_original>
// kernel: residual_alpha_forward.1
$region0: #{residual_alpha_forward.1}
  #allocation0 [shape = 'u32[]', space=smem, size = 0x4, offset = 0x4, fixed_abs, tag = 'smem constant byte address 0x4 - core index']
  #allocation1 [shape = 'u32[144,128]{1,0:T(1,128)}', space=vmem, size = 0x12000, scoped, tag = 'internal scratch']
  #allocation2 [shape = 'f32[2,10,30]{2,1,0:T(8,128)}', space=vmem, size = 0x4000, scoped, tag = 'scratch operand']
  #allocation3 [shape = 'f32[2,10,320]{2,1,0:T(8,128)}', space=vmem, size = 0xc000, scoped, tag = 'scratch operand']
  #allocation4 [shape = 'f32[1,1]{1,0:T(1,128)S(1)}', space=vmem, size = 0x200, scoped, tag = 'scoped memory for residual_alpha_forward.1']
  %s0 = inlined_call_operand.vmem [shape: f32[2,8,24], index: 0, kind: input, shape index: {}]
  %s1 = inlined_call_operand.hbm [shape: bf16[3,30,256], index: 1, kind: input, shape index: {}]
  %s2 = inlined_call_operand.hbm [shape: f32[1,256], index: 2, kind: input, shape index: {}]
  %s3 = inlined_call_operand.hbm [shape: bf16[4,3,320,256], index: 3, kind: input, shape index: {}]
  %s4 = inlined_call_operand.hbm [shape: f32[4,1,256], index: 4, kind: input, shape index: {}]
  %s5 = inlined_call_operand.vmem [shape: bf16[256,24], index: 5, kind: input, shape index: {}]
  %s6 = inlined_call_operand.hbm [shape: f32[1,24], index: 6, kind: input, shape index: {}]
  %s7 = inlined_call_operand.hbm [shape: f32[16,192], index: 7, kind: input, shape index: {}]
  %s8 = inlined_call_operand.hbm [shape: f32[2,16], index: 8, kind: input, shape index: {}]
  %s9 = inlined_call_operand.hbm [shape: bf16[192,96], index: 9, kind: input, shape index: {}]
  %s10 = inlined_call_operand.hbm [shape: f32[1,96], index: 10, kind: input, shape index: {}]
  %s11 = inlined_call_operand.vmem [shape: bf16[32,1], index: 11, kind: input, shape index: {}]
  %s12 = inlined_call_operand.<no memory space> [shape: f32[1,1], index: 12, kind: input, shape index: {}]
  %s13 = inlined_call_operand.hbm [shape: f32[2,64], index: 13, kind: output, shape index: {0}]
  %s14 = inlined_call_operand.vmem [shape: f32[2,1], index: 14, kind: output, shape index: {1}]
  %15 = xla_tuple %s13, %s14
  %s16 = sld [smem:[#allocation0]]
  $region106: #{residual_alpha_forward.1} parent=0
    _
  %s18 = ssub.s32 1, %s16
  %s19 = scalar_select 0, %s18, %s16
  %v20 = vstv %s12
  %21 = vst [vmem:[#allocation4] sm:$0x1] %v20
  $region1: #{residual_alpha_forward.1} parent=0
    #allocation5 [shape = 'u8[49152]{0}', space=vmem, size = 0xc000, scoped, tag = 'input window, operand 1, single buffered']
    #allocation6 [shape = 's32[1]{0}', space=sflag, size = 0x4, scoped, tag = 'scoped memory for residual_alpha_forward.1']
    #allocation7 [shape = 's32[1]{0}', space=sflag, size = 0x4, scoped, tag = 'scoped memory for residual_alpha_forward.1']
    #allocation8 [shape = 'u8[1024]{0}', space=vmem, size = 0x400, scoped, tag = 'input window, operand 2, single buffered']
    #allocation9 [shape = 's32[1]{0}', space=sflag, size = 0x4, scoped, tag = 'scoped memory for residual_alpha_forward.1']
    #allocation10 [shape = 'u8[1966080]{0}', space=vmem, size = 0x1e0000, scoped, tag = 'input window, operand 3, single buffered']
    #allocation11 [shape = 'u8[4096]{0}', space=vmem, size = 0x1000, scoped, tag = 'input window, operand 4, single buffered']
    #allocation12 [shape = 's32[1]{0}', space=sflag, size = 0x4, scoped, tag = 'scoped memory for residual_alpha_forward.1']
    #allocation13 [shape = 'u8[512]{0}', space=vmem, size = 0x400, scoped, tag = 'input window, operand 6, single buffered']
    #allocation14 [shape = 'u8[16384]{0}', space=vmem, size = 0x4000, scoped, tag = 'input window, operand 7, single buffered']
    #allocation15 [shape = 's32[1]{0}', space=sflag, size = 0x4, scoped, tag = 'scoped memory for residual_alpha_forward.1']
    #allocation16 [shape = 'u8[1024]{0}', space=vmem, size = 0x400, scoped, tag = 'input window, operand 8, single buffered']
    #allocation17 [shape = 'u8[49152]{0}', space=vmem, size = 0xc000, scoped, tag = 'input window, operand 9, single buffered']
    #allocation18 [shape = 's32[1]{0}', space=sflag, size = 0x4, scoped, tag = 'scoped memory for residual_alpha_forward.1']
    #allocation19 [shape = 'u8[512]{0}', space=vmem, size = 0x400, scoped, tag = 'input window, operand 10, single buffered']
    #allocation20 [shape = 'u8[1024]{0}', space=vmem, size = 0x400, scoped, tag = 'output window, operand 0, single buffered']
    %22 = vsyncpa [#allocation6], 0
    %23 = vsyncpa [#allocation9], 0
    %24 = vsyncpa [#allocation12], 0
    %25 = vsyncpa [#allocation15], 0
    %26 = vsyncpa [#allocation18], 0
    %27 = vsyncpa [#allocation7], 0
    // Predicated region
    $region2: #{residual_alpha_forward.1} parent=1 // pred_check
      _
    $region3: #{residual_alpha_forward.1} parent=1 // pred_check_branch
      %29 = sbr.rel (0) target = $region5
    $region4: #{residual_alpha_forward.1} parent=1 // pred_region
      _
    $region5: #{residual_alpha_forward.1} parent=1 // pred_fallthru
      _
    // Predicated region
    $region6: #{residual_alpha_forward.1} parent=1 // pred_check
      _
    $region7: #{residual_alpha_forward.1} parent=1 // pred_check_branch
      %31 = sbr.rel (0) target = $region9
    $region8: #{residual_alpha_forward.1} parent=1 // pred_region
      %s33 = ssub.s32 1536, 1536
      %34 = vsyncadd [#allocation6], %s33
      %s35 = sshll.u32 [#allocation5], 4
      %s36 = int_to_ptr.vmem [resolvable:$true] %s35
      %41 = dma.hbm_to_vmem [thread:$0]  %s1, 1536, %s36, [#allocation6], 128, 128, 8
    $region9: #{residual_alpha_forward.1} parent=1 // pred_fallthru
      _
    // Predicated region
    $region10: #{residual_alpha_forward.1} parent=1 // pred_check
      _
    $region11: #{residual_alpha_forward.1} parent=1 // pred_check_branch
      %43 = sbr.rel (0) target = $region13
    $region12: #{residual_alpha_forward.1} parent=1 // pred_region
      %s45 = ssub.s32 32, 32
      %46 = vsyncadd [#allocation9], %s45
      %s48 = sshll.u32 [#allocation8], 4
      %s49 = int_to_ptr.vmem [resolvable:$true] %s48
      %51 = dma.hbm_to_vmem [thread:$0]  %s2, 32, %s49, [#allocation9]
    $region13: #{residual_alpha_forward.1} parent=1 // pred_fallthru
      _
    // Predicated region
    $region14: #{residual_alpha_forward.1} parent=1 // pred_check
      _
    $region15: #{residual_alpha_forward.1} parent=1 // pred_check_branch
      %53 = sbr.rel (0) target = $region17
    $region16: #{residual_alpha_forward.1} parent=1 // pred_region
      %s55 = ssub.s32 61440, 61440
      %56 = vsyncadd [#allocation9], %s55
      %s57 = sshll.u32 [#allocation10], 4
      %s58 = int_to_ptr.vmem [resolvable:$true] %s57
      %63 = dma.hbm_to_vmem [thread:$0]  %s3, 61440, %s58, [#allocation9], 128, 128, 8
    $region17: #{residual_alpha_forward.1} parent=1 // pred_fallthru
      _
    // Predicated region
    $region18: #{residual_alpha_forward.1} parent=1 // pred_check
      _
    $region19: #{residual_alpha_forward.1} parent=1 // pred_check_branch
      %65 = sbr.rel (0) target = $region21
    $region20: #{residual_alpha_forward.1} parent=1 // pred_region
      %s67 = ssub.s32 128, 128
      %68 = vsyncadd [#allocation12], %s67
      %s69 = sshll.u32 [#allocation11], 4
      %s70 = int_to_ptr.vmem [resolvable:$true] %s69
      %75 = dma.hbm_to_vmem [thread:$0]  %s4, 128, %s70, [#allocation12], 32, 32, 2
    $region21: #{residual_alpha_forward.1} parent=1 // pred_fallthru
      _
    // Predicated region
    $region22: #{residual_alpha_forward.1} parent=1 // pred_check
      _
    $region23: #{residual_alpha_forward.1} parent=1 // pred_check_branch
      %77 = sbr.rel (0) target = $region25
    $region24: #{residual_alpha_forward.1} parent=1 // pred_region
      _
    $region25: #{residual_alpha_forward.1} parent=1 // pred_fallthru
      _
    // Predicated region
    $region26: #{residual_alpha_forward.1} parent=1 // pred_check
      _
    $region27: #{residual_alpha_forward.1} parent=1 // pred_check_branch
      %79 = sbr.rel (0) target = $region29
    $region28: #{residual_alpha_forward.1} parent=1 // pred_region
      %s81 = ssub.s32 16, 16
      %82 = vsyncadd [#allocation12], %s81
      %s84 = sshll.u32 [#allocation13], 4
      %s85 = int_to_ptr.vmem [resolvable:$true] %s84
      %87 = dma.hbm_to_vmem [thread:$0]  %s6, 16, %s85, [#allocation12]
    $region29: #{residual_alpha_forward.1} parent=1 // pred_fallthru
      _
    // Predicated region
    $region30: #{residual_alpha_forward.1} parent=1 // pred_check
      _
    $region31: #{residual_alpha_forward.1} parent=1 // pred_check_branch
      %89 = sbr.rel (0) target = $region33
    $region32: #{residual_alpha_forward.1} parent=1 // pred_region
      %s91 = ssub.s32 512, 512
      %92 = vsyncadd [#allocation15], %s91
      %s93 = sshll.u32 [#allocation14], 4
      %s94 = int_to_ptr.vmem [resolvable:$true] %s93
      %99 = dma.hbm_to_vmem [thread:$0]  %s7, 512, %s94, [#allocation15], 256, 256, 16
    $region33: #{residual_alpha_forward.1} parent=1 // pred_fallthru
      _
    // Predicated region
    $region34: #{residual_alpha_forward.1} parent=1 // pred_check
      _
    $region35: #{residual_alpha_forward.1} parent=1 // pred_check_branch
      %101 = sbr.rel (0) target = $region37
    $region36: #{residual_alpha_forward.1} parent=1 // pred_region
      %s103 = ssub.s32 32, 32
      %104 = vsyncadd [#allocation15], %s103
      %s106 = sshll.u32 [#allocation16], 4
      %s107 = int_to_ptr.vmem [resolvable:$true] %s106
      %109 = dma.hbm_to_vmem [thread:$0]  %s8, 32, %s107, [#allocation15]
    $region37: #{residual_alpha_forward.1} parent=1 // pred_fallthru
      _
    // Predicated region
    $region38: #{residual_alpha_forward.1} parent=1 // pred_check
      _
    $region39: #{residual_alpha_forward.1} parent=1 // pred_check_branch
      %111 = sbr.rel (0) target = $region41
    $region40: #{residual_alpha_forward.1} parent=1 // pred_region
      %s113 = ssub.s32 1536, 1536
      %114 = vsyncadd [#allocation18], %s113
      %s115 = sshll.u32 [#allocation17], 4
      %s116 = int_to_ptr.vmem [resolvable:$true] %s115
      %121 = dma.hbm_to_vmem [thread:$0]  %s9, 1536, %s116, [#allocation18], 64, 64, 4
    $region41: #{residual_alpha_forward.1} parent=1 // pred_fallthru
      _
    // Predicated region
    $region42: #{residual_alpha_forward.1} parent=1 // pred_check
      _
    $region43: #{residual_alpha_forward.1} parent=1 // pred_check_branch
      %123 = sbr.rel (0) target = $region45
    $region44: #{residual_alpha_forward.1} parent=1 // pred_region
      %s125 = ssub.s32 16, 16
      %126 = vsyncadd [#allocation18], %s125
      %s128 = sshll.u32 [#allocation19], 4
      %s129 = int_to_ptr.vmem [resolvable:$true] %s128
      %131 = dma.hbm_to_vmem [thread:$0]  %s10, 16, %s129, [#allocation18]
    $region45: #{residual_alpha_forward.1} parent=1 // pred_fallthru
      _
    // Predicated region
    $region46: #{residual_alpha_forward.1} parent=1 // pred_check
      _
    $region47: #{residual_alpha_forward.1} parent=1 // pred_check_branch
      %133 = sbr.rel (0) target = $region49
    $region48: #{residual_alpha_forward.1} parent=1 // pred_region
      _
    $region49: #{residual_alpha_forward.1} parent=1 // pred_fallthru
      _
    // Predicated region
    $region50: #{residual_alpha_forward.1} parent=1 // pred_check
      _
    $region51: #{residual_alpha_forward.1} parent=1 // pred_check_branch
      %135 = sbr.rel (0) target = $region53
    $region52: #{residual_alpha_forward.1} parent=1 // pred_region
      _
    $region53: #{residual_alpha_forward.1} parent=1 // pred_fallthru
      _
    // Predicated region
    $region54: #{residual_alpha_forward.1} parent=1 // pred_check
      _
    $region55: #{residual_alpha_forward.1} parent=1 // pred_check_branch
      %137 = sbr.rel (0) target = $region57
    $region56: #{residual_alpha_forward.1} parent=1 // pred_region
      %138 = dma.done [#allocation6], 1536
    $region57: #{residual_alpha_forward.1} parent=1 // pred_fallthru
      _
    // Predicated region
    $region58: #{residual_alpha_forward.1} parent=1 // pred_check
      _
    $region59: #{residual_alpha_forward.1} parent=1 // pred_check_branch
      %140 = sbr.rel (0) target = $region61
    $region60: #{residual_alpha_forward.1} parent=1 // pred_region
      %141 = dma.done [#allocation9], 32
    $region61: #{residual_alpha_forward.1} parent=1 // pred_fallthru
      _
    // Predicated region
    $region62: #{residual_alpha_forward.1} parent=1 // pred_check
      _
    $region63: #{residual_alpha_forward.1} parent=1 // pred_check_branch
      %143 = sbr.rel (0) target = $region65
    $region64: #{residual_alpha_forward.1} parent=1 // pred_region
      %144 = dma.done [#allocation9], 61440
    $region65: #{residual_alpha_forward.1} parent=1 // pred_fallthru
      _
    // Predicated region
    $region66: #{residual_alpha_forward.1} parent=1 // pred_check
      _
    $region67: #{residual_alpha_forward.1} parent=1 // pred_check_branch
      %146 = sbr.rel (0) target = $region69
    $region68: #{residual_alpha_forward.1} parent=1 // pred_region
      %147 = dma.done [#allocation12], 128
    $region69: #{residual_alpha_forward.1} parent=1 // pred_fallthru
      _
    // Predicated region
    $region70: #{residual_alpha_forward.1} parent=1 // pred_check
      _
    $region71: #{residual_alpha_forward.1} parent=1 // pred_check_branch
      %149 = sbr.rel (0) target = $region73
    $region72: #{residual_alpha_forward.1} parent=1 // pred_region
      %150 = dma.done [#allocation12], 16
    $region73: #{residual_alpha_forward.1} parent=1 // pred_fallthru
      _
    // Predicated region
    $region74: #{residual_alpha_forward.1} parent=1 // pred_check
      _
    $region75: #{residual_alpha_forward.1} parent=1 // pred_check_branch
      %152 = sbr.rel (0) target = $region77
    $region76: #{residual_alpha_forward.1} parent=1 // pred_region
      %153 = dma.done [#allocation15], 512
    $region77: #{residual_alpha_forward.1} parent=1 // pred_fallthru
      _
    // Predicated region
    $region78: #{residual_alpha_forward.1} parent=1 // pred_check
      _
    $region79: #{residual_alpha_forward.1} parent=1 // pred_check_branch
      %155 = sbr.rel (0) target = $region81
    $region80: #{residual_alpha_forward.1} parent=1 // pred_region
      %156 = dma.done [#allocation15], 32
    $region81: #{residual_alpha_forward.1} parent=1 // pred_fallthru
      _
    // Predicated region
    $region82: #{residual_alpha_forward.1} parent=1 // pred_check
      _
    $region83: #{residual_alpha_forward.1} parent=1 // pred_check_branch
      %158 = sbr.rel (0) target = $region85
    $region84: #{residual_alpha_forward.1} parent=1 // pred_region
      %159 = dma.done [#allocation18], 1536
    $region85: #{residual_alpha_forward.1} parent=1 // pred_fallthru
      _
    // Predicated region
    $region86: #{residual_alpha_forward.1} parent=1 // pred_check
      _
    $region87: #{residual_alpha_forward.1} parent=1 // pred_check_branch
      %161 = sbr.rel (0) target = $region89
    $region88: #{residual_alpha_forward.1} parent=1 // pred_region
      %162 = dma.done [#allocation18], 16
    $region89: #{residual_alpha_forward.1} parent=1 // pred_fallthru
      _
    %vm164 = vcmask 244736
    %165 = vst.msk [vmem:[#allocation2] sm:$0xff] %vm164, 0.0
    %vm166 = vcmask 238592
    %167 = vst.msk [vmem:[#allocation2 + $0x8] sm:$0x3] %vm166, 0.0
    %168 = vst.msk [vmem:[#allocation2 + $0x10] sm:$0xff] %vm164, 0.0
    %169 = vst.msk [vmem:[#allocation2 + $0x18] sm:$0x3] %vm166, 0.0
    %v170 = vld [vmem:[%s0] sm:$0xff]
    %v171 = vld [vmem:[%s0 + $0x8] sm:$0xff]
    %vm172 = vcmask 195584
    %173 = vst.msk [vmem:[#allocation2 + $0x1] sm:$0xff] %vm172, %v170
    %174 = vst.msk [vmem:[#allocation2 + $0x11] sm:$0xff] %vm172, %v171
    %v175 = vld [vmem:[#allocation8] sm:$0x3]
    %v176 = vld [vmem:[#allocation2] sm:$0xff]
    %v177 = vld [vmem:[#allocation2 + $0x10] sm:$0xff]
    %v178 = vld [vmem:[#allocation5] sm:$0xff]
    %v179 = vld [vmem:[#allocation5 + $0x8] sm:$0xff]
    %v180 = vld [vmem:[#allocation5 + $0x10] sm:$0xff]
    %v181 = vld [vmem:[#allocation5 + $0x18] sm:$0x77]
    %v182 = vpack.c.bf16 %v177, %v176
    %v183 = vld [vmem:[#allocation2 + $0x1] sm:$0xff]
    %v184 = vld [vmem:[#allocation2 + $0x11] sm:$0xff]
    %s185 = scalar_lea.vmem [#allocation5], 32
    %v186 = vld [vmem:[%s185] sm:$0xff]
    %v187 = vld [vmem:[%s185 + $0x8] sm:$0xff]
    %v188 = vld [vmem:[%s185 + $0x10] sm:$0xff]
    %v189 = vld [vmem:[%s185 + $0x18] sm:$0x77]
    %v190 = vpack.c.bf16 %v184, %v183
    %v195 = vunpack.c.l.b16 %v186
    %v196 = vunpack.c.h.b16 %v186
    %v197 = vunpack.c.l.b16 %v187
    %v198 = vunpack.c.h.b16 %v187
    %v199 = vunpack.c.l.b16 %v188
    %v200 = vunpack.c.h.b16 %v188
    %v201 = vunpack.c.l.b16 %v189
    %v202 = vunpack.c.h.b16 %v189
    %v203 = vpack.c.b16 %v197, %v195
    %v204 = vpack.c.b16 %v198, %v196
    %v205 = vpack.c.b16 %v201, %v199
    %v206 = vpack.c.b16 %v202, %v200
    %v210 = vsel %vm164, %v190, 0
    %vm212 = vcmask 1046528
    %v214 = vsel %vm212, %v205, 0
    %v217 = vsel %vm212, %v206, 0
    %219 = vmatprep.subr.bf16.mxu0 0
    %220 = vmatpush1.bf16.msra.mxu0 0
    %221 = vmatprep.subr.bf16.mxu0 0
    %222 = vmatpush1.bf16.msra.mxu0 0
    %223 = vmatprep.subr.bf16.mxu0 0
    %224 = vmatpush1.bf16.msra.mxu0 0
    %225 = vmatprep.subr.bf16.mxu0 0
    %226 = vmatpush1.bf16.msra.mxu0 0
    %227 = vmatprep.subr.bf16.mxu0 0
    %228 = vmatpush1.bf16.msra.mxu0 0
    %229 = vmatprep.subr.bf16.mxu0 0
    %230 = vmatpush1.bf16.msra.mxu0 0
    %231 = vmatprep.subr.bf16.mxu0 %v217
    %232 = vmatpush1.bf16.msra.mxu0 %v214
    %233 = vmatprep.subr.bf16.mxu0 %v204
    %234 = vmatpush1.bf16.msra.mxu0 %v203
    %235 = vmatprep.subr.bf16.mxu0 0
    %236 = vmatpush2.bf16.msra.mxu0 0
    %237 = vmatprep.subr.bf16.mxu0 0
    %238 = vmatpush2.bf16.msra.mxu0 0
    %239 = vmatprep.subr.bf16.mxu0 0
    %240 = vmatpush2.bf16.msra.mxu0 0
    %241 = vmatprep.subr.bf16.mxu0 0
    %242 = vmatpush2.bf16.msra.mxu0 0
    %243 = vmatprep.subr.bf16.mxu0 0
    %244 = vmatpush2.bf16.msra.mxu0 0
    %245 = vmatprep.subr.bf16.mxu0 0
    %246 = vmatpush2.bf16.msra.mxu0 0
    %247 = vmatprep.subr.bf16.mxu0 0
    %248 = vmatpush2.bf16.msra.mxu0 0
    %249 = vmatprep.subr.bf16.mxu0 0
    %250 = vmatpush2.bf16.msra.mxu0 0
    %251 = vmatprep.mubr.bf16.mxu0 0
    %252 = vmatmul.mubr.bf16.gmra.mxu0 %v210
    %v253 = vpop.f32.mrf.mxu0
    %v254 = vadd.f32 0.0, %v253
    %v255 = vpop.f32.mrf.mxu0
    %v256 = vadd.f32 0.0, %v255
    %v257 = vpop.f32.mrf.mxu0
    %v258 = vadd.f32 0.0, %v257
    %v259 = vpop.f32.mrf.mxu0
    %v260 = vadd.f32 0.0, %v259
    %261 = vdwg.mxu0
    %v266 = vunpack.c.l.b16 %v178
    %v267 = vunpack.c.h.b16 %v178
    %v268 = vunpack.c.l.b16 %v179
    %v269 = vunpack.c.h.b16 %v179
    %v270 = vunpack.c.l.b16 %v180
    %v271 = vunpack.c.h.b16 %v180
    %v272 = vunpack.c.l.b16 %v181
    %v273 = vunpack.c.h.b16 %v181
    %v274 = vpack.c.b16 %v268, %v266
    %v275 = vpack.c.b16 %v269, %v267
    %v276 = vpack.c.b16 %v272, %v270
    %v277 = vpack.c.b16 %v273, %v271
    %v281 = vsel %vm164, %v182, 0
    %v284 = vsel %vm212, %v276, 0
    %v287 = vsel %vm212, %v277, 0
    %289 = vmatprep.subr.bf16.mxu0 0
    %290 = vmatpush1.bf16.msra.mxu0 0
    %291 = vmatprep.subr.bf16.mxu0 0
    %292 = vmatpush1.bf16.msra.mxu0 0
    %293 = vmatprep.subr.bf16.mxu0 0
    %294 = vmatpush1.bf16.msra.mxu0 0
    %295 = vmatprep.subr.bf16.mxu0 0
    %296 = vmatpush1.bf16.msra.mxu0 0
    %297 = vmatprep.subr.bf16.mxu0 0
    %298 = vmatpush1.bf16.msra.mxu0 0
    %299 = vmatprep.subr.bf16.mxu0 0
    %300 = vmatpush1.bf16.msra.mxu0 0
    %301 = vmatprep.subr.bf16.mxu0 %v287
    %302 = vmatpush1.bf16.msra.mxu0 %v284
    %303 = vmatprep.subr.bf16.mxu0 %v275
    %304 = vmatpush1.bf16.msra.mxu0 %v274
    %305 = vmatprep.subr.bf16.mxu0 0
    %306 = vmatpush2.bf16.msra.mxu0 0
    %307 = vmatprep.subr.bf16.mxu0 0
    %308 = vmatpush2.bf16.msra.mxu0 0
    %309 = vmatprep.subr.bf16.mxu0 0
    %310 = vmatpush2.bf16.msra.mxu0 0
    %311 = vmatprep.subr.bf16.mxu0 0
    %312 = vmatpush2.bf16.msra.mxu0 0
    %313 = vmatprep.subr.bf16.mxu0 0
    %314 = vmatpush2.bf16.msra.mxu0 0
    %315 = vmatprep.subr.bf16.mxu0 0
    %316 = vmatpush2.bf16.msra.mxu0 0
    %317 = vmatprep.subr.bf16.mxu0 0
    %318 = vmatpush2.bf16.msra.mxu0 0
    %319 = vmatprep.subr.bf16.mxu0 0
    %320 = vmatpush2.bf16.msra.mxu0 0
    %321 = vmatprep.mubr.bf16.mxu0 0
    %322 = vmatmul.mubr.bf16.gmra.mxu0 %v281
    %v323 = vpop.f32.mrf.mxu0
    %v324 = vadd.f32 %v254, %v323
    %v325 = vpop.f32.mrf.mxu0
    %v326 = vadd.f32 %v256, %v325
    %v327 = vpop.f32.mrf.mxu0
    %v328 = vadd.f32 %v258, %v327
    %v329 = vpop.f32.mrf.mxu0
    %v330 = vadd.f32 %v260, %v329
    %331 = vdwg.mxu0
    %v332 = vld [vmem:[#allocation2 + $0x2] sm:$0xff]
    %v333 = vld [vmem:[#allocation2 + $0x12] sm:$0xff]
    %s334 = scalar_lea.vmem [#allocation5], 64
    %v335 = vld [vmem:[%s334] sm:$0xff]
    %v336 = vld [vmem:[%s334 + $0x8] sm:$0xff]
    %v337 = vld [vmem:[%s334 + $0x10] sm:$0xff]
    %v338 = vld [vmem:[%s334 + $0x18] sm:$0x77]
    %v339 = vpack.c.bf16 %v333, %v332
    %v344 = vunpack.c.l.b16 %v335
    %v345 = vunpack.c.h.b16 %v335
    %v346 = vunpack.c.l.b16 %v336
    %v347 = vunpack.c.h.b16 %v336
    %v348 = vunpack.c.l.b16 %v337
    %v349 = vunpack.c.h.b16 %v337
    %v350 = vunpack.c.l.b16 %v338
    %v351 = vunpack.c.h.b16 %v338
    %v352 = vpack.c.b16 %v346, %v344
    %v353 = vpack.c.b16 %v347, %v345
    %v354 = vpack.c.b16 %v350, %v348
    %v355 = vpack.c.b16 %v351, %v349
    %v359 = vsel %vm164, %v339, 0
    %v362 = vsel %vm212, %v354, 0
    %v365 = vsel %vm212, %v355, 0
    %367 = vmatprep.subr.bf16.mxu0 0
    %368 = vmatpush1.bf16.msra.mxu0 0
    %369 = vmatprep.subr.bf16.mxu0 0
    %370 = vmatpush1.bf16.msra.mxu0 0
    %371 = vmatprep.subr.bf16.mxu0 0
    %372 = vmatpush1.bf16.msra.mxu0 0
    %373 = vmatprep.subr.bf16.mxu0 0
    %374 = vmatpush1.bf16.msra.mxu0 0
    %375 = vmatprep.subr.bf16.mxu0 0
    %376 = vmatpush1.bf16.msra.mxu0 0
    %377 = vmatprep.subr.bf16.mxu0 0
    %378 = vmatpush1.bf16.msra.mxu0 0
    %379 = vmatprep.subr.bf16.mxu0 %v365
    %380 = vmatpush1.bf16.msra.mxu0 %v362
    %381 = vmatprep.subr.bf16.mxu0 %v353
    %382 = vmatpush1.bf16.msra.mxu0 %v352
    %383 = vmatprep.subr.bf16.mxu0 0
    %384 = vmatpush2.bf16.msra.mxu0 0
    %385 = vmatprep.subr.bf16.mxu0 0
    %386 = vmatpush2.bf16.msra.mxu0 0
    %387 = vmatprep.subr.bf16.mxu0 0
    %388 = vmatpush2.bf16.msra.mxu0 0
    %389 = vmatprep.subr.bf16.mxu0 0
    %390 = vmatpush2.bf16.msra.mxu0 0
    %391 = vmatprep.subr.bf16.mxu0 0
    %392 = vmatpush2.bf16.msra.mxu0 0
    %393 = vmatprep.subr.bf16.mxu0 0
    %394 = vmatpush2.bf16.msra.mxu0 0
    %395 = vmatprep.subr.bf16.mxu0 0
    %396 = vmatpush2.bf16.msra.mxu0 0
    %397 = vmatprep.subr.bf16.mxu0 0
    %398 = vmatpush2.bf16.msra.mxu0 0
    %399 = vmatprep.mubr.bf16.mxu0 0
    %400 = vmatmul.mubr.bf16.gmra.mxu0 %v359
    %v401 = vpop.f32.mrf.mxu0
    %v402 = vadd.f32 0.0, %v401
    %v403 = vpop.f32.mrf.mxu0
    %v404 = vadd.f32 0.0, %v403
    %v405 = vpop.f32.mrf.mxu0
    %v406 = vadd.f32 0.0, %v405
    %v407 = vpop.f32.mrf.mxu0
    %v408 = vadd.f32 0.0, %v407
    %409 = vdwg.mxu0
    %v410 = vadd.f32 %v324, %v402
    %v411 = vadd.f32 %v326, %v404
    %v412 = vadd.f32 %v328, %v406
    %v413 = vadd.f32 %v330, %v408
    %v415 = vlaneseq
    %v416 = vshrl.u32 %v415, 7
    %v417 = vsub.s32 0, %v416
    %v418 = vrot.slane %v175, %v417
    %v419 = vlaneseq
    %v420 = vshrl.u32 %v419, 7
    %v421 = vsub.s32 1, %v420
    %v422 = vrot.slane %v175, %v421
    %v425 = vadd.f32 %v410, %v418
    %v426 = vadd.f32 %v411, %v422
    %v427 = vadd.f32 %v412, %v418
    %v428 = vadd.f32 %v413, %v422
    %v429 = vmax.f32 %v425, 0.0
    %v430 = vmax.f32 %v426, 0.0
    %v431 = vmax.f32 %v427, 0.0
    %v432 = vmax.f32 %v428, 0.0
    %433 = vst [vmem:[#allocation3] sm:$0xff] 0.0
    %434 = vst [vmem:[#allocation3 + $0x8] sm:$0xff] 0.0
    %vm435 = vcmask 523264
    %436 = vst.msk [vmem:[#allocation3 + $0x10] sm:$0xff] %vm435, 0.0
    %437 = vst [vmem:[#allocation3 + $0x18] sm:$0x3] 0.0
    %438 = vst [vmem:[#allocation3 + $0x20] sm:$0x3] 0.0
    %vm439 = vcmask 517120
    %440 = vst.msk [vmem:[#allocation3 + $0x28] sm:$0x3] %vm439, 0.0
    %441 = vst [vmem:[#allocation3 + $0x30] sm:$0xff] 0.0
    %442 = vst [vmem:[#allocation3 + $0x38] sm:$0xff] 0.0
    %443 = vst.msk [vmem:[#allocation3 + $0x40] sm:$0xff] %vm435, 0.0
    %444 = vst [vmem:[#allocation3 + $0x48] sm:$0x3] 0.0
    %445 = vst [vmem:[#allocation3 + $0x50] sm:$0x3] 0.0
    %446 = vst.msk [vmem:[#allocation3 + $0x58] sm:$0x3] %vm439, 0.0
    %v451 = vrot.slane %v429, 7
    %v452 = vrot.slane %v430, 7
    %v453 = vrot.slane %v431, 7
    %v454 = vrot.slane %v432, 7
    %459 = vst [vmem:[#allocation3] sm:$0xfe] %v451
    %460 = vst [vmem:[#allocation3 + $0x8] sm:$0xfe] %v452
    %461 = vst [vmem:[#allocation3 + $0x18] sm:$0x1] %v451
    %462 = vst [vmem:[#allocation3 + $0x20] sm:$0x1] %v452
    %463 = vst [vmem:[#allocation3 + $0x30] sm:$0xfe] %v453
    %464 = vst [vmem:[#allocation3 + $0x38] sm:$0xfe] %v454
    %465 = vst [vmem:[#allocation3 + $0x48] sm:$0x1] %v453
    %466 = vst [vmem:[#allocation3 + $0x50] sm:$0x1] %v454
    %v467 = vld [vmem:[#allocation11] sm:$0x3]
    %v468 = vld [vmem:[#allocation3] sm:$0xff]
    %v469 = vld [vmem:[#allocation3 + $0x8] sm:$0xff]
    %v470 = vld [vmem:[#allocation3 + $0x10] sm:$0xff]
    %v471 = vld [vmem:[#allocation3 + $0x30] sm:$0xff]
    %v472 = vld [vmem:[#allocation3 + $0x38] sm:$0xff]
    %v473 = vld [vmem:[#allocation3 + $0x40] sm:$0xff]
    %v474 = vld [vmem:[#allocation10] sm:$0xff]
    %v475 = vld [vmem:[#allocation10 + $0x8] sm:$0xff]
    %v476 = vld [vmem:[#allocation10 + $0x10] sm:$0xff]
    %v477 = vld [vmem:[#allocation10 + $0x18] sm:$0xff]
    %v478 = vld [vmem:[#allocation10 + $0x20] sm:$0xff]
    %v479 = vld [vmem:[#allocation10 + $0x28] sm:$0xff]
    %v480 = vld [vmem:[#allocation10 + $0x30] sm:$0xff]
    %v481 = vld [vmem:[#allocation10 + $0x38] sm:$0xff]
    %v482 = vld [vmem:[#allocation10 + $0x40] sm:$0xff]
    %v483 = vld [vmem:[#allocation10 + $0x48] sm:$0xff]
    %v484 = vld [vmem:[#allocation10 + $0x50] sm:$0xff]
    %v485 = vld [vmem:[#allocation10 + $0x58] sm:$0xff]
    %v486 = vld [vmem:[#allocation10 + $0x60] sm:$0xff]
    %v487 = vld [vmem:[#allocation10 + $0x68] sm:$0xff]
    %v488 = vld [vmem:[#allocation10 + $0x70] sm:$0xff]
    %v489 = vld [vmem:[#allocation10 + $0x78] sm:$0xff]
    %v490 = vld [vmem:[#allocation10 + $0x80] sm:$0xff]
    %v491 = vld [vmem:[#allocation10 + $0x88] sm:$0xff]
    %v492 = vld [vmem:[#allocation10 + $0x90] sm:$0xff]
    %v493 = vld [vmem:[#allocation10 + $0x98] sm:$0xff]
    %v494 = vld [vmem:[#allocation10 + $0xa0] sm:$0xff]
    %v495 = vld [vmem:[#allocation10 + $0xa8] sm:$0xff]
    %v496 = vld [vmem:[#allocation10 + $0xb0] sm:$0xff]
    %v497 = vld [vmem:[#allocation10 + $0xb8] sm:$0xff]
    %v498 = vld [vmem:[#allocation10 + $0xc0] sm:$0xff]
    %v499 = vld [vmem:[#allocation10 + $0xc8] sm:$0xff]
    %v500 = vld [vmem:[#allocation10 + $0xd0] sm:$0xff]
    %v501 = vld [vmem:[#allocation10 + $0xd8] sm:$0xff]
    %v502 = vld [vmem:[#allocation10 + $0xe0] sm:$0xff]
    %v503 = vld [vmem:[#allocation10 + $0xe8] sm:$0xff]
    %v504 = vld [vmem:[#allocation10 + $0xf0] sm:$0xff]
    %v505 = vld [vmem:[#allocation10 + $0xf8] sm:$0xff]
    %v506 = vld [vmem:[#allocation10 + $0x100] sm:$0xff]
    %v507 = vld [vmem:[#allocation10 + $0x108] sm:$0xff]
    %v508 = vld [vmem:[#allocation10 + $0x110] sm:$0xff]
    %v509 = vld [vmem:[#allocation10 + $0x118] sm:$0xff]
    %v510 = vld [vmem:[#allocation10 + $0x120] sm:$0xff]
    %v511 = vld [vmem:[#allocation10 + $0x128] sm:$0xff]
    %v512 = vld [vmem:[#allocation10 + $0x130] sm:$0xff]
    %v513 = vld [vmem:[#allocation10 + $0x138] sm:$0xff]
    %v514 = vpack.c.bf16 %v471, %v468
    %v515 = vpack.c.bf16 %v472, %v469
    %v516 = vpack.c.bf16 %v473, %v470
    %v517 = vld [vmem:[#allocation3] sm:$0xfe]
    %v518 = vld [vmem:[#allocation3 + $0x8] sm:$0xfe]
    %v519 = vld [vmem:[#allocation3 + $0x10] sm:$0xfe]
    %v520 = vld [vmem:[#allocation3 + $0x18] sm:$0x1]
    %v521 = vld [vmem:[#allocation3 + $0x20] sm:$0x1]
    %v522 = vld [vmem:[#allocation3 + $0x28] sm:$0x1]
    %v523 = vld [vmem:[#allocation3 + $0x30] sm:$0xfe]
    %v524 = vld [vmem:[#allocation3 + $0x38] sm:$0xfe]
    %v525 = vld [vmem:[#allocation3 + $0x40] sm:$0xfe]
    %v526 = vld [vmem:[#allocation3 + $0x48] sm:$0x1]
    %v527 = vld [vmem:[#allocation3 + $0x50] sm:$0x1]
    %v528 = vld [vmem:[#allocation3 + $0x58] sm:$0x1]
    %v541 = vrot.slane %v517, 1
    %v542 = vrot.slane %v520, 1
    %v543 = vsel %vm212, %v541, %v542
    %v544 = vrot.slane %v518, 1
    %v545 = vrot.slane %v521, 1
    %v546 = vsel %vm212, %v544, %v545
    %v547 = vrot.slane %v519, 1
    %v548 = vrot.slane %v522, 1
    %v549 = vsel %vm212, %v547, %v548
    %v550 = vrot.slane %v523, 1
    %v551 = vrot.slane %v526, 1
    %v552 = vsel %vm212, %v550, %v551
    %v553 = vrot.slane %v524, 1
    %v554 = vrot.slane %v527, 1
    %v555 = vsel %vm212, %v553, %v554
    %v556 = vrot.slane %v525, 1
    %v557 = vrot.slane %v528, 1
    %v558 = vsel %vm212, %v556, %v557
    %s565 = scalar_lea.vmem [#allocation10], 320
    %v566 = vld [vmem:[%s565] sm:$0xff]
    %v567 = vld [vmem:[%s565 + $0x8] sm:$0xff]
    %v568 = vld [vmem:[%s565 + $0x10] sm:$0xff]
    %v569 = vld [vmem:[%s565 + $0x18] sm:$0xff]
    %v570 = vld [vmem:[%s565 + $0x20] sm:$0xff]
    %v571 = vld [vmem:[%s565 + $0x28] sm:$0xff]
    %v572 = vld [vmem:[%s565 + $0x30] sm:$0xff]
    %v573 = vld [vmem:[%s565 + $0x38] sm:$0xff]
    %v574 = vld [vmem:[%s565 + $0x40] sm:$0xff]
    %v575 = vld [vmem:[%s565 + $0x48] sm:$0xff]
    %v576 = vld [vmem:[%s565 + $0x50] sm:$0xff]
    %v577 = vld [vmem:[%s565 + $0x58] sm:$0xff]
    %v578 = vld [vmem:[%s565 + $0x60] sm:$0xff]
    %v579 = vld [vmem:[%s565 + $0x68] sm:$0xff]
    %v580 = vld [vmem:[%s565 + $0x70] sm:$0xff]
    %v581 = vld [vmem:[%s565 + $0x78] sm:$0xff]
    %v582 = vld [vmem:[%s565 + $0x80] sm:$0xff]
    %v583 = vld [vmem:[%s565 + $0x88] sm:$0xff]
    %v584 = vld [vmem:[%s565 + $0x90] sm:$0xff]
    %v585 = vld [vmem:[%s565 + $0x98] sm:$0xff]
    %v586 = vld [vmem:[%s565 + $0xa0] sm:$0xff]
    %v587 = vld [vmem:[%s565 + $0xa8] sm:$0xff]
    %v588 = vld [vmem:[%s565 + $0xb0] sm:$0xff]
    %v589 = vld [vmem:[%s565 + $0xb8] sm:$0xff]
    %v590 = vld [vmem:[%s565 + $0xc0] sm:$0xff]
    %v591 = vld [vmem:[%s565 + $0xc8] sm:$0xff]
    %v592 = vld [vmem:[%s565 + $0xd0] sm:$0xff]
    %v593 = vld [vmem:[%s565 + $0xd8] sm:$0xff]
    %v594 = vld [vmem:[%s565 + $0xe0] sm:$0xff]
    %v595 = vld [vmem:[%s565 + $0xe8] sm:$0xff]
    %v596 = vld [vmem:[%s565 + $0xf0] sm:$0xff]
    %v597 = vld [vmem:[%s565 + $0xf8] sm:$0xff]
    %v598 = vld [vmem:[%s565 + $0x100] sm:$0xff]
    %v599 = vld [vmem:[%s565 + $0x108] sm:$0xff]
    %v600 = vld [vmem:[%s565 + $0x110] sm:$0xff]
    %v601 = vld [vmem:[%s565 + $0x118] sm:$0xff]
    %v602 = vld [vmem:[%s565 + $0x120] sm:$0xff]
    %v603 = vld [vmem:[%s565 + $0x128] sm:$0xff]
    %v604 = vld [vmem:[%s565 + $0x130] sm:$0xff]
    %v605 = vld [vmem:[%s565 + $0x138] sm:$0xff]
    %v606 = vpack.c.bf16 %v552, %v543
    %v607 = vpack.c.bf16 %v555, %v546
    %v608 = vpack.c.bf16 %v558, %v549
    %v649 = vunpack.c.l.b16 %v566
    %v650 = vunpack.c.h.b16 %v566
    %v651 = vunpack.c.l.b16 %v567
    %v652 = vunpack.c.h.b16 %v567
    %v653 = vunpack.c.l.b16 %v568
    %v654 = vunpack.c.h.b16 %v568
    %v655 = vunpack.c.l.b16 %v569
    %v656 = vunpack.c.h.b16 %v569
    %v657 = vunpack.c.l.b16 %v570
    %v658 = vunpack.c.h.b16 %v570
    %v659 = vunpack.c.l.b16 %v571
    %v660 = vunpack.c.h.b16 %v571
    %v661 = vunpack.c.l.b16 %v572
    %v662 = vunpack.c.h.b16 %v572
    %v663 = vunpack.c.l.b16 %v573
    %v664 = vunpack.c.h.b16 %v573
    %v665 = vunpack.c.l.b16 %v574
    %v666 = vunpack.c.h.b16 %v574
    %v667 = vunpack.c.l.b16 %v575
    %v668 = vunpack.c.h.b16 %v575
    %v669 = vunpack.c.l.b16 %v576
    %v670 = vunpack.c.h.b16 %v576
    %v671 = vunpack.c.l.b16 %v577
    %v672 = vunpack.c.h.b16 %v577
    %v673 = vunpack.c.l.b16 %v578
    %v674 = vunpack.c.h.b16 %v578
    %v675 = vunpack.c.l.b16 %v579
    %v676 = vunpack.c.h.b16 %v579
    %v677 = vunpack.c.l.b16 %v580
    %v678 = vunpack.c.h.b16 %v580
    %v679 = vunpack.c.l.b16 %v581
    %v680 = vunpack.c.h.b16 %v581
    %v681 = vunpack.c.l.b16 %v582
    %v682 = vunpack.c.h.b16 %v582
    %v683 = vunpack.c.l.b16 %v583
    %v684 = vunpack.c.h.b16 %v583
    %v685 = vunpack.c.l.b16 %v584
    %v686 = vunpack.c.h.b16 %v584
    %v687 = vunpack.c.l.b16 %v585
    %v688 = vunpack.c.h.b16 %v585
    %v689 = vunpack.c.l.b16 %v586
    %v690 = vunpack.c.h.b16 %v586
    %v691 = vunpack.c.l.b16 %v587
    %v692 = vunpack.c.h.b16 %v587
    %v693 = vunpack.c.l.b16 %v588
    %v694 = vunpack.c.h.b16 %v588
    %v695 = vunpack.c.l.b16 %v589
    %v696 = vunpack.c.h.b16 %v589
    %v697 = vunpack.c.l.b16 %v590
    %v698 = vunpack.c.h.b16 %v590
    %v699 = vunpack.c.l.b16 %v591
    %v700 = vunpack.c.h.b16 %v591
    %v701 = vunpack.c.l.b16 %v592
    %v702 = vunpack.c.h.b16 %v592
    %v703 = vunpack.c.l.b16 %v593
    %v704 = vunpack.c.h.b16 %v593
    %v705 = vunpack.c.l.b16 %v594
    %v706 = vunpack.c.h.b16 %v594
    %v707 = vunpack.c.l.b16 %v595
    %v708 = vunpack.c.h.b16 %v595
    %v709 = vunpack.c.l.b16 %v596
    %v710 = vunpack.c.h.b16 %v596
    %v711 = vunpack.c.l.b16 %v597
    %v712 = vunpack.c.h.b16 %v597
    %v713 = vunpack.c.l.b16 %v598
    %v714 = vunpack.c.h.b16 %v598
    %v715 = vunpack.c.l.b16 %v599
    %v716 = vunpack.c.h.b16 %v599
    %v717 = vunpack.c.l.b16 %v600
    %v718 = vunpack.c.h.b16 %v600
    %v719 = vunpack.c.l.b16 %v601
    %v720 = vunpack.c.h.b16 %v601
    %v721 = vunpack.c.l.b16 %v602
    %v722 = vunpack.c.h.b16 %v602
    %v723 = vunpack.c.l.b16 %v603
    %v724 = vunpack.c.h.b16 %v603
    %v725 = vunpack.c.l.b16 %v604
    %v726 = vunpack.c.h.b16 %v604
    %v727 = vunpack.c.l.b16 %v605
    %v728 = vunpack.c.h.b16 %v605
    %v729 = vpack.c.b16 %v651, %v649
    %v730 = vpack.c.b16 %v652, %v650
    %v731 = vpack.c.b16 %v655, %v653
    %v732 = vpack.c.b16 %v656, %v654
    %v733 = vpack.c.b16 %v659, %v657
    %v734 = vpack.c.b16 %v660, %v658
    %v735 = vpack.c.b16 %v663, %v661
    %v736 = vpack.c.b16 %v664, %v662
    %v737 = vpack.c.b16 %v667, %v665
    %v738 = vpack.c.b16 %v668, %v666
    %v739 = vpack.c.b16 %v671, %v669
    %v740 = vpack.c.b16 %v672, %v670
    %v741 = vpack.c.b16 %v675, %v673
    %v742 = vpack.c.b16 %v676, %v674
    %v743 = vpack.c.b16 %v679, %v677
    %v744 = vpack.c.b16 %v680, %v678
    %v745 = vpack.c.b16 %v683, %v681
    %v746 = vpack.c.b16 %v684, %v682
    %v747 = vpack.c.b16 %v687, %v685
    %v748 = vpack.c.b16 %v688, %v686
    %v749 = vpack.c.b16 %v691, %v689
    %v750 = vpack.c.b16 %v692, %v690
    %v751 = vpack.c.b16 %v695, %v693
    %v752 = vpack.c.b16 %v696, %v694
    %v753 = vpack.c.b16 %v699, %v697
    %v754 = vpack.c.b16 %v700, %v698
    %v755 = vpack.c.b16 %v703, %v701
    %v756 = vpack.c.b16 %v704, %v702
    %v757 = vpack.c.b16 %v707, %v705
    %v758 = vpack.c.b16 %v708, %v706
    %v759 = vpack.c.b16 %v711, %v709
    %v760 = vpack.c.b16 %v712, %v710
    %v761 = vpack.c.b16 %v715, %v713
    %v762 = vpack.c.b16 %v716, %v714
    %v763 = vpack.c.b16 %v719, %v717
    %v764 = vpack.c.b16 %v720, %v718
    %v765 = vpack.c.b16 %v723, %v721
    %v766 = vpack.c.b16 %v724, %v722
    %v767 = vpack.c.b16 %v727, %v725
    %v768 = vpack.c.b16 %v728, %v726
    %v810 = vsel %vm435, %v608, 0
    %812 = vmatprep.subr.bf16.mxu0 %v744
    %813 = vmatpush1.bf16.msra.mxu0 %v743
    %814 = vmatprep.subr.bf16.mxu0 %v742
    %815 = vmatpush1.bf16.msra.mxu0 %v741
    %816 = vmatprep.subr.bf16.mxu0 %v740
    %817 = vmatpush1.bf16.msra.mxu0 %v739
    %818 = vmatprep.subr.bf16.mxu0 %v738
    %819 = vmatpush1.bf16.msra.mxu0 %v737
    %820 = vmatprep.subr.bf16.mxu0 %v736
    %821 = vmatpush1.bf16.msra.mxu0 %v735
    %822 = vmatprep.subr.bf16.mxu0 %v734
    %823 = vmatpush1.bf16.msra.mxu0 %v733
    %824 = vmatprep.subr.bf16.mxu0 %v732
    %825 = vmatpush1.bf16.msra.mxu0 %v731
    %826 = vmatprep.subr.bf16.mxu0 %v730
    %827 = vmatpush1.bf16.msra.mxu0 %v729
    %828 = vmatprep.subr.bf16.mxu0 %v760
    %829 = vmatpush2.bf16.msra.mxu0 %v759
    %830 = vmatprep.subr.bf16.mxu0 %v758
    %831 = vmatpush2.bf16.msra.mxu0 %v757
    %832 = vmatprep.subr.bf16.mxu0 %v756
    %833 = vmatpush2.bf16.msra.mxu0 %v755
    %834 = vmatprep.subr.bf16.mxu0 %v754
    %835 = vmatpush2.bf16.msra.mxu0 %v753
    %836 = vmatprep.subr.bf16.mxu0 %v752
    %837 = vmatpush2.bf16.msra.mxu0 %v751
    %838 = vmatprep.subr.bf16.mxu0 %v750
    %839 = vmatpush2.bf16.msra.mxu0 %v749
    %840 = vmatprep.subr.bf16.mxu0 %v748
    %841 = vmatpush2.bf16.msra.mxu0 %v747
    %842 = vmatprep.subr.bf16.mxu0 %v746
    %843 = vmatpush2.bf16.msra.mxu0 %v745
    %844 = vmatprep.mubr.bf16.mxu0 %v607
    %845 = vmatmul.mubr.bf16.gmra.mxu0 %v606
    %v846 = vpop.f32.mrf.mxu0
    %v847 = vadd.f32 0.0, %v846
    %v848 = vpop.f32.mrf.mxu0
    %v849 = vadd.f32 0.0, %v848
    %v850 = vpop.f32.mrf.mxu0
    %v851 = vadd.f32 0.0, %v850
    %v852 = vpop.f32.mrf.mxu0
    %v853 = vadd.f32 0.0, %v852
    %854 = vdwg.mxu0
    %855 = vmatprep.subr.bf16.mxu0 0
    %856 = vmatpush1.bf16.msra.mxu0 0
    %857 = vmatprep.subr.bf16.mxu0 0
    %858 = vmatpush1.bf16.msra.mxu0 0
    %859 = vmatprep.subr.bf16.mxu0 0
    %860 = vmatpush1.bf16.msra.mxu0 0
    %861 = vmatprep.subr.bf16.mxu0 0
    %862 = vmatpush1.bf16.msra.mxu0 0
    %863 = vmatprep.subr.bf16.mxu0 %v768
    %864 = vmatpush1.bf16.msra.mxu0 %v767
    %865 = vmatprep.subr.bf16.mxu0 %v766
    %866 = vmatpush1.bf16.msra.mxu0 %v765
    %867 = vmatprep.subr.bf16.mxu0 %v764
    %868 = vmatpush1.bf16.msra.mxu0 %v763
    %869 = vmatprep.subr.bf16.mxu0 %v762
    %870 = vmatpush1.bf16.msra.mxu0 %v761
    %871 = vmatprep.subr.bf16.mxu0 0
    %872 = vmatpush2.bf16.msra.mxu0 0
    %873 = vmatprep.subr.bf16.mxu0 0
    %874 = vmatpush2.bf16.msra.mxu0 0
    %875 = vmatprep.subr.bf16.mxu0 0
    %876 = vmatpush2.bf16.msra.mxu0 0
    %877 = vmatprep.subr.bf16.mxu0 0
    %878 = vmatpush2.bf16.msra.mxu0 0
    %879 = vmatprep.subr.bf16.mxu0 0
    %880 = vmatpush2.bf16.msra.mxu0 0
    %881 = vmatprep.subr.bf16.mxu0 0
    %882 = vmatpush2.bf16.msra.mxu0 0
    %883 = vmatprep.subr.bf16.mxu0 0
    %884 = vmatpush2.bf16.msra.mxu0 0
    %885 = vmatprep.subr.bf16.mxu0 0
    %886 = vmatpush2.bf16.msra.mxu0 0
    %887 = vmatprep.mubr.bf16.mxu0 0
    %888 = vmatmul.mubr.bf16.gmra.mxu0 %v810
    %v889 = vpop.f32.mrf.mxu0
    %v890 = vadd.f32 %v847, %v889
    %v891 = vpop.f32.mrf.mxu0
    %v892 = vadd.f32 %v849, %v891
    %v893 = vpop.f32.mrf.mxu0
    %v894 = vadd.f32 %v851, %v893
    %v895 = vpop.f32.mrf.mxu0
    %v896 = vadd.f32 %v853, %v895
    %897 = vdwg.mxu0
    %v938 = vunpack.c.l.b16 %v474
    %v939 = vunpack.c.h.b16 %v474
    %v940 = vunpack.c.l.b16 %v475
    %v941 = vunpack.c.h.b16 %v475
    %v942 = vunpack.c.l.b16 %v476
    %v943 = vunpack.c.h.b16 %v476
    %v944 = vunpack.c.l.b16 %v477
    %v945 = vunpack.c.h.b16 %v477
    %v946 = vunpack.c.l.b16 %v478
    %v947 = vunpack.c.h.b16 %v478
    %v948 = vunpack.c.l.b16 %v479
    %v949 = vunpack.c.h.b16 %v479
    %v950 = vunpack.c.l.b16 %v480
    %v951 = vunpack.c.h.b16 %v480
    %v952 = vunpack.c.l.b16 %v481
    %v953 = vunpack.c.h.b16 %v481
    %v954 = vunpack.c.l.b16 %v482
    %v955 = vunpack.c.h.b16 %v482
    %v956 = vunpack.c.l.b16 %v483
    %v957 = vunpack.c.h.b16 %v483
    %v958 = vunpack.c.l.b16 %v484
    %v959 = vunpack.c.h.b16 %v484
    %v960 = vunpack.c.l.b16 %v485
    %v961 = vunpack.c.h.b16 %v485
    %v962 = vunpack.c.l.b16 %v486
    %v963 = vunpack.c.h.b16 %v486
    %v964 = vunpack.c.l.b16 %v487
    %v965 = vunpack.c.h.b16 %v487
    %v966 = vunpack.c.l.b16 %v488
    %v967 = vunpack.c.h.b16 %v488
    %v968 = vunpack.c.l.b16 %v489
    %v969 = vunpack.c.h.b16 %v489
    %v970 = vunpack.c.l.b16 %v490
    %v971 = vunpack.c.h.b16 %v490
    %v972 = vunpack.c.l.b16 %v491
    %v973 = vunpack.c.h.b16 %v491
    %v974 = vunpack.c.l.b16 %v492
    %v975 = vunpack.c.h.b16 %v492
    %v976 = vunpack.c.l.b16 %v493
    %v977 = vunpack.c.h.b16 %v493
    %v978 = vunpack.c.l.b16 %v494
    %v979 = vunpack.c.h.b16 %v494
    %v980 = vunpack.c.l.b16 %v495
    %v981 = vunpack.c.h.b16 %v495
    %v982 = vunpack.c.l.b16 %v496
    %v983 = vunpack.c.h.b16 %v496
    %v984 = vunpack.c.l.b16 %v497
    %v985 = vunpack.c.h.b16 %v497
    %v986 = vunpack.c.l.b16 %v498
    %v987 = vunpack.c.h.b16 %v498
    %v988 = vunpack.c.l.b16 %v499
    %v989 = vunpack.c.h.b16 %v499
    %v990 = vunpack.c.l.b16 %v500
    %v991 = vunpack.c.h.b16 %v500
    %v992 = vunpack.c.l.b16 %v501
    %v993 = vunpack.c.h.b16 %v501
    %v994 = vunpack.c.l.b16 %v502
    %v995 = vunpack.c.h.b16 %v502
    %v996 = vunpack.c.l.b16 %v503
    %v997 = vunpack.c.h.b16 %v503
    %v998 = vunpack.c.l.b16 %v504
    %v999 = vunpack.c.h.b16 %v504
    %v1000 = vunpack.c.l.b16 %v505
    %v1001 = vunpack.c.h.b16 %v505
    %v1002 = vunpack.c.l.b16 %v506
    %v1003 = vunpack.c.h.b16 %v506
    %v1004 = vunpack.c.l.b16 %v507
    %v1005 = vunpack.c.h.b16 %v507
    %v1006 = vunpack.c.l.b16 %v508
    %v1007 = vunpack.c.h.b16 %v508
    %v1008 = vunpack.c.l.b16 %v509
    %v1009 = vunpack.c.h.b16 %v509
    %v1010 = vunpack.c.l.b16 %v510
    %v1011 = vunpack.c.h.b16 %v510
    %v1012 = vunpack.c.l.b16 %v511
    %v1013 = vunpack.c.h.b16 %v511
    %v1014 = vunpack.c.l.b16 %v512
    %v1015 = vunpack.c.h.b16 %v512
    %v1016 = vunpack.c.l.b16 %v513
    %v1017 = vunpack.c.h.b16 %v513
    %v1018 = vpack.c.b16 %v940, %v938
    %v1019 = vpack.c.b16 %v941, %v939
    %v1020 = vpack.c.b16 %v944, %v942
    %v1021 = vpack.c.b16 %v945, %v943
    %v1022 = vpack.c.b16 %v948, %v946
    %v1023 = vpack.c.b16 %v949, %v947
    %v1024 = vpack.c.b16 %v952, %v950
    %v1025 = vpack.c.b16 %v953, %v951
    %v1026 = vpack.c.b16 %v956, %v954
    %v1027 = vpack.c.b16 %v957, %v955
    %v1028 = vpack.c.b16 %v960, %v958
    %v1029 = vpack.c.b16 %v961, %v959
    %v1030 = vpack.c.b16 %v964, %v962
    %v1031 = vpack.c.b16 %v965, %v963
    %v1032 = vpack.c.b16 %v968, %v966
    %v1033 = vpack.c.b16 %v969, %v967
    %v1034 = vpack.c.b16 %v972, %v970
    %v1035 = vpack.c.b16 %v973, %v971
    %v1036 = vpack.c.b16 %v976, %v974
    %v1037 = vpack.c.b16 %v977, %v975
    %v1038 = vpack.c.b16 %v980, %v978
    %v1039 = vpack.c.b16 %v981, %v979
    %v1040 = vpack.c.b16 %v984, %v982
    %v1041 = vpack.c.b16 %v985, %v983
    %v1042 = vpack.c.b16 %v988, %v986
    %v1043 = vpack.c.b16 %v989, %v987
    %v1044 = vpack.c.b16 %v992, %v990
    %v1045 = vpack.c.b16 %v993, %v991
    %v1046 = vpack.c.b16 %v996, %v994
    %v1047 = vpack.c.b16 %v997, %v995
    %v1048 = vpack.c.b16 %v1000, %v998
    %v1049 = vpack.c.b16 %v1001, %v999
    %v1050 = vpack.c.b16 %v1004, %v1002
    %v1051 = vpack.c.b16 %v1005, %v1003
    %v1052 = vpack.c.b16 %v1008, %v1006
    %v1053 = vpack.c.b16 %v1009, %v1007
    %v1054 = vpack.c.b16 %v1012, %v1010
    %v1055 = vpack.c.b16 %v1013, %v1011
    %v1056 = vpack.c.b16 %v1016, %v1014
    %v1057 = vpack.c.b16 %v1017, %v1015
    %v1099 = vsel %vm435, %v516, 0
    %1101 = vmatprep.subr.bf16.mxu0 %v1033
    %1102 = vmatpush1.bf16.msra.mxu0 %v1032
    %1103 = vmatprep.subr.bf16.mxu0 %v1031
    %1104 = vmatpush1.bf16.msra.mxu0 %v1030
    %1105 = vmatprep.subr.bf16.mxu0 %v1029
    %1106 = vmatpush1.bf16.msra.mxu0 %v1028
    %1107 = vmatprep.subr.bf16.mxu0 %v1027
    %1108 = vmatpush1.bf16.msra.mxu0 %v1026
    %1109 = vmatprep.subr.bf16.mxu0 %v1025
    %1110 = vmatpush1.bf16.msra.mxu0 %v1024
    %1111 = vmatprep.subr.bf16.mxu0 %v1023
    %1112 = vmatpush1.bf16.msra.mxu0 %v1022
    %1113 = vmatprep.subr.bf16.mxu0 %v1021
    %1114 = vmatpush1.bf16.msra.mxu0 %v1020
    %1115 = vmatprep.subr.bf16.mxu0 %v1019
    %1116 = vmatpush1.bf16.msra.mxu0 %v1018
    %1117 = vmatprep.subr.bf16.mxu0 %v1049
    %1118 = vmatpush2.bf16.msra.mxu0 %v1048
    %1119 = vmatprep.subr.bf16.mxu0 %v1047
    %1120 = vmatpush2.bf16.msra.mxu0 %v1046
    %1121 = vmatprep.subr.bf16.mxu0 %v1045
    %1122 = vmatpush2.bf16.msra.mxu0 %v1044
    %1123 = vmatprep.subr.bf16.mxu0 %v1043
    %1124 = vmatpush2.bf16.msra.mxu0 %v1042
    %1125 = vmatprep.subr.bf16.mxu0 %v1041
    %1126 = vmatpush2.bf16.msra.mxu0 %v1040
    %1127 = vmatprep.subr.bf16.mxu0 %v1039
    %1128 = vmatpush2.bf16.msra.mxu0 %v1038
    %1129 = vmatprep.subr.bf16.mxu0 %v1037
    %1130 = vmatpush2.bf16.msra.mxu0 %v1036
    %1131 = vmatprep.subr.bf16.mxu0 %v1035
    %1132 = vmatpush2.bf16.msra.mxu0 %v1034
    %1133 = vmatprep.mubr.bf16.mxu0 %v515
    %1134 = vmatmul.mubr.bf16.gmra.mxu0 %v514
    %v1135 = vpop.f32.mrf.mxu0
    %v1136 = vadd.f32 %v890, %v1135
    %v1137 = vpop.f32.mrf.mxu0
    %v1138 = vadd.f32 %v892, %v1137
    %v1139 = vpop.f32.mrf.mxu0
    %v1140 = vadd.f32 %v894, %v1139
    %v1141 = vpop.f32.mrf.mxu0
    %v1142 = vadd.f32 %v896, %v1141
    %1143 = vdwg.mxu0
    %1144 = vmatprep.subr.bf16.mxu0 0
    %1145 = vmatpush1.bf16.msra.mxu0 0
    %1146 = vmatprep.subr.bf16.mxu0 0
    %1147 = vmatpush1.bf16.msra.mxu0 0
    %1148 = vmatprep.subr.bf16.mxu0 0
    %1149 = vmatpush1.bf16.msra.mxu0 0
    %1150 = vmatprep.subr.bf16.mxu0 0
    %1151 = vmatpush1.bf16.msra.mxu0 0
    %1152 = vmatprep.subr.bf16.mxu0 %v1057
    %1153 = vmatpush1.bf16.msra.mxu0 %v1056
    %1154 = vmatprep.subr.bf16.mxu0 %v1055
    %1155 = vmatpush1.bf16.msra.mxu0 %v1054
    %1156 = vmatprep.subr.bf16.mxu0 %v1053
    %1157 = vmatpush1.bf16.msra.mxu0 %v1052
    %1158 = vmatprep.subr.bf16.mxu0 %v1051
    %1159 = vmatpush1.bf16.msra.mxu0 %v1050
    %1160 = vmatprep.subr.bf16.mxu0 0
    %1161 = vmatpush2.bf16.msra.mxu0 0
    %1162 = vmatprep.subr.bf16.mxu0 0
    %1163 = vmatpush2.bf16.msra.mxu0 0
    %1164 = vmatprep.subr.bf16.mxu0 0
    %1165 = vmatpush2.bf16.msra.mxu0 0
    %1166 = vmatprep.subr.bf16.mxu0 0
    %1167 = vmatpush2.bf16.msra.mxu0 0
    %1168 = vmatprep.subr.bf16.mxu0 0
    %1169 = vmatpush2.bf16.msra.mxu0 0
    %1170 = vmatprep.subr.bf16.mxu0 0
    %1171 = vmatpush2.bf16.msra.mxu0 0
    %1172 = vmatprep.subr.bf16.mxu0 0
    %1173 = vmatpush2.bf16.msra.mxu0 0
    %1174 = vmatprep.subr.bf16.mxu0 0
    %1175 = vmatpush2.bf16.msra.mxu0 0
    %1176 = vmatprep.mubr.bf16.mxu0 0
    %1177 = vmatmul.mubr.bf16.gmra.mxu0 %v1099
    %v1178 = vpop.f32.mrf.mxu0
    %v1179 = vadd.f32 %v1136, %v1178
    %v1180 = vpop.f32.mrf.mxu0
    %v1181 = vadd.f32 %v1138, %v1180
    %v1182 = vpop.f32.mrf.mxu0
    %v1183 = vadd.f32 %v1140, %v1182
    %v1184 = vpop.f32.mrf.mxu0
    %v1185 = vadd.f32 %v1142, %v1184
    %1186 = vdwg.mxu0
    %v1187 = vld [vmem:[#allocation3] sm:$0xfc]
    %v1188 = vld [vmem:[#allocation3 + $0x8] sm:$0xfc]
    %v1189 = vld [vmem:[#allocation3 + $0x10] sm:$0xfc]
    %v1190 = vld [vmem:[#allocation3 + $0x18] sm:$0x3]
    %v1191 = vld [vmem:[#allocation3 + $0x20] sm:$0x3]
    %v1192 = vld [vmem:[#allocation3 + $0x28] sm:$0x3]
    %v1193 = vld [vmem:[#allocation3 + $0x30] sm:$0xfc]
    %v1194 = vld [vmem:[#allocation3 + $0x38] sm:$0xfc]
    %v1195 = vld [vmem:[#allocation3 + $0x40] sm:$0xfc]
    %v1196 = vld [vmem:[#allocation3 + $0x48] sm:$0x3]
    %v1197 = vld [vmem:[#allocation3 + $0x50] sm:$0x3]
    %v1198 = vld [vmem:[#allocation3 + $0x58] sm:$0x3]
    %vm1211 = vcmask 1045504
    %v1212 = vrot.slane %v1187, 2
    %v1213 = vrot.slane %v1190, 2
    %v1214 = vsel %vm1211, %v1212, %v1213
    %v1215 = vrot.slane %v1188, 2
    %v1216 = vrot.slane %v1191, 2
    %v1217 = vsel %vm1211, %v1215, %v1216
    %v1218 = vrot.slane %v1189, 2
    %v1219 = vrot.slane %v1192, 2
    %v1220 = vsel %vm1211, %v1218, %v1219
    %v1221 = vrot.slane %v1193, 2
    %v1222 = vrot.slane %v1196, 2
    %v1223 = vsel %vm1211, %v1221, %v1222
    %v1224 = vrot.slane %v1194, 2
    %v1225 = vrot.slane %v1197, 2
    %v1226 = vsel %vm1211, %v1224, %v1225
    %v1227 = vrot.slane %v1195, 2
    %v1228 = vrot.slane %v1198, 2
    %v1229 = vsel %vm1211, %v1227, %v1228
    %s1236 = scalar_lea.vmem [#allocation10], 640
    %v1237 = vld [vmem:[%s1236] sm:$0xff]
    %v1238 = vld [vmem:[%s1236 + $0x8] sm:$0xff]
    %v1239 = vld [vmem:[%s1236 + $0x10] sm:$0xff]
    %v1240 = vld [vmem:[%s1236 + $0x18] sm:$0xff]
    %v1241 = vld [vmem:[%s1236 + $0x20] sm:$0xff]
    %v1242 = vld [vmem:[%s1236 + $0x28] sm:$0xff]
    %v1243 = vld [vmem:[%s1236 + $0x30] sm:$0xff]
    %v1244 = vld [vmem:[%s1236 + $0x38] sm:$0xff]
    %v1245 = vld [vmem:[%s1236 + $0x40] sm:$0xff]
    %v1246 = vld [vmem:[%s1236 + $0x48] sm:$0xff]
    %v1247 = vld [vmem:[%s1236 + $0x50] sm:$0xff]
    %v1248 = vld [vmem:[%s1236 + $0x58] sm:$0xff]
    %v1249 = vld [vmem:[%s1236 + $0x60] sm:$0xff]
    %v1250 = vld [vmem:[%s1236 + $0x68] sm:$0xff]
    %v1251 = vld [vmem:[%s1236 + $0x70] sm:$0xff]
    %v1252 = vld [vmem:[%s1236 + $0x78] sm:$0xff]
    %v1253 = vld [vmem:[%s1236 + $0x80] sm:$0xff]
    %v1254 = vld [vmem:[%s1236 + $0x88] sm:$0xff]
    %v1255 = vld [vmem:[%s1236 + $0x90] sm:$0xff]
    %v1256 = vld [vmem:[%s1236 + $0x98] sm:$0xff]
    %v1257 = vld [vmem:[%s1236 + $0xa0] sm:$0xff]
    %v1258 = vld [vmem:[%s1236 + $0xa8] sm:$0xff]
    %v1259 = vld [vmem:[%s1236 + $0xb0] sm:$0xff]
    %v1260 = vld [vmem:[%s1236 + $0xb8] sm:$0xff]
    %v1261 = vld [vmem:[%s1236 + $0xc0] sm:$0xff]
    %v1262 = vld [vmem:[%s1236 + $0xc8] sm:$0xff]
    %v1263 = vld [vmem:[%s1236 + $0xd0] sm:$0xff]
    %v1264 = vld [vmem:[%s1236 + $0xd8] sm:$0xff]
    %v1265 = vld [vmem:[%s1236 + $0xe0] sm:$0xff]
    %v1266 = vld [vmem:[%s1236 + $0xe8] sm:$0xff]
    %v1267 = vld [vmem:[%s1236 + $0xf0] sm:$0xff]
    %v1268 = vld [vmem:[%s1236 + $0xf8] sm:$0xff]
    %v1269 = vld [vmem:[%s1236 + $0x100] sm:$0xff]
    %v1270 = vld [vmem:[%s1236 + $0x108] sm:$0xff]
    %v1271 = vld [vmem:[%s1236 + $0x110] sm:$0xff]
    %v1272 = vld [vmem:[%s1236 + $0x118] sm:$0xff]
    %v1273 = vld [vmem:[%s1236 + $0x120] sm:$0xff]
    %v1274 = vld [vmem:[%s1236 + $0x128] sm:$0xff]
    %v1275 = vld [vmem:[%s1236 + $0x130] sm:$0xff]
    %v1276 = vld [vmem:[%s1236 + $0x138] sm:$0xff]
    %v1277 = vpack.c.bf16 %v1223, %v1214
    %v1278 = vpack.c.bf16 %v1226, %v1217
    %v1279 = vpack.c.bf16 %v1229, %v1220
    %v1320 = vunpack.c.l.b16 %v1237
    %v1321 = vunpack.c.h.b16 %v1237
    %v1322 = vunpack.c.l.b16 %v1238
    %v1323 = vunpack.c.h.b16 %v1238
    %v1324 = vunpack.c.l.b16 %v1239
    %v1325 = vunpack.c.h.b16 %v1239
    %v1326 = vunpack.c.l.b16 %v1240
    %v1327 = vunpack.c.h.b16 %v1240
    %v1328 = vunpack.c.l.b16 %v1241
    %v1329 = vunpack.c.h.b16 %v1241
    %v1330 = vunpack.c.l.b16 %v1242
    %v1331 = vunpack.c.h.b16 %v1242
    %v1332 = vunpack.c.l.b16 %v1243
    %v1333 = vunpack.c.h.b16 %v1243
    %v1334 = vunpack.c.l.b16 %v1244
    %v1335 = vunpack.c.h.b16 %v1244
    %v1336 = vunpack.c.l.b16 %v1245
    %v1337 = vunpack.c.h.b16 %v1245
    %v1338 = vunpack.c.l.b16 %v1246
    %v1339 = vunpack.c.h.b16 %v1246
    %v1340 = vunpack.c.l.b16 %v1247
    %v1341 = vunpack.c.h.b16 %v1247
    %v1342 = vunpack.c.l.b16 %v1248
    %v1343 = vunpack.c.h.b16 %v1248
    %v1344 = vunpack.c.l.b16 %v1249
    %v1345 = vunpack.c.h.b16 %v1249
    %v1346 = vunpack.c.l.b16 %v1250
    %v1347 = vunpack.c.h.b16 %v1250
    %v1348 = vunpack.c.l.b16 %v1251
    %v1349 = vunpack.c.h.b16 %v1251
    %v1350 = vunpack.c.l.b16 %v1252
    %v1351 = vunpack.c.h.b16 %v1252
    %v1352 = vunpack.c.l.b16 %v1253
    %v1353 = vunpack.c.h.b16 %v1253
    %v1354 = vunpack.c.l.b16 %v1254
    %v1355 = vunpack.c.h.b16 %v1254
    %v1356 = vunpack.c.l.b16 %v1255
    %v1357 = vunpack.c.h.b16 %v1255
    %v1358 = vunpack.c.l.b16 %v1256
    %v1359 = vunpack.c.h.b16 %v1256
    %v1360 = vunpack.c.l.b16 %v1257
    %v1361 = vunpack.c.h.b16 %v1257
    %v1362 = vunpack.c.l.b16 %v1258
    %v1363 = vunpack.c.h.b16 %v1258
    %v1364 = vunpack.c.l.b16 %v1259
    %v1365 = vunpack.c.h.b16 %v1259
    %v1366 = vunpack.c.l.b16 %v1260
    %v1367 = vunpack.c.h.b16 %v1260
    %v1368 = vunpack.c.l.b16 %v1261
    %v1369 = vunpack.c.h.b16 %v1261
    %v1370 = vunpack.c.l.b16 %v1262
    %v1371 = vunpack.c.h.b16 %v1262
    %v1372 = vunpack.c.l.b16 %v1263
    %v1373 = vunpack.c.h.b16 %v1263
    %v1374 = vunpack.c.l.b16 %v1264
    %v1375 = vunpack.c.h.b16 %v1264
    %v1376 = vunpack.c.l.b16 %v1265
    %v1377 = vunpack.c.h.b16 %v1265
    %v1378 = vunpack.c.l.b16 %v1266
    %v1379 = vunpack.c.h.b16 %v1266
    %v1380 = vunpack.c.l.b16 %v1267
    %v1381 = vunpack.c.h.b16 %v1267
    %v1382 = vunpack.c.l.b16 %v1268
    %v1383 = vunpack.c.h.b16 %v1268
    %v1384 = vunpack.c.l.b16 %v1269
    %v1385 = vunpack.c.h.b16 %v1269
    %v1386 = vunpack.c.l.b16 %v1270
    %v1387 = vunpack.c.h.b16 %v1270
    %v1388 = vunpack.c.l.b16 %v1271
    %v1389 = vunpack.c.h.b16 %v1271
    %v1390 = vunpack.c.l.b16 %v1272
    %v1391 = vunpack.c.h.b16 %v1272
    %v1392 = vunpack.c.l.b16 %v1273
    %v1393 = vunpack.c.h.b16 %v1273
    %v1394 = vunpack.c.l.b16 %v1274
    %v1395 = vunpack.c.h.b16 %v1274
    %v1396 = vunpack.c.l.b16 %v1275
    %v1397 = vunpack.c.h.b16 %v1275
    %v1398 = vunpack.c.l.b16 %v1276
    %v1399 = vunpack.c.h.b16 %v1276
    %v1400 = vpack.c.b16 %v1322, %v1320
    %v1401 = vpack.c.b16 %v1323, %v1321
    %v1402 = vpack.c.b16 %v1326, %v1324
    %v1403 = vpack.c.b16 %v1327, %v1325
    %v1404 = vpack.c.b16 %v1330, %v1328
    %v1405 = vpack.c.b16 %v1331, %v1329
    %v1406 = vpack.c.b16 %v1334, %v1332
    %v1407 = vpack.c.b16 %v1335, %v1333
    %v1408 = vpack.c.b16 %v1338, %v1336
    %v1409 = vpack.c.b16 %v1339, %v1337
    %v1410 = vpack.c.b16 %v1342, %v1340
    %v1411 = vpack.c.b16 %v1343, %v1341
    %v1412 = vpack.c.b16 %v1346, %v1344
    %v1413 = vpack.c.b16 %v1347, %v1345
    %v1414 = vpack.c.b16 %v1350, %v1348
    %v1415 = vpack.c.b16 %v1351, %v1349
    %v1416 = vpack.c.b16 %v1354, %v1352
    %v1417 = vpack.c.b16 %v1355, %v1353
    %v1418 = vpack.c.b16 %v1358, %v1356
    %v1419 = vpack.c.b16 %v1359, %v1357
    %v1420 = vpack.c.b16 %v1362, %v1360
    %v1421 = vpack.c.b16 %v1363, %v1361
    %v1422 = vpack.c.b16 %v1366, %v1364
    %v1423 = vpack.c.b16 %v1367, %v1365
    %v1424 = vpack.c.b16 %v1370, %v1368
    %v1425 = vpack.c.b16 %v1371, %v1369
    %v1426 = vpack.c.b16 %v1374, %v1372
    %v1427 = vpack.c.b16 %v1375, %v1373
    %v1428 = vpack.c.b16 %v1378, %v1376
    %v1429 = vpack.c.b16 %v1379, %v1377
    %v1430 = vpack.c.b16 %v1382, %v1380
    %v1431 = vpack.c.b16 %v1383, %v1381
    %v1432 = vpack.c.b16 %v1386, %v1384
    %v1433 = vpack.c.b16 %v1387, %v1385
    %v1434 = vpack.c.b16 %v1390, %v1388
    %v1435 = vpack.c.b16 %v1391, %v1389
    %v1436 = vpack.c.b16 %v1394, %v1392
    %v1437 = vpack.c.b16 %v1395, %v1393
    %v1438 = vpack.c.b16 %v1398, %v1396
    %v1439 = vpack.c.b16 %v1399, %v1397
    %v1481 = vsel %vm435, %v1279, 0
    %1483 = vmatprep.subr.bf16.mxu0 %v1415
    %1484 = vmatpush1.bf16.msra.mxu0 %v1414
    %1485 = vmatprep.subr.bf16.mxu0 %v1413
    %1486 = vmatpush1.bf16.msra.mxu0 %v1412
    %1487 = vmatprep.subr.bf16.mxu0 %v1411
    %1488 = vmatpush1.bf16.msra.mxu0 %v1410
    %1489 = vmatprep.subr.bf16.mxu0 %v1409
    %1490 = vmatpush1.bf16.msra.mxu0 %v1408
    %1491 = vmatprep.subr.bf16.mxu0 %v1407
    %1492 = vmatpush1.bf16.msra.mxu0 %v1406
    %1493 = vmatprep.subr.bf16.mxu0 %v1405
    %1494 = vmatpush1.bf16.msra.mxu0 %v1404
    %1495 = vmatprep.subr.bf16.mxu0 %v1403
    %1496 = vmatpush1.bf16.msra.mxu0 %v1402
    %1497 = vmatprep.subr.bf16.mxu0 %v1401
    %1498 = vmatpush1.bf16.msra.mxu0 %v1400
    %1499 = vmatprep.subr.bf16.mxu0 %v1431
    %1500 = vmatpush2.bf16.msra.mxu0 %v1430
    %1501 = vmatprep.subr.bf16.mxu0 %v1429
    %1502 = vmatpush2.bf16.msra.mxu0 %v1428
    %1503 = vmatprep.subr.bf16.mxu0 %v1427
    %1504 = vmatpush2.bf16.msra.mxu0 %v1426
    %1505 = vmatprep.subr.bf16.mxu0 %v1425
    %1506 = vmatpush2.bf16.msra.mxu0 %v1424
    %1507 = vmatprep.subr.bf16.mxu0 %v1423
    %1508 = vmatpush2.bf16.msra.mxu0 %v1422
    %1509 = vmatprep.subr.bf16.mxu0 %v1421
    %1510 = vmatpush2.bf16.msra.mxu0 %v1420
    %1511 = vmatprep.subr.bf16.mxu0 %v1419
    %1512 = vmatpush2.bf16.msra.mxu0 %v1418
    %1513 = vmatprep.subr.bf16.mxu0 %v1417
    %1514 = vmatpush2.bf16.msra.mxu0 %v1416
    %1515 = vmatprep.mubr.bf16.mxu0 %v1278
    %1516 = vmatmul.mubr.bf16.gmra.mxu0 %v1277
    %v1517 = vpop.f32.mrf.mxu0
    %v1518 = vadd.f32 0.0, %v1517
    %v1519 = vpop.f32.mrf.mxu0
    %v1520 = vadd.f32 0.0, %v1519
    %v1521 = vpop.f32.mrf.mxu0
    %v1522 = vadd.f32 0.0, %v1521
    %v1523 = vpop.f32.mrf.mxu0
    %v1524 = vadd.f32 0.0, %v1523
    %1525 = vdwg.mxu0
    %1526 = vmatprep.subr.bf16.mxu0 0
    %1527 = vmatpush1.bf16.msra.mxu0 0
    %1528 = vmatprep.subr.bf16.mxu0 0
    %1529 = vmatpush1.bf16.msra.mxu0 0
    %1530 = vmatprep.subr.bf16.mxu0 0
    %1531 = vmatpush1.bf16.msra.mxu0 0
    %1532 = vmatprep.subr.bf16.mxu0 0
    %1533 = vmatpush1.bf16.msra.mxu0 0
    %1534 = vmatprep.subr.bf16.mxu0 %v1439
    %1535 = vmatpush1.bf16.msra.mxu0 %v1438
    %1536 = vmatprep.subr.bf16.mxu0 %v1437
    %1537 = vmatpush1.bf16.msra.mxu0 %v1436
    %1538 = vmatprep.subr.bf16.mxu0 %v1435
    %1539 = vmatpush1.bf16.msra.mxu0 %v1434
    %1540 = vmatprep.subr.bf16.mxu0 %v1433
    %1541 = vmatpush1.bf16.msra.mxu0 %v1432
    %1542 = vmatprep.subr.bf16.mxu0 0
    %1543 = vmatpush2.bf16.msra.mxu0 0
    %1544 = vmatprep.subr.bf16.mxu0 0
    %1545 = vmatpush2.bf16.msra.mxu0 0
    %1546 = vmatprep.subr.bf16.mxu0 0
    %1547 = vmatpush2.bf16.msra.mxu0 0
    %1548 = vmatprep.subr.bf16.mxu0 0
    %1549 = vmatpush2.bf16.msra.mxu0 0
    %1550 = vmatprep.subr.bf16.mxu0 0
    %1551 = vmatpush2.bf16.msra.mxu0 0
    %1552 = vmatprep.subr.bf16.mxu0 0
    %1553 = vmatpush2.bf16.msra.mxu0 0
    %1554 = vmatprep.subr.bf16.mxu0 0
    %1555 = vmatpush2.bf16.msra.mxu0 0
    %1556 = vmatprep.subr.bf16.mxu0 0
    %1557 = vmatpush2.bf16.msra.mxu0 0
    %1558 = vmatprep.mubr.bf16.mxu0 0
    %1559 = vmatmul.mubr.bf16.gmra.mxu0 %v1481
    %v1560 = vpop.f32.mrf.mxu0
    %v1561 = vadd.f32 %v1518, %v1560
    %v1562 = vpop.f32.mrf.mxu0
    %v1563 = vadd.f32 %v1520, %v1562
    %v1564 = vpop.f32.mrf.mxu0
    %v1565 = vadd.f32 %v1522, %v1564
    %v1566 = vpop.f32.mrf.mxu0
    %v1567 = vadd.f32 %v1524, %v1566
    %1568 = vdwg.mxu0
    %v1569 = vadd.f32 %v1179, %v1561
    %v1570 = vadd.f32 %v1181, %v1563
    %v1571 = vadd.f32 %v1183, %v1565
    %v1572 = vadd.f32 %v1185, %v1567
    %v1574 = vlaneseq
    %v1575 = vshrl.u32 %v1574, 7
    %v1576 = vsub.s32 0, %v1575
    %v1577 = vrot.slane %v467, %v1576
    %v1578 = vlaneseq
    %v1579 = vshrl.u32 %v1578, 7
    %v1580 = vsub.s32 1, %v1579
    %v1581 = vrot.slane %v467, %v1580
    %v1584 = vadd.f32 %v1569, %v1577
    %v1585 = vadd.f32 %v1570, %v1581
    %v1586 = vadd.f32 %v1571, %v1577
    %v1587 = vadd.f32 %v1572, %v1581
    %v1588 = vmax.f32 %v1584, 0.0
    %v1589 = vmax.f32 %v1585, 0.0
    %v1590 = vmax.f32 %v1586, 0.0
    %v1591 = vmax.f32 %v1587, 0.0
    %v1596 = vrot.slane %v1588, 7
    %v1597 = vrot.slane %v1589, 7
    %v1598 = vrot.slane %v1590, 7
    %v1599 = vrot.slane %v1591, 7
    %1604 = vst [vmem:[#allocation3] sm:$0xfe] %v1596
    %1605 = vst [vmem:[#allocation3 + $0x8] sm:$0xfe] %v1597
    %1606 = vst [vmem:[#allocation3 + $0x18] sm:$0x1] %v1596
    %1607 = vst [vmem:[#allocation3 + $0x20] sm:$0x1] %v1597
    %1608 = vst [vmem:[#allocation3 + $0x30] sm:$0xfe] %v1598
    %1609 = vst [vmem:[#allocation3 + $0x38] sm:$0xfe] %v1599
    %1610 = vst [vmem:[#allocation3 + $0x48] sm:$0x1] %v1598
    %1611 = vst [vmem:[#allocation3 + $0x50] sm:$0x1] %v1599
    %s1612 = scalar_lea.vmem [#allocation11], 2
    %v1613 = vld [vmem:[%s1612] sm:$0x3]
    %v1614 = vld [vmem:[#allocation3] sm:$0xff]
    %v1615 = vld [vmem:[#allocation3 + $0x8] sm:$0xff]
    %v1616 = vld [vmem:[#allocation3 + $0x10] sm:$0xff]
    %v1617 = vld [vmem:[#allocation3 + $0x30] sm:$0xff]
    %v1618 = vld [vmem:[#allocation3 + $0x38] sm:$0xff]
    %v1619 = vld [vmem:[#allocation3 + $0x40] sm:$0xff]
    %s1620 = scalar_lea.vmem [#allocation10], 960
    %v1621 = vld [vmem:[%s1620] sm:$0xff]
    %v1622 = vld [vmem:[%s1620 + $0x8] sm:$0xff]
    %v1623 = vld [vmem:[%s1620 + $0x10] sm:$0xff]
    %v1624 = vld [vmem:[%s1620 + $0x18] sm:$0xff]
    %v1625 = vld [vmem:[%s1620 + $0x20] sm:$0xff]
    %v1626 = vld [vmem:[%s1620 + $0x28] sm:$0xff]
    %v1627 = vld [vmem:[%s1620 + $0x30] sm:$0xff]
    %v1628 = vld [vmem:[%s1620 + $0x38] sm:$0xff]
    %v1629 = vld [vmem:[%s1620 + $0x40] sm:$0xff]
    %v1630 = vld [vmem:[%s1620 + $0x48] sm:$0xff]
    %v1631 = vld [vmem:[%s1620 + $0x50] sm:$0xff]
    %v1632 = vld [vmem:[%s1620 + $0x58] sm:$0xff]
    %v1633 = vld [vmem:[%s1620 + $0x60] sm:$0xff]
    %v1634 = vld [vmem:[%s1620 + $0x68] sm:$0xff]
    %v1635 = vld [vmem:[%s1620 + $0x70] sm:$0xff]
    %v1636 = vld [vmem:[%s1620 + $0x78] sm:$0xff]
    %v1637 = vld [vmem:[%s1620 + $0x80] sm:$0xff]
    %v1638 = vld [vmem:[%s1620 + $0x88] sm:$0xff]
    %v1639 = vld [vmem:[%s1620 + $0x90] sm:$0xff]
    %v1640 = vld [vmem:[%s1620 + $0x98] sm:$0xff]
    %v1641 = vld [vmem:[%s1620 + $0xa0] sm:$0xff]
    %v1642 = vld [vmem:[%s1620 + $0xa8] sm:$0xff]
    %v1643 = vld [vmem:[%s1620 + $0xb0] sm:$0xff]
    %v1644 = vld [vmem:[%s1620 + $0xb8] sm:$0xff]
    %v1645 = vld [vmem:[%s1620 + $0xc0] sm:$0xff]
    %v1646 = vld [vmem:[%s1620 + $0xc8] sm:$0xff]
    %v1647 = vld [vmem:[%s1620 + $0xd0] sm:$0xff]
    %v1648 = vld [vmem:[%s1620 + $0xd8] sm:$0xff]
    %v1649 = vld [vmem:[%s1620 + $0xe0] sm:$0xff]
    %v1650 = vld [vmem:[%s1620 + $0xe8] sm:$0xff]
    %v1651 = vld [vmem:[%s1620 + $0xf0] sm:$0xff]
    %v1652 = vld [vmem:[%s1620 + $0xf8] sm:$0xff]
    %v1653 = vld [vmem:[%s1620 + $0x100] sm:$0xff]
    %v1654 = vld [vmem:[%s1620 + $0x108] sm:$0xff]
    %v1655 = vld [vmem:[%s1620 + $0x110] sm:$0xff]
    %v1656 = vld [vmem:[%s1620 + $0x118] sm:$0xff]
    %v1657 = vld [vmem:[%s1620 + $0x120] sm:$0xff]
    %v1658 = vld [vmem:[%s1620 + $0x128] sm:$0xff]
    %v1659 = vld [vmem:[%s1620 + $0x130] sm:$0xff]
    %v1660 = vld [vmem:[%s1620 + $0x138] sm:$0xff]
    %v1661 = vpack.c.bf16 %v1617, %v1614
    %v1662 = vpack.c.bf16 %v1618, %v1615
    %v1663 = vpack.c.bf16 %v1619, %v1616
    %v1664 = vld [vmem:[#allocation3] sm:$0xfe]
    %v1665 = vld [vmem:[#allocation3 + $0x8] sm:$0xfe]
    %v1666 = vld [vmem:[#allocation3 + $0x10] sm:$0xfe]
    %v1667 = vld [vmem:[#allocation3 + $0x18] sm:$0x1]
    %v1668 = vld [vmem:[#allocation3 + $0x20] sm:$0x1]
    %v1669 = vld [vmem:[#allocation3 + $0x28] sm:$0x1]
    %v1670 = vld [vmem:[#allocation3 + $0x30] sm:$0xfe]
    %v1671 = vld [vmem:[#allocation3 + $0x38] sm:$0xfe]
    %v1672 = vld [vmem:[#allocation3 + $0x40] sm:$0xfe]
    %v1673 = vld [vmem:[#allocation3 + $0x48] sm:$0x1]
    %v1674 = vld [vmem:[#allocation3 + $0x50] sm:$0x1]
    %v1675 = vld [vmem:[#allocation3 + $0x58] sm:$0x1]
    %v1688 = vrot.slane %v1664, 1
    %v1689 = vrot.slane %v1667, 1
    %v1690 = vsel %vm212, %v1688, %v1689
    %v1691 = vrot.slane %v1665, 1
    %v1692 = vrot.slane %v1668, 1
    %v1693 = vsel %vm212, %v1691, %v1692
    %v1694 = vrot.slane %v1666, 1
    %v1695 = vrot.slane %v1669, 1
    %v1696 = vsel %vm212, %v1694, %v1695
    %v1697 = vrot.slane %v1670, 1
    %v1698 = vrot.slane %v1673, 1
    %v1699 = vsel %vm212, %v1697, %v1698
    %v1700 = vrot.slane %v1671, 1
    %v1701 = vrot.slane %v1674, 1
    %v1702 = vsel %vm212, %v1700, %v1701
    %v1703 = vrot.slane %v1672, 1
    %v1704 = vrot.slane %v1675, 1
    %v1705 = vsel %vm212, %v1703, %v1704
    %s1712 = scalar_lea.vmem [#allocation10], 1280
    %v1713 = vld [vmem:[%s1712] sm:$0xff]
    %v1714 = vld [vmem:[%s1712 + $0x8] sm:$0xff]
    %v1715 = vld [vmem:[%s1712 + $0x10] sm:$0xff]
    %v1716 = vld [vmem:[%s1712 + $0x18] sm:$0xff]
    %v1717 = vld [vmem:[%s1712 + $0x20] sm:$0xff]
    %v1718 = vld [vmem:[%s1712 + $0x28] sm:$0xff]
    %v1719 = vld [vmem:[%s1712 + $0x30] sm:$0xff]
    %v1720 = vld [vmem:[%s1712 + $0x38] sm:$0xff]
    %v1721 = vld [vmem:[%s1712 + $0x40] sm:$0xff]
    %v1722 = vld [vmem:[%s1712 + $0x48] sm:$0xff]
    %v1723 = vld [vmem:[%s1712 + $0x50] sm:$0xff]
    %v1724 = vld [vmem:[%s1712 + $0x58] sm:$0xff]
    %v1725 = vld [vmem:[%s1712 + $0x60] sm:$0xff]
    %v1726 = vld [vmem:[%s1712 + $0x68] sm:$0xff]
    %v1727 = vld [vmem:[%s1712 + $0x70] sm:$0xff]
    %v1728 = vld [vmem:[%s1712 + $0x78] sm:$0xff]
    %v1729 = vld [vmem:[%s1712 + $0x80] sm:$0xff]
    %v1730 = vld [vmem:[%s1712 + $0x88] sm:$0xff]
    %v1731 = vld [vmem:[%s1712 + $0x90] sm:$0xff]
    %v1732 = vld [vmem:[%s1712 + $0x98] sm:$0xff]
    %v1733 = vld [vmem:[%s1712 + $0xa0] sm:$0xff]
    %v1734 = vld [vmem:[%s1712 + $0xa8] sm:$0xff]
    %v1735 = vld [vmem:[%s1712 + $0xb0] sm:$0xff]
    %v1736 = vld [vmem:[%s1712 + $0xb8] sm:$0xff]
    %v1737 = vld [vmem:[%s1712 + $0xc0] sm:$0xff]
    %v1738 = vld [vmem:[%s1712 + $0xc8] sm:$0xff]
    %v1739 = vld [vmem:[%s1712 + $0xd0] sm:$0xff]
    %v1740 = vld [vmem:[%s1712 + $0xd8] sm:$0xff]
    %v1741 = vld [vmem:[%s1712 + $0xe0] sm:$0xff]
    %v1742 = vld [vmem:[%s1712 + $0xe8] sm:$0xff]
    %v1743 = vld [vmem:[%s1712 + $0xf0] sm:$0xff]
    %v1744 = vld [vmem:[%s1712 + $0xf8] sm:$0xff]
    %v1745 = vld [vmem:[%s1712 + $0x100] sm:$0xff]
    %v1746 = vld [vmem:[%s1712 + $0x108] sm:$0xff]
    %v1747 = vld [vmem:[%s1712 + $0x110] sm:$0xff]
    %v1748 = vld [vmem:[%s1712 + $0x118] sm:$0xff]
    %v1749 = vld [vmem:[%s1712 + $0x120] sm:$0xff]
    %v1750 = vld [vmem:[%s1712 + $0x128] sm:$0xff]
    %v1751 = vld [vmem:[%s1712 + $0x130] sm:$0xff]
    %v1752 = vld [vmem:[%s1712 + $0x138] sm:$0xff]
    %v1753 = vpack.c.bf16 %v1699, %v1690
    %v1754 = vpack.c.bf16 %v1702, %v1693
    %v1755 = vpack.c.bf16 %v1705, %v1696
    %v1796 = vunpack.c.l.b16 %v1713
    %v1797 = vunpack.c.h.b16 %v1713
    %v1798 = vunpack.c.l.b16 %v1714
    %v1799 = vunpack.c.h.b16 %v1714
    %v1800 = vunpack.c.l.b16 %v1715
    %v1801 = vunpack.c.h.b16 %v1715
    %v1802 = vunpack.c.l.b16 %v1716
    %v1803 = vunpack.c.h.b16 %v1716
    %v1804 = vunpack.c.l.b16 %v1717
    %v1805 = vunpack.c.h.b16 %v1717
    %v1806 = vunpack.c.l.b16 %v1718
    %v1807 = vunpack.c.h.b16 %v1718
    %v1808 = vunpack.c.l.b16 %v1719
    %v1809 = vunpack.c.h.b16 %v1719
    %v1810 = vunpack.c.l.b16 %v1720
    %v1811 = vunpack.c.h.b16 %v1720
    %v1812 = vunpack.c.l.b16 %v1721
    %v1813 = vunpack.c.h.b16 %v1721
    %v1814 = vunpack.c.l.b16 %v1722
    %v1815 = vunpack.c.h.b16 %v1722
    %v1816 = vunpack.c.l.b16 %v1723
    %v1817 = vunpack.c.h.b16 %v1723
    %v1818 = vunpack.c.l.b16 %v1724
    %v1819 = vunpack.c.h.b16 %v1724
    %v1820 = vunpack.c.l.b16 %v1725
    %v1821 = vunpack.c.h.b16 %v1725
    %v1822 = vunpack.c.l.b16 %v1726
    %v1823 = vunpack.c.h.b16 %v1726
    %v1824 = vunpack.c.l.b16 %v1727
    %v1825 = vunpack.c.h.b16 %v1727
    %v1826 = vunpack.c.l.b16 %v1728
    %v1827 = vunpack.c.h.b16 %v1728
    %v1828 = vunpack.c.l.b16 %v1729
    %v1829 = vunpack.c.h.b16 %v1729
    %v1830 = vunpack.c.l.b16 %v1730
    %v1831 = vunpack.c.h.b16 %v1730
    %v1832 = vunpack.c.l.b16 %v1731
    %v1833 = vunpack.c.h.b16 %v1731
    %v1834 = vunpack.c.l.b16 %v1732
    %v1835 = vunpack.c.h.b16 %v1732
    %v1836 = vunpack.c.l.b16 %v1733
    %v1837 = vunpack.c.h.b16 %v1733
    %v1838 = vunpack.c.l.b16 %v1734
    %v1839 = vunpack.c.h.b16 %v1734
    %v1840 = vunpack.c.l.b16 %v1735
    %v1841 = vunpack.c.h.b16 %v1735
    %v1842 = vunpack.c.l.b16 %v1736
    %v1843 = vunpack.c.h.b16 %v1736
    %v1844 = vunpack.c.l.b16 %v1737
    %v1845 = vunpack.c.h.b16 %v1737
    %v1846 = vunpack.c.l.b16 %v1738
    %v1847 = vunpack.c.h.b16 %v1738
    %v1848 = vunpack.c.l.b16 %v1739
    %v1849 = vunpack.c.h.b16 %v1739
    %v1850 = vunpack.c.l.b16 %v1740
    %v1851 = vunpack.c.h.b16 %v1740
    %v1852 = vunpack.c.l.b16 %v1741
    %v1853 = vunpack.c.h.b16 %v1741
    %v1854 = vunpack.c.l.b16 %v1742
    %v1855 = vunpack.c.h.b16 %v1742
    %v1856 = vunpack.c.l.b16 %v1743
    %v1857 = vunpack.c.h.b16 %v1743
    %v1858 = vunpack.c.l.b16 %v1744
    %v1859 = vunpack.c.h.b16 %v1744
    %v1860 = vunpack.c.l.b16 %v1745
    %v1861 = vunpack.c.h.b16 %v1745
    %v1862 = vunpack.c.l.b16 %v1746
    %v1863 = vunpack.c.h.b16 %v1746
    %v1864 = vunpack.c.l.b16 %v1747
    %v1865 = vunpack.c.h.b16 %v1747
    %v1866 = vunpack.c.l.b16 %v1748
    %v1867 = vunpack.c.h.b16 %v1748
    %v1868 = vunpack.c.l.b16 %v1749
    %v1869 = vunpack.c.h.b16 %v1749
    %v1870 = vunpack.c.l.b16 %v1750
    %v1871 = vunpack.c.h.b16 %v1750
    %v1872 = vunpack.c.l.b16 %v1751
    %v1873 = vunpack.c.h.b16 %v1751
    %v1874 = vunpack.c.l.b16 %v1752
    %v1875 = vunpack.c.h.b16 %v1752
    %v1876 = vpack.c.b16 %v1798, %v1796
    %v1877 = vpack.c.b16 %v1799, %v1797
    %v1878 = vpack.c.b16 %v1802, %v1800
    %v1879 = vpack.c.b16 %v1803, %v1801
    %v1880 = vpack.c.b16 %v1806, %v1804
    %v1881 = vpack.c.b16 %v1807, %v1805
    %v1882 = vpack.c.b16 %v1810, %v1808
    %v1883 = vpack.c.b16 %v1811, %v1809
    %v1884 = vpack.c.b16 %v1814, %v1812
    %v1885 = vpack.c.b16 %v1815, %v1813
    %v1886 = vpack.c.b16 %v1818, %v1816
    %v1887 = vpack.c.b16 %v1819, %v1817
    %v1888 = vpack.c.b16 %v1822, %v1820
    %v1889 = vpack.c.b16 %v1823, %v1821
    %v1890 = vpack.c.b16 %v1826, %v1824
    %v1891 = vpack.c.b16 %v1827, %v1825
    %v1892 = vpack.c.b16 %v1830, %v1828
    %v1893 = vpack.c.b16 %v1831, %v1829
    %v1894 = vpack.c.b16 %v1834, %v1832
    %v1895 = vpack.c.b16 %v1835, %v1833
    %v1896 = vpack.c.b16 %v1838, %v1836
    %v1897 = vpack.c.b16 %v1839, %v1837
    %v1898 = vpack.c.b16 %v1842, %v1840
    %v1899 = vpack.c.b16 %v1843, %v1841
    %v1900 = vpack.c.b16 %v1846, %v1844
    %v1901 = vpack.c.b16 %v1847, %v1845
    %v1902 = vpack.c.b16 %v1850, %v1848
    %v1903 = vpack.c.b16 %v1851, %v1849
    %v1904 = vpack.c.b16 %v1854, %v1852
    %v1905 = vpack.c.b16 %v1855, %v1853
    %v1906 = vpack.c.b16 %v1858, %v1856
    %v1907 = vpack.c.b16 %v1859, %v1857
    %v1908 = vpack.c.b16 %v1862, %v1860
    %v1909 = vpack.c.b16 %v1863, %v1861
    %v1910 = vpack.c.b16 %v1866, %v1864
    %v1911 = vpack.c.b16 %v1867, %v1865
    %v1912 = vpack.c.b16 %v1870, %v1868
    %v1913 = vpack.c.b16 %v1871, %v1869
    %v1914 = vpack.c.b16 %v1874, %v1872
    %v1915 = vpack.c.b16 %v1875, %v1873
    %v1957 = vsel %vm435, %v1755, 0
    %1959 = vmatprep.subr.bf16.mxu0 %v1891
    %1960 = vmatpush1.bf16.msra.mxu0 %v1890
    %1961 = vmatprep.subr.bf16.mxu0 %v1889
    %1962 = vmatpush1.bf16.msra.mxu0 %v1888
    %1963 = vmatprep.subr.bf16.mxu0 %v1887
    %1964 = vmatpush1.bf16.msra.mxu0 %v1886
    %1965 = vmatprep.subr.bf16.mxu0 %v1885
    %1966 = vmatpush1.bf16.msra.mxu0 %v1884
    %1967 = vmatprep.subr.bf16.mxu0 %v1883
    %1968 = vmatpush1.bf16.msra.mxu0 %v1882
    %1969 = vmatprep.subr.bf16.mxu0 %v1881
    %1970 = vmatpush1.bf16.msra.mxu0 %v1880
    %1971 = vmatprep.subr.bf16.mxu0 %v1879
    %1972 = vmatpush1.bf16.msra.mxu0 %v1878
    %1973 = vmatprep.subr.bf16.mxu0 %v1877
    %1974 = vmatpush1.bf16.msra.mxu0 %v1876
    %1975 = vmatprep.subr.bf16.mxu0 %v1907
    %1976 = vmatpush2.bf16.msra.mxu0 %v1906
    %1977 = vmatprep.subr.bf16.mxu0 %v1905
    %1978 = vmatpush2.bf16.msra.mxu0 %v1904
    %1979 = vmatprep.subr.bf16.mxu0 %v1903
    %1980 = vmatpush2.bf16.msra.mxu0 %v1902
    %1981 = vmatprep.subr.bf16.mxu0 %v1901
    %1982 = vmatpush2.bf16.msra.mxu0 %v1900
    %1983 = vmatprep.subr.bf16.mxu0 %v1899
    %1984 = vmatpush2.bf16.msra.mxu0 %v1898
    %1985 = vmatprep.subr.bf16.mxu0 %v1897
    %1986 = vmatpush2.bf16.msra.mxu0 %v1896
    %1987 = vmatprep.subr.bf16.mxu0 %v1895
    %1988 = vmatpush2.bf16.msra.mxu0 %v1894
    %1989 = vmatprep.subr.bf16.mxu0 %v1893
    %1990 = vmatpush2.bf16.msra.mxu0 %v1892
    %1991 = vmatprep.mubr.bf16.mxu0 %v1754
    %1992 = vmatmul.mubr.bf16.gmra.mxu0 %v1753
    %v1993 = vpop.f32.mrf.mxu0
    %v1994 = vadd.f32 0.0, %v1993
    %v1995 = vpop.f32.mrf.mxu0
    %v1996 = vadd.f32 0.0, %v1995
    %v1997 = vpop.f32.mrf.mxu0
    %v1998 = vadd.f32 0.0, %v1997
    %v1999 = vpop.f32.mrf.mxu0
    %v2000 = vadd.f32 0.0, %v1999
    %2001 = vdwg.mxu0
    %2002 = vmatprep.subr.bf16.mxu0 0
    %2003 = vmatpush1.bf16.msra.mxu0 0
    %2004 = vmatprep.subr.bf16.mxu0 0
    %2005 = vmatpush1.bf16.msra.mxu0 0
    %2006 = vmatprep.subr.bf16.mxu0 0
    %2007 = vmatpush1.bf16.msra.mxu0 0
    %2008 = vmatprep.subr.bf16.mxu0 0
    %2009 = vmatpush1.bf16.msra.mxu0 0
    %2010 = vmatprep.subr.bf16.mxu0 %v1915
    %2011 = vmatpush1.bf16.msra.mxu0 %v1914
    %2012 = vmatprep.subr.bf16.mxu0 %v1913
    %2013 = vmatpush1.bf16.msra.mxu0 %v1912
    %2014 = vmatprep.subr.bf16.mxu0 %v1911
    %2015 = vmatpush1.bf16.msra.mxu0 %v1910
    %2016 = vmatprep.subr.bf16.mxu0 %v1909
    %2017 = vmatpush1.bf16.msra.mxu0 %v1908
    %2018 = vmatprep.subr.bf16.mxu0 0
    %2019 = vmatpush2.bf16.msra.mxu0 0
    %2020 = vmatprep.subr.bf16.mxu0 0
    %2021 = vmatpush2.bf16.msra.mxu0 0
    %2022 = vmatprep.subr.bf16.mxu0 0
    %2023 = vmatpush2.bf16.msra.mxu0 0
    %2024 = vmatprep.subr.bf16.mxu0 0
    %2025 = vmatpush2.bf16.msra.mxu0 0
    %2026 = vmatprep.subr.bf16.mxu0 0
    %2027 = vmatpush2.bf16.msra.mxu0 0
    %2028 = vmatprep.subr.bf16.mxu0 0
    %2029 = vmatpush2.bf16.msra.mxu0 0
    %2030 = vmatprep.subr.bf16.mxu0 0
    %2031 = vmatpush2.bf16.msra.mxu0 0
    %2032 = vmatprep.subr.bf16.mxu0 0
    %2033 = vmatpush2.bf16.msra.mxu0 0
    %2034 = vmatprep.mubr.bf16.mxu0 0
    %2035 = vmatmul.mubr.bf16.gmra.mxu0 %v1957
    %v2036 = vpop.f32.mrf.mxu0
    %v2037 = vadd.f32 %v1994, %v2036
    %v2038 = vpop.f32.mrf.mxu0
    %v2039 = vadd.f32 %v1996, %v2038
    %v2040 = vpop.f32.mrf.mxu0
    %v2041 = vadd.f32 %v1998, %v2040
    %v2042 = vpop.f32.mrf.mxu0
    %v2043 = vadd.f32 %v2000, %v2042
    %2044 = vdwg.mxu0
    %v2085 = vunpack.c.l.b16 %v1621
    %v2086 = vunpack.c.h.b16 %v1621
    %v2087 = vunpack.c.l.b16 %v1622
    %v2088 = vunpack.c.h.b16 %v1622
    %v2089 = vunpack.c.l.b16 %v1623
    %v2090 = vunpack.c.h.b16 %v1623
    %v2091 = vunpack.c.l.b16 %v1624
    %v2092 = vunpack.c.h.b16 %v1624
    %v2093 = vunpack.c.l.b16 %v1625
    %v2094 = vunpack.c.h.b16 %v1625
    %v2095 = vunpack.c.l.b16 %v1626
    %v2096 = vunpack.c.h.b16 %v1626
    %v2097 = vunpack.c.l.b16 %v1627
    %v2098 = vunpack.c.h.b16 %v1627
    %v2099 = vunpack.c.l.b16 %v1628
    %v2100 = vunpack.c.h.b16 %v1628
    %v2101 = vunpack.c.l.b16 %v1629
    %v2102 = vunpack.c.h.b16 %v1629
    %v2103 = vunpack.c.l.b16 %v1630
    %v2104 = vunpack.c.h.b16 %v1630
    %v2105 = vunpack.c.l.b16 %v1631
    %v2106 = vunpack.c.h.b16 %v1631
    %v2107 = vunpack.c.l.b16 %v1632
    %v2108 = vunpack.c.h.b16 %v1632
    %v2109 = vunpack.c.l.b16 %v1633
    %v2110 = vunpack.c.h.b16 %v1633
    %v2111 = vunpack.c.l.b16 %v1634
    %v2112 = vunpack.c.h.b16 %v1634
    %v2113 = vunpack.c.l.b16 %v1635
    %v2114 = vunpack.c.h.b16 %v1635
    %v2115 = vunpack.c.l.b16 %v1636
    %v2116 = vunpack.c.h.b16 %v1636
    %v2117 = vunpack.c.l.b16 %v1637
    %v2118 = vunpack.c.h.b16 %v1637
    %v2119 = vunpack.c.l.b16 %v1638
    %v2120 = vunpack.c.h.b16 %v1638
    %v2121 = vunpack.c.l.b16 %v1639
    %v2122 = vunpack.c.h.b16 %v1639
    %v2123 = vunpack.c.l.b16 %v1640
    %v2124 = vunpack.c.h.b16 %v1640
    %v2125 = vunpack.c.l.b16 %v1641
    %v2126 = vunpack.c.h.b16 %v1641
    %v2127 = vunpack.c.l.b16 %v1642
    %v2128 = vunpack.c.h.b16 %v1642
    %v2129 = vunpack.c.l.b16 %v1643
    %v2130 = vunpack.c.h.b16 %v1643
    %v2131 = vunpack.c.l.b16 %v1644
    %v2132 = vunpack.c.h.b16 %v1644
    %v2133 = vunpack.c.l.b16 %v1645
    %v2134 = vunpack.c.h.b16 %v1645
    %v2135 = vunpack.c.l.b16 %v1646
    %v2136 = vunpack.c.h.b16 %v1646
    %v2137 = vunpack.c.l.b16 %v1647
    %v2138 = vunpack.c.h.b16 %v1647
    %v2139 = vunpack.c.l.b16 %v1648
    %v2140 = vunpack.c.h.b16 %v1648
    %v2141 = vunpack.c.l.b16 %v1649
    %v2142 = vunpack.c.h.b16 %v1649
    %v2143 = vunpack.c.l.b16 %v1650
    %v2144 = vunpack.c.h.b16 %v1650
    %v2145 = vunpack.c.l.b16 %v1651
    %v2146 = vunpack.c.h.b16 %v1651
    %v2147 = vunpack.c.l.b16 %v1652
    %v2148 = vunpack.c.h.b16 %v1652
    %v2149 = vunpack.c.l.b16 %v1653
    %v2150 = vunpack.c.h.b16 %v1653
    %v2151 = vunpack.c.l.b16 %v1654
    %v2152 = vunpack.c.h.b16 %v1654
    %v2153 = vunpack.c.l.b16 %v1655
    %v2154 = vunpack.c.h.b16 %v1655
    %v2155 = vunpack.c.l.b16 %v1656
    %v2156 = vunpack.c.h.b16 %v1656
    %v2157 = vunpack.c.l.b16 %v1657
    %v2158 = vunpack.c.h.b16 %v1657
    %v2159 = vunpack.c.l.b16 %v1658
    %v2160 = vunpack.c.h.b16 %v1658
    %v2161 = vunpack.c.l.b16 %v1659
    %v2162 = vunpack.c.h.b16 %v1659
    %v2163 = vunpack.c.l.b16 %v1660
    %v2164 = vunpack.c.h.b16 %v1660
    %v2165 = vpack.c.b16 %v2087, %v2085
    %v2166 = vpack.c.b16 %v2088, %v2086
    %v2167 = vpack.c.b16 %v2091, %v2089
    %v2168 = vpack.c.b16 %v2092, %v2090
    %v2169 = vpack.c.b16 %v2095, %v2093
    %v2170 = vpack.c.b16 %v2096, %v2094
    %v2171 = vpack.c.b16 %v2099, %v2097
    %v2172 = vpack.c.b16 %v2100, %v2098
    %v2173 = vpack.c.b16 %v2103, %v2101
    %v2174 = vpack.c.b16 %v2104, %v2102
    %v2175 = vpack.c.b16 %v2107, %v2105
    %v2176 = vpack.c.b16 %v2108, %v2106
    %v2177 = vpack.c.b16 %v2111, %v2109
    %v2178 = vpack.c.b16 %v2112, %v2110
    %v2179 = vpack.c.b16 %v2115, %v2113
    %v2180 = vpack.c.b16 %v2116, %v2114
    %v2181 = vpack.c.b16 %v2119, %v2117
    %v2182 = vpack.c.b16 %v2120, %v2118
    %v2183 = vpack.c.b16 %v2123, %v2121
    %v2184 = vpack.c.b16 %v2124, %v2122
    %v2185 = vpack.c.b16 %v2127, %v2125
    %v2186 = vpack.c.b16 %v2128, %v2126
    %v2187 = vpack.c.b16 %v2131, %v2129
    %v2188 = vpack.c.b16 %v2132, %v2130
    %v2189 = vpack.c.b16 %v2135, %v2133
    %v2190 = vpack.c.b16 %v2136, %v2134
    %v2191 = vpack.c.b16 %v2139, %v2137
    %v2192 = vpack.c.b16 %v2140, %v2138
    %v2193 = vpack.c.b16 %v2143, %v2141
    %v2194 = vpack.c.b16 %v2144, %v2142
    %v2195 = vpack.c.b16 %v2147, %v2145
    %v2196 = vpack.c.b16 %v2148, %v2146
    %v2197 = vpack.c.b16 %v2151, %v2149
    %v2198 = vpack.c.b16 %v2152, %v2150
    %v2199 = vpack.c.b16 %v2155, %v2153
    %v2200 = vpack.c.b16 %v2156, %v2154
    %v2201 = vpack.c.b16 %v2159, %v2157
    %v2202 = vpack.c.b16 %v2160, %v2158
    %v2203 = vpack.c.b16 %v2163, %v2161
    %v2204 = vpack.c.b16 %v2164, %v2162
    %v2246 = vsel %vm435, %v1663, 0
    %2248 = vmatprep.subr.bf16.mxu0 %v2180
    %2249 = vmatpush1.bf16.msra.mxu0 %v2179
    %2250 = vmatprep.subr.bf16.mxu0 %v2178
    %2251 = vmatpush1.bf16.msra.mxu0 %v2177
    %2252 = vmatprep.subr.bf16.mxu0 %v2176
    %2253 = vmatpush1.bf16.msra.mxu0 %v2175
    %2254 = vmatprep.subr.bf16.mxu0 %v2174
    %2255 = vmatpush1.bf16.msra.mxu0 %v2173
    %2256 = vmatprep.subr.bf16.mxu0 %v2172
    %2257 = vmatpush1.bf16.msra.mxu0 %v2171
    %2258 = vmatprep.subr.bf16.mxu0 %v2170
    %2259 = vmatpush1.bf16.msra.mxu0 %v2169
    %2260 = vmatprep.subr.bf16.mxu0 %v2168
    %2261 = vmatpush1.bf16.msra.mxu0 %v2167
    %2262 = vmatprep.subr.bf16.mxu0 %v2166
    %2263 = vmatpush1.bf16.msra.mxu0 %v2165
    %2264 = vmatprep.subr.bf16.mxu0 %v2196
    %2265 = vmatpush2.bf16.msra.mxu0 %v2195
    %2266 = vmatprep.subr.bf16.mxu0 %v2194
    %2267 = vmatpush2.bf16.msra.mxu0 %v2193
    %2268 = vmatprep.subr.bf16.mxu0 %v2192
    %2269 = vmatpush2.bf16.msra.mxu0 %v2191
    %2270 = vmatprep.subr.bf16.mxu0 %v2190
    %2271 = vmatpush2.bf16.msra.mxu0 %v2189
    %2272 = vmatprep.subr.bf16.mxu0 %v2188
    %2273 = vmatpush2.bf16.msra.mxu0 %v2187
    %2274 = vmatprep.subr.bf16.mxu0 %v2186
    %2275 = vmatpush2.bf16.msra.mxu0 %v2185
    %2276 = vmatprep.subr.bf16.mxu0 %v2184
    %2277 = vmatpush2.bf16.msra.mxu0 %v2183
    %2278 = vmatprep.subr.bf16.mxu0 %v2182
    %2279 = vmatpush2.bf16.msra.mxu0 %v2181
    %2280 = vmatprep.mubr.bf16.mxu0 %v1662
    %2281 = vmatmul.mubr.bf16.gmra.mxu0 %v1661
    %v2282 = vpop.f32.mrf.mxu0
    %v2283 = vadd.f32 %v2037, %v2282
    %v2284 = vpop.f32.mrf.mxu0
    %v2285 = vadd.f32 %v2039, %v2284
    %v2286 = vpop.f32.mrf.mxu0
    %v2287 = vadd.f32 %v2041, %v2286
    %v2288 = vpop.f32.mrf.mxu0
    %v2289 = vadd.f32 %v2043, %v2288
    %2290 = vdwg.mxu0
    %2291 = vmatprep.subr.bf16.mxu0 0
    %2292 = vmatpush1.bf16.msra.mxu0 0
    %2293 = vmatprep.subr.bf16.mxu0 0
    %2294 = vmatpush1.bf16.msra.mxu0 0
    %2295 = vmatprep.subr.bf16.mxu0 0
    %2296 = vmatpush1.bf16.msra.mxu0 0
    %2297 = vmatprep.subr.bf16.mxu0 0
    %2298 = vmatpush1.bf16.msra.mxu0 0
    %2299 = vmatprep.subr.bf16.mxu0 %v2204
    %2300 = vmatpush1.bf16.msra.mxu0 %v2203
    %2301 = vmatprep.subr.bf16.mxu0 %v2202
    %2302 = vmatpush1.bf16.msra.mxu0 %v2201
    %2303 = vmatprep.subr.bf16.mxu0 %v2200
    %2304 = vmatpush1.bf16.msra.mxu0 %v2199
    %2305 = vmatprep.subr.bf16.mxu0 %v2198
    %2306 = vmatpush1.bf16.msra.mxu0 %v2197
    %2307 = vmatprep.subr.bf16.mxu0 0
    %2308 = vmatpush2.bf16.msra.mxu0 0
    %2309 = vmatprep.subr.bf16.mxu0 0
    %2310 = vmatpush2.bf16.msra.mxu0 0
    %2311 = vmatprep.subr.bf16.mxu0 0
    %2312 = vmatpush2.bf16.msra.mxu0 0
    %2313 = vmatprep.subr.bf16.mxu0 0
    %2314 = vmatpush2.bf16.msra.mxu0 0
    %2315 = vmatprep.subr.bf16.mxu0 0
    %2316 = vmatpush2.bf16.msra.mxu0 0
    %2317 = vmatprep.subr.bf16.mxu0 0
    %2318 = vmatpush2.bf16.msra.mxu0 0
    %2319 = vmatprep.subr.bf16.mxu0 0
    %2320 = vmatpush2.bf16.msra.mxu0 0
    %2321 = vmatprep.subr.bf16.mxu0 0
    %2322 = vmatpush2.bf16.msra.mxu0 0
    %2323 = vmatprep.mubr.bf16.mxu0 0
    %2324 = vmatmul.mubr.bf16.gmra.mxu0 %v2246
    %v2325 = vpop.f32.mrf.mxu0
    %v2326 = vadd.f32 %v2283, %v2325
    %v2327 = vpop.f32.mrf.mxu0
    %v2328 = vadd.f32 %v2285, %v2327
    %v2329 = vpop.f32.mrf.mxu0
    %v2330 = vadd.f32 %v2287, %v2329
    %v2331 = vpop.f32.mrf.mxu0
    %v2332 = vadd.f32 %v2289, %v2331
    %2333 = vdwg.mxu0
    %v2334 = vld [vmem:[#allocation3] sm:$0xfc]
    %v2335 = vld [vmem:[#allocation3 + $0x8] sm:$0xfc]
    %v2336 = vld [vmem:[#allocation3 + $0x10] sm:$0xfc]
    %v2337 = vld [vmem:[#allocation3 + $0x18] sm:$0x3]
    %v2338 = vld [vmem:[#allocation3 + $0x20] sm:$0x3]
    %v2339 = vld [vmem:[#allocation3 + $0x28] sm:$0x3]
    %v2340 = vld [vmem:[#allocation3 + $0x30] sm:$0xfc]
    %v2341 = vld [vmem:[#allocation3 + $0x38] sm:$0xfc]
    %v2342 = vld [vmem:[#allocation3 + $0x40] sm:$0xfc]
    %v2343 = vld [vmem:[#allocation3 + $0x48] sm:$0x3]
    %v2344 = vld [vmem:[#allocation3 + $0x50] sm:$0x3]
    %v2345 = vld [vmem:[#allocation3 + $0x58] sm:$0x3]
    %v2358 = vrot.slane %v2334, 2
    %v2359 = vrot.slane %v2337, 2
    %v2360 = vsel %vm1211, %v2358, %v2359
    %v2361 = vrot.slane %v2335, 2
    %v2362 = vrot.slane %v2338, 2
    %v2363 = vsel %vm1211, %v2361, %v2362
    %v2364 = vrot.slane %v2336, 2
    %v2365 = vrot.slane %v2339, 2
    %v2366 = vsel %vm1211, %v2364, %v2365
    %v2367 = vrot.slane %v2340, 2
    %v2368 = vrot.slane %v2343, 2
    %v2369 = vsel %vm1211, %v2367, %v2368
    %v2370 = vrot.slane %v2341, 2
    %v2371 = vrot.slane %v2344, 2
    %v2372 = vsel %vm1211, %v2370, %v2371
    %v2373 = vrot.slane %v2342, 2
    %v2374 = vrot.slane %v2345, 2
    %v2375 = vsel %vm1211, %v2373, %v2374
    %s2382 = scalar_lea.vmem [#allocation10], 1600
    %v2383 = vld [vmem:[%s2382] sm:$0xff]
    %v2384 = vld [vmem:[%s2382 + $0x8] sm:$0xff]
    %v2385 = vld [vmem:[%s2382 + $0x10] sm:$0xff]
    %v2386 = vld [vmem:[%s2382 + $0x18] sm:$0xff]
    %v2387 = vld [vmem:[%s2382 + $0x20] sm:$0xff]
    %v2388 = vld [vmem:[%s2382 + $0x28] sm:$0xff]
    %v2389 = vld [vmem:[%s2382 + $0x30] sm:$0xff]
    %v2390 = vld [vmem:[%s2382 + $0x38] sm:$0xff]
    %v2391 = vld [vmem:[%s2382 + $0x40] sm:$0xff]
    %v2392 = vld [vmem:[%s2382 + $0x48] sm:$0xff]
    %v2393 = vld [vmem:[%s2382 + $0x50] sm:$0xff]
    %v2394 = vld [vmem:[%s2382 + $0x58] sm:$0xff]
    %v2395 = vld [vmem:[%s2382 + $0x60] sm:$0xff]
    %v2396 = vld [vmem:[%s2382 + $0x68] sm:$0xff]
    %v2397 = vld [vmem:[%s2382 + $0x70] sm:$0xff]
    %v2398 = vld [vmem:[%s2382 + $0x78] sm:$0xff]
    %v2399 = vld [vmem:[%s2382 + $0x80] sm:$0xff]
    %v2400 = vld [vmem:[%s2382 + $0x88] sm:$0xff]
    %v2401 = vld [vmem:[%s2382 + $0x90] sm:$0xff]
    %v2402 = vld [vmem:[%s2382 + $0x98] sm:$0xff]
    %v2403 = vld [vmem:[%s2382 + $0xa0] sm:$0xff]
    %v2404 = vld [vmem:[%s2382 + $0xa8] sm:$0xff]
    %v2405 = vld [vmem:[%s2382 + $0xb0] sm:$0xff]
    %v2406 = vld [vmem:[%s2382 + $0xb8] sm:$0xff]
    %v2407 = vld [vmem:[%s2382 + $0xc0] sm:$0xff]
    %v2408 = vld [vmem:[%s2382 + $0xc8] sm:$0xff]
    %v2409 = vld [vmem:[%s2382 + $0xd0] sm:$0xff]
    %v2410 = vld [vmem:[%s2382 + $0xd8] sm:$0xff]
    %v2411 = vld [vmem:[%s2382 + $0xe0] sm:$0xff]
    %v2412 = vld [vmem:[%s2382 + $0xe8] sm:$0xff]
    %v2413 = vld [vmem:[%s2382 + $0xf0] sm:$0xff]
    %v2414 = vld [vmem:[%s2382 + $0xf8] sm:$0xff]
    %v2415 = vld [vmem:[%s2382 + $0x100] sm:$0xff]
    %v2416 = vld [vmem:[%s2382 + $0x108] sm:$0xff]
    %v2417 = vld [vmem:[%s2382 + $0x110] sm:$0xff]
    %v2418 = vld [vmem:[%s2382 + $0x118] sm:$0xff]
    %v2419 = vld [vmem:[%s2382 + $0x120] sm:$0xff]
    %v2420 = vld [vmem:[%s2382 + $0x128] sm:$0xff]
    %v2421 = vld [vmem:[%s2382 + $0x130] sm:$0xff]
    %v2422 = vld [vmem:[%s2382 + $0x138] sm:$0xff]
    %v2423 = vpack.c.bf16 %v2369, %v2360
    %v2424 = vpack.c.bf16 %v2372, %v2363
    %v2425 = vpack.c.bf16 %v2375, %v2366
    %v2466 = vunpack.c.l.b16 %v2383
    %v2467 = vunpack.c.h.b16 %v2383
    %v2468 = vunpack.c.l.b16 %v2384
    %v2469 = vunpack.c.h.b16 %v2384
    %v2470 = vunpack.c.l.b16 %v2385
    %v2471 = vunpack.c.h.b16 %v2385
    %v2472 = vunpack.c.l.b16 %v2386
    %v2473 = vunpack.c.h.b16 %v2386
    %v2474 = vunpack.c.l.b16 %v2387
    %v2475 = vunpack.c.h.b16 %v2387
    %v2476 = vunpack.c.l.b16 %v2388
    %v2477 = vunpack.c.h.b16 %v2388
    %v2478 = vunpack.c.l.b16 %v2389
    %v2479 = vunpack.c.h.b16 %v2389
    %v2480 = vunpack.c.l.b16 %v2390
    %v2481 = vunpack.c.h.b16 %v2390
    %v2482 = vunpack.c.l.b16 %v2391
    %v2483 = vunpack.c.h.b16 %v2391
    %v2484 = vunpack.c.l.b16 %v2392
    %v2485 = vunpack.c.h.b16 %v2392
    %v2486 = vunpack.c.l.b16 %v2393
    %v2487 = vunpack.c.h.b16 %v2393
    %v2488 = vunpack.c.l.b16 %v2394
    %v2489 = vunpack.c.h.b16 %v2394
    %v2490 = vunpack.c.l.b16 %v2395
    %v2491 = vunpack.c.h.b16 %v2395
    %v2492 = vunpack.c.l.b16 %v2396
    %v2493 = vunpack.c.h.b16 %v2396
    %v2494 = vunpack.c.l.b16 %v2397
    %v2495 = vunpack.c.h.b16 %v2397
    %v2496 = vunpack.c.l.b16 %v2398
    %v2497 = vunpack.c.h.b16 %v2398
    %v2498 = vunpack.c.l.b16 %v2399
    %v2499 = vunpack.c.h.b16 %v2399
    %v2500 = vunpack.c.l.b16 %v2400
    %v2501 = vunpack.c.h.b16 %v2400
    %v2502 = vunpack.c.l.b16 %v2401
    %v2503 = vunpack.c.h.b16 %v2401
    %v2504 = vunpack.c.l.b16 %v2402
    %v2505 = vunpack.c.h.b16 %v2402
    %v2506 = vunpack.c.l.b16 %v2403
    %v2507 = vunpack.c.h.b16 %v2403
    %v2508 = vunpack.c.l.b16 %v2404
    %v2509 = vunpack.c.h.b16 %v2404
    %v2510 = vunpack.c.l.b16 %v2405
    %v2511 = vunpack.c.h.b16 %v2405
    %v2512 = vunpack.c.l.b16 %v2406
    %v2513 = vunpack.c.h.b16 %v2406
    %v2514 = vunpack.c.l.b16 %v2407
    %v2515 = vunpack.c.h.b16 %v2407
    %v2516 = vunpack.c.l.b16 %v2408
    %v2517 = vunpack.c.h.b16 %v2408
    %v2518 = vunpack.c.l.b16 %v2409
    %v2519 = vunpack.c.h.b16 %v2409
    %v2520 = vunpack.c.l.b16 %v2410
    %v2521 = vunpack.c.h.b16 %v2410
    %v2522 = vunpack.c.l.b16 %v2411
    %v2523 = vunpack.c.h.b16 %v2411
    %v2524 = vunpack.c.l.b16 %v2412
    %v2525 = vunpack.c.h.b16 %v2412
    %v2526 = vunpack.c.l.b16 %v2413
    %v2527 = vunpack.c.h.b16 %v2413
    %v2528 = vunpack.c.l.b16 %v2414
    %v2529 = vunpack.c.h.b16 %v2414
    %v2530 = vunpack.c.l.b16 %v2415
    %v2531 = vunpack.c.h.b16 %v2415
    %v2532 = vunpack.c.l.b16 %v2416
    %v2533 = vunpack.c.h.b16 %v2416
    %v2534 = vunpack.c.l.b16 %v2417
    %v2535 = vunpack.c.h.b16 %v2417
    %v2536 = vunpack.c.l.b16 %v2418
    %v2537 = vunpack.c.h.b16 %v2418
    %v2538 = vunpack.c.l.b16 %v2419
    %v2539 = vunpack.c.h.b16 %v2419
    %v2540 = vunpack.c.l.b16 %v2420
    %v2541 = vunpack.c.h.b16 %v2420
    %v2542 = vunpack.c.l.b16 %v2421
    %v2543 = vunpack.c.h.b16 %v2421
    %v2544 = vunpack.c.l.b16 %v2422
    %v2545 = vunpack.c.h.b16 %v2422
    %v2546 = vpack.c.b16 %v2468, %v2466
    %v2547 = vpack.c.b16 %v2469, %v2467
    %v2548 = vpack.c.b16 %v2472, %v2470
    %v2549 = vpack.c.b16 %v2473, %v2471
    %v2550 = vpack.c.b16 %v2476, %v2474
    %v2551 = vpack.c.b16 %v2477, %v2475
    %v2552 = vpack.c.b16 %v2480, %v2478
    %v2553 = vpack.c.b16 %v2481, %v2479
    %v2554 = vpack.c.b16 %v2484, %v2482
    %v2555 = vpack.c.b16 %v2485, %v2483
    %v2556 = vpack.c.b16 %v2488, %v2486
    %v2557 = vpack.c.b16 %v2489, %v2487
    %v2558 = vpack.c.b16 %v2492, %v2490
    %v2559 = vpack.c.b16 %v2493, %v2491
    %v2560 = vpack.c.b16 %v2496, %v2494
    %v2561 = vpack.c.b16 %v2497, %v2495
    %v2562 = vpack.c.b16 %v2500, %v2498
    %v2563 = vpack.c.b16 %v2501, %v2499
    %v2564 = vpack.c.b16 %v2504, %v2502
    %v2565 = vpack.c.b16 %v2505, %v2503
    %v2566 = vpack.c.b16 %v2508, %v2506
    %v2567 = vpack.c.b16 %v2509, %v2507
    %v2568 = vpack.c.b16 %v2512, %v2510
    %v2569 = vpack.c.b16 %v2513, %v2511
    %v2570 = vpack.c.b16 %v2516, %v2514
    %v2571 = vpack.c.b16 %v2517, %v2515
    %v2572 = vpack.c.b16 %v2520, %v2518
    %v2573 = vpack.c.b16 %v2521, %v2519
    %v2574 = vpack.c.b16 %v2524, %v2522
    %v2575 = vpack.c.b16 %v2525, %v2523
    %v2576 = vpack.c.b16 %v2528, %v2526
    %v2577 = vpack.c.b16 %v2529, %v2527
    %v2578 = vpack.c.b16 %v2532, %v2530
    %v2579 = vpack.c.b16 %v2533, %v2531
    %v2580 = vpack.c.b16 %v2536, %v2534
    %v2581 = vpack.c.b16 %v2537, %v2535
    %v2582 = vpack.c.b16 %v2540, %v2538
    %v2583 = vpack.c.b16 %v2541, %v2539
    %v2584 = vpack.c.b16 %v2544, %v2542
    %v2585 = vpack.c.b16 %v2545, %v2543
    %v2627 = vsel %vm435, %v2425, 0
    %2629 = vmatprep.subr.bf16.mxu0 %v2561
    %2630 = vmatpush1.bf16.msra.mxu0 %v2560
    %2631 = vmatprep.subr.bf16.mxu0 %v2559
    %2632 = vmatpush1.bf16.msra.mxu0 %v2558
    %2633 = vmatprep.subr.bf16.mxu0 %v2557
    %2634 = vmatpush1.bf16.msra.mxu0 %v2556
    %2635 = vmatprep.subr.bf16.mxu0 %v2555
    %2636 = vmatpush1.bf16.msra.mxu0 %v2554
    %2637 = vmatprep.subr.bf16.mxu0 %v2553
    %2638 = vmatpush1.bf16.msra.mxu0 %v2552
    %2639 = vmatprep.subr.bf16.mxu0 %v2551
    %2640 = vmatpush1.bf16.msra.mxu0 %v2550
    %2641 = vmatprep.subr.bf16.mxu0 %v2549
    %2642 = vmatpush1.bf16.msra.mxu0 %v2548
    %2643 = vmatprep.subr.bf16.mxu0 %v2547
    %2644 = vmatpush1.bf16.msra.mxu0 %v2546
    %2645 = vmatprep.subr.bf16.mxu0 %v2577
    %2646 = vmatpush2.bf16.msra.mxu0 %v2576
    %2647 = vmatprep.subr.bf16.mxu0 %v2575
    %2648 = vmatpush2.bf16.msra.mxu0 %v2574
    %2649 = vmatprep.subr.bf16.mxu0 %v2573
    %2650 = vmatpush2.bf16.msra.mxu0 %v2572
    %2651 = vmatprep.subr.bf16.mxu0 %v2571
    %2652 = vmatpush2.bf16.msra.mxu0 %v2570
    %2653 = vmatprep.subr.bf16.mxu0 %v2569
    %2654 = vmatpush2.bf16.msra.mxu0 %v2568
    %2655 = vmatprep.subr.bf16.mxu0 %v2567
    %2656 = vmatpush2.bf16.msra.mxu0 %v2566
    %2657 = vmatprep.subr.bf16.mxu0 %v2565
    %2658 = vmatpush2.bf16.msra.mxu0 %v2564
    %2659 = vmatprep.subr.bf16.mxu0 %v2563
    %2660 = vmatpush2.bf16.msra.mxu0 %v2562
    %2661 = vmatprep.mubr.bf16.mxu0 %v2424
    %2662 = vmatmul.mubr.bf16.gmra.mxu0 %v2423
    %v2663 = vpop.f32.mrf.mxu0
    %v2664 = vadd.f32 0.0, %v2663
    %v2665 = vpop.f32.mrf.mxu0
    %v2666 = vadd.f32 0.0, %v2665
    %v2667 = vpop.f32.mrf.mxu0
    %v2668 = vadd.f32 0.0, %v2667
    %v2669 = vpop.f32.mrf.mxu0
    %v2670 = vadd.f32 0.0, %v2669
    %2671 = vdwg.mxu0
    %2672 = vmatprep.subr.bf16.mxu0 0
    %2673 = vmatpush1.bf16.msra.mxu0 0
    %2674 = vmatprep.subr.bf16.mxu0 0
    %2675 = vmatpush1.bf16.msra.mxu0 0
    %2676 = vmatprep.subr.bf16.mxu0 0
    %2677 = vmatpush1.bf16.msra.mxu0 0
    %2678 = vmatprep.subr.bf16.mxu0 0
    %2679 = vmatpush1.bf16.msra.mxu0 0
    %2680 = vmatprep.subr.bf16.mxu0 %v2585
    %2681 = vmatpush1.bf16.msra.mxu0 %v2584
    %2682 = vmatprep.subr.bf16.mxu0 %v2583
    %2683 = vmatpush1.bf16.msra.mxu0 %v2582
    %2684 = vmatprep.subr.bf16.mxu0 %v2581
    %2685 = vmatpush1.bf16.msra.mxu0 %v2580
    %2686 = vmatprep.subr.bf16.mxu0 %v2579
    %2687 = vmatpush1.bf16.msra.mxu0 %v2578
    %2688 = vmatprep.subr.bf16.mxu0 0
    %2689 = vmatpush2.bf16.msra.mxu0 0
    %2690 = vmatprep.subr.bf16.mxu0 0
    %2691 = vmatpush2.bf16.msra.mxu0 0
    %2692 = vmatprep.subr.bf16.mxu0 0
    %2693 = vmatpush2.bf16.msra.mxu0 0
    %2694 = vmatprep.subr.bf16.mxu0 0
    %2695 = vmatpush2.bf16.msra.mxu0 0
    %2696 = vmatprep.subr.bf16.mxu0 0
    %2697 = vmatpush2.bf16.msra.mxu0 0
    %2698 = vmatprep.subr.bf16.mxu0 0
    %2699 = vmatpush2.bf16.msra.mxu0 0
    %2700 = vmatprep.subr.bf16.mxu0 0
    %2701 = vmatpush2.bf16.msra.mxu0 0
    %2702 = vmatprep.subr.bf16.mxu0 0
    %2703 = vmatpush2.bf16.msra.mxu0 0
    %2704 = vmatprep.mubr.bf16.mxu0 0
    %2705 = vmatmul.mubr.bf16.gmra.mxu0 %v2627
    %v2706 = vpop.f32.mrf.mxu0
    %v2707 = vadd.f32 %v2664, %v2706
    %v2708 = vpop.f32.mrf.mxu0
    %v2709 = vadd.f32 %v2666, %v2708
    %v2710 = vpop.f32.mrf.mxu0
    %v2711 = vadd.f32 %v2668, %v2710
    %v2712 = vpop.f32.mrf.mxu0
    %v2713 = vadd.f32 %v2670, %v2712
    %2714 = vdwg.mxu0
    %v2715 = vadd.f32 %v2326, %v2707
    %v2716 = vadd.f32 %v2328, %v2709
    %v2717 = vadd.f32 %v2330, %v2711
    %v2718 = vadd.f32 %v2332, %v2713
    %v2720 = vlaneseq
    %v2721 = vshrl.u32 %v2720, 7
    %v2722 = vsub.s32 0, %v2721
    %v2723 = vrot.slane %v1613, %v2722
    %v2724 = vlaneseq
    %v2725 = vshrl.u32 %v2724, 7
    %v2726 = vsub.s32 1, %v2725
    %v2727 = vrot.slane %v1613, %v2726
    %v2730 = vadd.f32 %v2715, %v2723
    %v2731 = vadd.f32 %v2716, %v2727
    %v2732 = vadd.f32 %v2717, %v2723
    %v2733 = vadd.f32 %v2718, %v2727
    %v2734 = vadd.f32 %v2730, %v429
    %v2735 = vadd.f32 %v2731, %v430
    %v2736 = vadd.f32 %v2732, %v431
    %v2737 = vadd.f32 %v2733, %v432
    %v2738 = vmax.f32 %v2734, 0.0
    %v2739 = vmax.f32 %v2735, 0.0
    %v2740 = vmax.f32 %v2736, 0.0
    %v2741 = vmax.f32 %v2737, 0.0
    %v2746 = vrot.slane %v2738, 7
    %v2747 = vrot.slane %v2739, 7
    %v2748 = vrot.slane %v2740, 7
    %v2749 = vrot.slane %v2741, 7
    %2754 = vst [vmem:[#allocation3] sm:$0xfe] %v2746
    %2755 = vst [vmem:[#allocation3 + $0x8] sm:$0xfe] %v2747
    %2756 = vst [vmem:[#allocation3 + $0x18] sm:$0x1] %v2746
    %2757 = vst [vmem:[#allocation3 + $0x20] sm:$0x1] %v2747
    %2758 = vst [vmem:[#allocation3 + $0x30] sm:$0xfe] %v2748
    %2759 = vst [vmem:[#allocation3 + $0x38] sm:$0xfe] %v2749
    %2760 = vst [vmem:[#allocation3 + $0x48] sm:$0x1] %v2748
    %2761 = vst [vmem:[#allocation3 + $0x50] sm:$0x1] %v2749
    %s2762 = scalar_lea.vmem [#allocation11], 4
    %v2763 = vld [vmem:[%s2762] sm:$0x3]
    %v2764 = vld [vmem:[#allocation3] sm:$0xff]
    %v2765 = vld [vmem:[#allocation3 + $0x8] sm:$0xff]
    %v2766 = vld [vmem:[#allocation3 + $0x10] sm:$0xff]
    %v2767 = vld [vmem:[#allocation3 + $0x30] sm:$0xff]
    %v2768 = vld [vmem:[#allocation3 + $0x38] sm:$0xff]
    %v2769 = vld [vmem:[#allocation3 + $0x40] sm:$0xff]
    %s2770 = scalar_lea.vmem [#allocation10], 1920
    %v2771 = vld [vmem:[%s2770] sm:$0xff]
    %v2772 = vld [vmem:[%s2770 + $0x8] sm:$0xff]
    %v2773 = vld [vmem:[%s2770 + $0x10] sm:$0xff]
    %v2774 = vld [vmem:[%s2770 + $0x18] sm:$0xff]
    %v2775 = vld [vmem:[%s2770 + $0x20] sm:$0xff]
    %v2776 = vld [vmem:[%s2770 + $0x28] sm:$0xff]
    %v2777 = vld [vmem:[%s2770 + $0x30] sm:$0xff]
    %v2778 = vld [vmem:[%s2770 + $0x38] sm:$0xff]
    %v2779 = vld [vmem:[%s2770 + $0x40] sm:$0xff]
    %v2780 = vld [vmem:[%s2770 + $0x48] sm:$0xff]
    %v2781 = vld [vmem:[%s2770 + $0x50] sm:$0xff]
    %v2782 = vld [vmem:[%s2770 + $0x58] sm:$0xff]
    %v2783 = vld [vmem:[%s2770 + $0x60] sm:$0xff]
    %v2784 = vld [vmem:[%s2770 + $0x68] sm:$0xff]
    %v2785 = vld [vmem:[%s2770 + $0x70] sm:$0xff]
    %v2786 = vld [vmem:[%s2770 + $0x78] sm:$0xff]
    %v2787 = vld [vmem:[%s2770 + $0x80] sm:$0xff]
    %v2788 = vld [vmem:[%s2770 + $0x88] sm:$0xff]
    %v2789 = vld [vmem:[%s2770 + $0x90] sm:$0xff]
    %v2790 = vld [vmem:[%s2770 + $0x98] sm:$0xff]
    %v2791 = vld [vmem:[%s2770 + $0xa0] sm:$0xff]
    %v2792 = vld [vmem:[%s2770 + $0xa8] sm:$0xff]
    %v2793 = vld [vmem:[%s2770 + $0xb0] sm:$0xff]
    %v2794 = vld [vmem:[%s2770 + $0xb8] sm:$0xff]
    %v2795 = vld [vmem:[%s2770 + $0xc0] sm:$0xff]
    %v2796 = vld [vmem:[%s2770 + $0xc8] sm:$0xff]
    %v2797 = vld [vmem:[%s2770 + $0xd0] sm:$0xff]
    %v2798 = vld [vmem:[%s2770 + $0xd8] sm:$0xff]
    %v2799 = vld [vmem:[%s2770 + $0xe0] sm:$0xff]
    %v2800 = vld [vmem:[%s2770 + $0xe8] sm:$0xff]
    %v2801 = vld [vmem:[%s2770 + $0xf0] sm:$0xff]
    %v2802 = vld [vmem:[%s2770 + $0xf8] sm:$0xff]
    %v2803 = vld [vmem:[%s2770 + $0x100] sm:$0xff]
    %v2804 = vld [vmem:[%s2770 + $0x108] sm:$0xff]
    %v2805 = vld [vmem:[%s2770 + $0x110] sm:$0xff]
    %v2806 = vld [vmem:[%s2770 + $0x118] sm:$0xff]
    %v2807 = vld [vmem:[%s2770 + $0x120] sm:$0xff]
    %v2808 = vld [vmem:[%s2770 + $0x128] sm:$0xff]
    %v2809 = vld [vmem:[%s2770 + $0x130] sm:$0xff]
    %v2810 = vld [vmem:[%s2770 + $0x138] sm:$0xff]
    %v2811 = vpack.c.bf16 %v2767, %v2764
    %v2812 = vpack.c.bf16 %v2768, %v2765
    %v2813 = vpack.c.bf16 %v2769, %v2766
    %v2814 = vld [vmem:[#allocation3] sm:$0xfe]
    %v2815 = vld [vmem:[#allocation3 + $0x8] sm:$0xfe]
    %v2816 = vld [vmem:[#allocation3 + $0x10] sm:$0xfe]
    %v2817 = vld [vmem:[#allocation3 + $0x18] sm:$0x1]
    %v2818 = vld [vmem:[#allocation3 + $0x20] sm:$0x1]
    %v2819 = vld [vmem:[#allocation3 + $0x28] sm:$0x1]
    %v2820 = vld [vmem:[#allocation3 + $0x30] sm:$0xfe]
    %v2821 = vld [vmem:[#allocation3 + $0x38] sm:$0xfe]
    %v2822 = vld [vmem:[#allocation3 + $0x40] sm:$0xfe]
    %v2823 = vld [vmem:[#allocation3 + $0x48] sm:$0x1]
    %v2824 = vld [vmem:[#allocation3 + $0x50] sm:$0x1]
    %v2825 = vld [vmem:[#allocation3 + $0x58] sm:$0x1]
    %v2838 = vrot.slane %v2814, 1
    %v2839 = vrot.slane %v2817, 1
    %v2840 = vsel %vm212, %v2838, %v2839
    %v2841 = vrot.slane %v2815, 1
    %v2842 = vrot.slane %v2818, 1
    %v2843 = vsel %vm212, %v2841, %v2842
    %v2844 = vrot.slane %v2816, 1
    %v2845 = vrot.slane %v2819, 1
    %v2846 = vsel %vm212, %v2844, %v2845
    %v2847 = vrot.slane %v2820, 1
    %v2848 = vrot.slane %v2823, 1
    %v2849 = vsel %vm212, %v2847, %v2848
    %v2850 = vrot.slane %v2821, 1
    %v2851 = vrot.slane %v2824, 1
    %v2852 = vsel %vm212, %v2850, %v2851
    %v2853 = vrot.slane %v2822, 1
    %v2854 = vrot.slane %v2825, 1
    %v2855 = vsel %vm212, %v2853, %v2854
    %s2862 = scalar_lea.vmem [#allocation10], 2240
    %v2863 = vld [vmem:[%s2862] sm:$0xff]
    %v2864 = vld [vmem:[%s2862 + $0x8] sm:$0xff]
    %v2865 = vld [vmem:[%s2862 + $0x10] sm:$0xff]
    %v2866 = vld [vmem:[%s2862 + $0x18] sm:$0xff]
    %v2867 = vld [vmem:[%s2862 + $0x20] sm:$0xff]
    %v2868 = vld [vmem:[%s2862 + $0x28] sm:$0xff]
    %v2869 = vld [vmem:[%s2862 + $0x30] sm:$0xff]
    %v2870 = vld [vmem:[%s2862 + $0x38] sm:$0xff]
    %v2871 = vld [vmem:[%s2862 + $0x40] sm:$0xff]
    %v2872 = vld [vmem:[%s2862 + $0x48] sm:$0xff]
    %v2873 = vld [vmem:[%s2862 + $0x50] sm:$0xff]
    %v2874 = vld [vmem:[%s2862 + $0x58] sm:$0xff]
    %v2875 = vld [vmem:[%s2862 + $0x60] sm:$0xff]
    %v2876 = vld [vmem:[%s2862 + $0x68] sm:$0xff]
    %v2877 = vld [vmem:[%s2862 + $0x70] sm:$0xff]
    %v2878 = vld [vmem:[%s2862 + $0x78] sm:$0xff]
    %v2879 = vld [vmem:[%s2862 + $0x80] sm:$0xff]
    %v2880 = vld [vmem:[%s2862 + $0x88] sm:$0xff]
    %v2881 = vld [vmem:[%s2862 + $0x90] sm:$0xff]
    %v2882 = vld [vmem:[%s2862 + $0x98] sm:$0xff]
    %v2883 = vld [vmem:[%s2862 + $0xa0] sm:$0xff]
    %v2884 = vld [vmem:[%s2862 + $0xa8] sm:$0xff]
    %v2885 = vld [vmem:[%s2862 + $0xb0] sm:$0xff]
    %v2886 = vld [vmem:[%s2862 + $0xb8] sm:$0xff]
    %v2887 = vld [vmem:[%s2862 + $0xc0] sm:$0xff]
    %v2888 = vld [vmem:[%s2862 + $0xc8] sm:$0xff]
    %v2889 = vld [vmem:[%s2862 + $0xd0] sm:$0xff]
    %v2890 = vld [vmem:[%s2862 + $0xd8] sm:$0xff]
    %v2891 = vld [vmem:[%s2862 + $0xe0] sm:$0xff]
    %v2892 = vld [vmem:[%s2862 + $0xe8] sm:$0xff]
    %v2893 = vld [vmem:[%s2862 + $0xf0] sm:$0xff]
    %v2894 = vld [vmem:[%s2862 + $0xf8] sm:$0xff]
    %v2895 = vld [vmem:[%s2862 + $0x100] sm:$0xff]
    %v2896 = vld [vmem:[%s2862 + $0x108] sm:$0xff]
    %v2897 = vld [vmem:[%s2862 + $0x110] sm:$0xff]
    %v2898 = vld [vmem:[%s2862 + $0x118] sm:$0xff]
    %v2899 = vld [vmem:[%s2862 + $0x120] sm:$0xff]
    %v2900 = vld [vmem:[%s2862 + $0x128] sm:$0xff]
    %v2901 = vld [vmem:[%s2862 + $0x130] sm:$0xff]
    %v2902 = vld [vmem:[%s2862 + $0x138] sm:$0xff]
    %v2903 = vpack.c.bf16 %v2849, %v2840
    %v2904 = vpack.c.bf16 %v2852, %v2843
    %v2905 = vpack.c.bf16 %v2855, %v2846
    %v2946 = vunpack.c.l.b16 %v2863
    %v2947 = vunpack.c.h.b16 %v2863
    %v2948 = vunpack.c.l.b16 %v2864
    %v2949 = vunpack.c.h.b16 %v2864
    %v2950 = vunpack.c.l.b16 %v2865
    %v2951 = vunpack.c.h.b16 %v2865
    %v2952 = vunpack.c.l.b16 %v2866
    %v2953 = vunpack.c.h.b16 %v2866
    %v2954 = vunpack.c.l.b16 %v2867
    %v2955 = vunpack.c.h.b16 %v2867
    %v2956 = vunpack.c.l.b16 %v2868
    %v2957 = vunpack.c.h.b16 %v2868
    %v2958 = vunpack.c.l.b16 %v2869
    %v2959 = vunpack.c.h.b16 %v2869
    %v2960 = vunpack.c.l.b16 %v2870
    %v2961 = vunpack.c.h.b16 %v2870
    %v2962 = vunpack.c.l.b16 %v2871
    %v2963 = vunpack.c.h.b16 %v2871
    %v2964 = vunpack.c.l.b16 %v2872
    %v2965 = vunpack.c.h.b16 %v2872
    %v2966 = vunpack.c.l.b16 %v2873
    %v2967 = vunpack.c.h.b16 %v2873
    %v2968 = vunpack.c.l.b16 %v2874
    %v2969 = vunpack.c.h.b16 %v2874
    %v2970 = vunpack.c.l.b16 %v2875
    %v2971 = vunpack.c.h.b16 %v2875
    %v2972 = vunpack.c.l.b16 %v2876
    %v2973 = vunpack.c.h.b16 %v2876
    %v2974 = vunpack.c.l.b16 %v2877
    %v2975 = vunpack.c.h.b16 %v2877
    %v2976 = vunpack.c.l.b16 %v2878
    %v2977 = vunpack.c.h.b16 %v2878
    %v2978 = vunpack.c.l.b16 %v2879
    %v2979 = vunpack.c.h.b16 %v2879
    %v2980 = vunpack.c.l.b16 %v2880
    %v2981 = vunpack.c.h.b16 %v2880
    %v2982 = vunpack.c.l.b16 %v2881
    %v2983 = vunpack.c.h.b16 %v2881
    %v2984 = vunpack.c.l.b16 %v2882
    %v2985 = vunpack.c.h.b16 %v2882
    %v2986 = vunpack.c.l.b16 %v2883
    %v2987 = vunpack.c.h.b16 %v2883
    %v2988 = vunpack.c.l.b16 %v2884
    %v2989 = vunpack.c.h.b16 %v2884
    %v2990 = vunpack.c.l.b16 %v2885
    %v2991 = vunpack.c.h.b16 %v2885
    %v2992 = vunpack.c.l.b16 %v2886
    %v2993 = vunpack.c.h.b16 %v2886
    %v2994 = vunpack.c.l.b16 %v2887
    %v2995 = vunpack.c.h.b16 %v2887
    %v2996 = vunpack.c.l.b16 %v2888
    %v2997 = vunpack.c.h.b16 %v2888
    %v2998 = vunpack.c.l.b16 %v2889
    %v2999 = vunpack.c.h.b16 %v2889
    %v3000 = vunpack.c.l.b16 %v2890
    %v3001 = vunpack.c.h.b16 %v2890
    %v3002 = vunpack.c.l.b16 %v2891
    %v3003 = vunpack.c.h.b16 %v2891
    %v3004 = vunpack.c.l.b16 %v2892
    %v3005 = vunpack.c.h.b16 %v2892
    %v3006 = vunpack.c.l.b16 %v2893
    %v3007 = vunpack.c.h.b16 %v2893
    %v3008 = vunpack.c.l.b16 %v2894
    %v3009 = vunpack.c.h.b16 %v2894
    %v3010 = vunpack.c.l.b16 %v2895
    %v3011 = vunpack.c.h.b16 %v2895
    %v3012 = vunpack.c.l.b16 %v2896
    %v3013 = vunpack.c.h.b16 %v2896
    %v3014 = vunpack.c.l.b16 %v2897
    %v3015 = vunpack.c.h.b16 %v2897
    %v3016 = vunpack.c.l.b16 %v2898
    %v3017 = vunpack.c.h.b16 %v2898
    %v3018 = vunpack.c.l.b16 %v2899
    %v3019 = vunpack.c.h.b16 %v2899
    %v3020 = vunpack.c.l.b16 %v2900
    %v3021 = vunpack.c.h.b16 %v2900
    %v3022 = vunpack.c.l.b16 %v2901
    %v3023 = vunpack.c.h.b16 %v2901
    %v3024 = vunpack.c.l.b16 %v2902
    %v3025 = vunpack.c.h.b16 %v2902
    %v3026 = vpack.c.b16 %v2948, %v2946
    %v3027 = vpack.c.b16 %v2949, %v2947
    %v3028 = vpack.c.b16 %v2952, %v2950
    %v3029 = vpack.c.b16 %v2953, %v2951
    %v3030 = vpack.c.b16 %v2956, %v2954
    %v3031 = vpack.c.b16 %v2957, %v2955
    %v3032 = vpack.c.b16 %v2960, %v2958
    %v3033 = vpack.c.b16 %v2961, %v2959
    %v3034 = vpack.c.b16 %v2964, %v2962
    %v3035 = vpack.c.b16 %v2965, %v2963
    %v3036 = vpack.c.b16 %v2968, %v2966
    %v3037 = vpack.c.b16 %v2969, %v2967
    %v3038 = vpack.c.b16 %v2972, %v2970
    %v3039 = vpack.c.b16 %v2973, %v2971
    %v3040 = vpack.c.b16 %v2976, %v2974
    %v3041 = vpack.c.b16 %v2977, %v2975
    %v3042 = vpack.c.b16 %v2980, %v2978
    %v3043 = vpack.c.b16 %v2981, %v2979
    %v3044 = vpack.c.b16 %v2984, %v2982
    %v3045 = vpack.c.b16 %v2985, %v2983
    %v3046 = vpack.c.b16 %v2988, %v2986
    %v3047 = vpack.c.b16 %v2989, %v2987
    %v3048 = vpack.c.b16 %v2992, %v2990
    %v3049 = vpack.c.b16 %v2993, %v2991
    %v3050 = vpack.c.b16 %v2996, %v2994
    %v3051 = vpack.c.b16 %v2997, %v2995
    %v3052 = vpack.c.b16 %v3000, %v2998
    %v3053 = vpack.c.b16 %v3001, %v2999
    %v3054 = vpack.c.b16 %v3004, %v3002
    %v3055 = vpack.c.b16 %v3005, %v3003
    %v3056 = vpack.c.b16 %v3008, %v3006
    %v3057 = vpack.c.b16 %v3009, %v3007
    %v3058 = vpack.c.b16 %v3012, %v3010
    %v3059 = vpack.c.b16 %v3013, %v3011
    %v3060 = vpack.c.b16 %v3016, %v3014
    %v3061 = vpack.c.b16 %v3017, %v3015
    %v3062 = vpack.c.b16 %v3020, %v3018
    %v3063 = vpack.c.b16 %v3021, %v3019
    %v3064 = vpack.c.b16 %v3024, %v3022
    %v3065 = vpack.c.b16 %v3025, %v3023
    %v3107 = vsel %vm435, %v2905, 0
    %3109 = vmatprep.subr.bf16.mxu0 %v3041
    %3110 = vmatpush1.bf16.msra.mxu0 %v3040
    %3111 = vmatprep.subr.bf16.mxu0 %v3039
    %3112 = vmatpush1.bf16.msra.mxu0 %v3038
    %3113 = vmatprep.subr.bf16.mxu0 %v3037
    %3114 = vmatpush1.bf16.msra.mxu0 %v3036
    %3115 = vmatprep.subr.bf16.mxu0 %v3035
    %3116 = vmatpush1.bf16.msra.mxu0 %v3034
    %3117 = vmatprep.subr.bf16.mxu0 %v3033
    %3118 = vmatpush1.bf16.msra.mxu0 %v3032
    %3119 = vmatprep.subr.bf16.mxu0 %v3031
    %3120 = vmatpush1.bf16.msra.mxu0 %v3030
    %3121 = vmatprep.subr.bf16.mxu0 %v3029
    %3122 = vmatpush1.bf16.msra.mxu0 %v3028
    %3123 = vmatprep.subr.bf16.mxu0 %v3027
    %3124 = vmatpush1.bf16.msra.mxu0 %v3026
    %3125 = vmatprep.subr.bf16.mxu0 %v3057
    %3126 = vmatpush2.bf16.msra.mxu0 %v3056
    %3127 = vmatprep.subr.bf16.mxu0 %v3055
    %3128 = vmatpush2.bf16.msra.mxu0 %v3054
    %3129 = vmatprep.subr.bf16.mxu0 %v3053
    %3130 = vmatpush2.bf16.msra.mxu0 %v3052
    %3131 = vmatprep.subr.bf16.mxu0 %v3051
    %3132 = vmatpush2.bf16.msra.mxu0 %v3050
    %3133 = vmatprep.subr.bf16.mxu0 %v3049
    %3134 = vmatpush2.bf16.msra.mxu0 %v3048
    %3135 = vmatprep.subr.bf16.mxu0 %v3047
    %3136 = vmatpush2.bf16.msra.mxu0 %v3046
    %3137 = vmatprep.subr.bf16.mxu0 %v3045
    %3138 = vmatpush2.bf16.msra.mxu0 %v3044
    %3139 = vmatprep.subr.bf16.mxu0 %v3043
    %3140 = vmatpush2.bf16.msra.mxu0 %v3042
    %3141 = vmatprep.mubr.bf16.mxu0 %v2904
    %3142 = vmatmul.mubr.bf16.gmra.mxu0 %v2903
    %v3143 = vpop.f32.mrf.mxu0
    %v3144 = vadd.f32 0.0, %v3143
    %v3145 = vpop.f32.mrf.mxu0
    %v3146 = vadd.f32 0.0, %v3145
    %v3147 = vpop.f32.mrf.mxu0
    %v3148 = vadd.f32 0.0, %v3147
    %v3149 = vpop.f32.mrf.mxu0
    %v3150 = vadd.f32 0.0, %v3149
    %3151 = vdwg.mxu0
    %3152 = vmatprep.subr.bf16.mxu0 0
    %3153 = vmatpush1.bf16.msra.mxu0 0
    %3154 = vmatprep.subr.bf16.mxu0 0
    %3155 = vmatpush1.bf16.msra.mxu0 0
    %3156 = vmatprep.subr.bf16.mxu0 0
    %3157 = vmatpush1.bf16.msra.mxu0 0
    %3158 = vmatprep.subr.bf16.mxu0 0
    %3159 = vmatpush1.bf16.msra.mxu0 0
    %3160 = vmatprep.subr.bf16.mxu0 %v3065
    %3161 = vmatpush1.bf16.msra.mxu0 %v3064
    %3162 = vmatprep.subr.bf16.mxu0 %v3063
    %3163 = vmatpush1.bf16.msra.mxu0 %v3062
    %3164 = vmatprep.subr.bf16.mxu0 %v3061
    %3165 = vmatpush1.bf16.msra.mxu0 %v3060
    %3166 = vmatprep.subr.bf16.mxu0 %v3059
    %3167 = vmatpush1.bf16.msra.mxu0 %v3058
    %3168 = vmatprep.subr.bf16.mxu0 0
    %3169 = vmatpush2.bf16.msra.mxu0 0
    %3170 = vmatprep.subr.bf16.mxu0 0
    %3171 = vmatpush2.bf16.msra.mxu0 0
    %3172 = vmatprep.subr.bf16.mxu0 0
    %3173 = vmatpush2.bf16.msra.mxu0 0
    %3174 = vmatprep.subr.bf16.mxu0 0
    %3175 = vmatpush2.bf16.msra.mxu0 0
    %3176 = vmatprep.subr.bf16.mxu0 0
    %3177 = vmatpush2.bf16.msra.mxu0 0
    %3178 = vmatprep.subr.bf16.mxu0 0
    %3179 = vmatpush2.bf16.msra.mxu0 0
    %3180 = vmatprep.subr.bf16.mxu0 0
    %3181 = vmatpush2.bf16.msra.mxu0 0
    %3182 = vmatprep.subr.bf16.mxu0 0
    %3183 = vmatpush2.bf16.msra.mxu0 0
    %3184 = vmatprep.mubr.bf16.mxu0 0
    %3185 = vmatmul.mubr.bf16.gmra.mxu0 %v3107
    %v3186 = vpop.f32.mrf.mxu0
    %v3187 = vadd.f32 %v3144, %v3186
    %v3188 = vpop.f32.mrf.mxu0
    %v3189 = vadd.f32 %v3146, %v3188
    %v3190 = vpop.f32.mrf.mxu0
    %v3191 = vadd.f32 %v3148, %v3190
    %v3192 = vpop.f32.mrf.mxu0
    %v3193 = vadd.f32 %v3150, %v3192
    %3194 = vdwg.mxu0
    %v3235 = vunpack.c.l.b16 %v2771
    %v3236 = vunpack.c.h.b16 %v2771
    %v3237 = vunpack.c.l.b16 %v2772
    %v3238 = vunpack.c.h.b16 %v2772
    %v3239 = vunpack.c.l.b16 %v2773
    %v3240 = vunpack.c.h.b16 %v2773
    %v3241 = vunpack.c.l.b16 %v2774
    %v3242 = vunpack.c.h.b16 %v2774
    %v3243 = vunpack.c.l.b16 %v2775
    %v3244 = vunpack.c.h.b16 %v2775
    %v3245 = vunpack.c.l.b16 %v2776
    %v3246 = vunpack.c.h.b16 %v2776
    %v3247 = vunpack.c.l.b16 %v2777
    %v3248 = vunpack.c.h.b16 %v2777
    %v3249 = vunpack.c.l.b16 %v2778
    %v3250 = vunpack.c.h.b16 %v2778
    %v3251 = vunpack.c.l.b16 %v2779
    %v3252 = vunpack.c.h.b16 %v2779
    %v3253 = vunpack.c.l.b16 %v2780
    %v3254 = vunpack.c.h.b16 %v2780
    %v3255 = vunpack.c.l.b16 %v2781
    %v3256 = vunpack.c.h.b16 %v2781
    %v3257 = vunpack.c.l.b16 %v2782
    %v3258 = vunpack.c.h.b16 %v2782
    %v3259 = vunpack.c.l.b16 %v2783
    %v3260 = vunpack.c.h.b16 %v2783
    %v3261 = vunpack.c.l.b16 %v2784
    %v3262 = vunpack.c.h.b16 %v2784
    %v3263 = vunpack.c.l.b16 %v2785
    %v3264 = vunpack.c.h.b16 %v2785
    %v3265 = vunpack.c.l.b16 %v2786
    %v3266 = vunpack.c.h.b16 %v2786
    %v3267 = vunpack.c.l.b16 %v2787
    %v3268 = vunpack.c.h.b16 %v2787
    %v3269 = vunpack.c.l.b16 %v2788
    %v3270 = vunpack.c.h.b16 %v2788
    %v3271 = vunpack.c.l.b16 %v2789
    %v3272 = vunpack.c.h.b16 %v2789
    %v3273 = vunpack.c.l.b16 %v2790
    %v3274 = vunpack.c.h.b16 %v2790
    %v3275 = vunpack.c.l.b16 %v2791
    %v3276 = vunpack.c.h.b16 %v2791
    %v3277 = vunpack.c.l.b16 %v2792
    %v3278 = vunpack.c.h.b16 %v2792
    %v3279 = vunpack.c.l.b16 %v2793
    %v3280 = vunpack.c.h.b16 %v2793
    %v3281 = vunpack.c.l.b16 %v2794
    %v3282 = vunpack.c.h.b16 %v2794
    %v3283 = vunpack.c.l.b16 %v2795
    %v3284 = vunpack.c.h.b16 %v2795
    %v3285 = vunpack.c.l.b16 %v2796
    %v3286 = vunpack.c.h.b16 %v2796
    %v3287 = vunpack.c.l.b16 %v2797
    %v3288 = vunpack.c.h.b16 %v2797
    %v3289 = vunpack.c.l.b16 %v2798
    %v3290 = vunpack.c.h.b16 %v2798
    %v3291 = vunpack.c.l.b16 %v2799
    %v3292 = vunpack.c.h.b16 %v2799
    %v3293 = vunpack.c.l.b16 %v2800
    %v3294 = vunpack.c.h.b16 %v2800
    %v3295 = vunpack.c.l.b16 %v2801
    %v3296 = vunpack.c.h.b16 %v2801
    %v3297 = vunpack.c.l.b16 %v2802
    %v3298 = vunpack.c.h.b16 %v2802
    %v3299 = vunpack.c.l.b16 %v2803
    %v3300 = vunpack.c.h.b16 %v2803
    %v3301 = vunpack.c.l.b16 %v2804
    %v3302 = vunpack.c.h.b16 %v2804
    %v3303 = vunpack.c.l.b16 %v2805
    %v3304 = vunpack.c.h.b16 %v2805
    %v3305 = vunpack.c.l.b16 %v2806
    %v3306 = vunpack.c.h.b16 %v2806
    %v3307 = vunpack.c.l.b16 %v2807
    %v3308 = vunpack.c.h.b16 %v2807
    %v3309 = vunpack.c.l.b16 %v2808
    %v3310 = vunpack.c.h.b16 %v2808
    %v3311 = vunpack.c.l.b16 %v2809
    %v3312 = vunpack.c.h.b16 %v2809
    %v3313 = vunpack.c.l.b16 %v2810
    %v3314 = vunpack.c.h.b16 %v2810
    %v3315 = vpack.c.b16 %v3237, %v3235
    %v3316 = vpack.c.b16 %v3238, %v3236
    %v3317 = vpack.c.b16 %v3241, %v3239
    %v3318 = vpack.c.b16 %v3242, %v3240
    %v3319 = vpack.c.b16 %v3245, %v3243
    %v3320 = vpack.c.b16 %v3246, %v3244
    %v3321 = vpack.c.b16 %v3249, %v3247
    %v3322 = vpack.c.b16 %v3250, %v3248
    %v3323 = vpack.c.b16 %v3253, %v3251
    %v3324 = vpack.c.b16 %v3254, %v3252
    %v3325 = vpack.c.b16 %v3257, %v3255
    %v3326 = vpack.c.b16 %v3258, %v3256
    %v3327 = vpack.c.b16 %v3261, %v3259
    %v3328 = vpack.c.b16 %v3262, %v3260
    %v3329 = vpack.c.b16 %v3265, %v3263
    %v3330 = vpack.c.b16 %v3266, %v3264
    %v3331 = vpack.c.b16 %v3269, %v3267
    %v3332 = vpack.c.b16 %v3270, %v3268
    %v3333 = vpack.c.b16 %v3273, %v3271
    %v3334 = vpack.c.b16 %v3274, %v3272
    %v3335 = vpack.c.b16 %v3277, %v3275
    %v3336 = vpack.c.b16 %v3278, %v3276
    %v3337 = vpack.c.b16 %v3281, %v3279
    %v3338 = vpack.c.b16 %v3282, %v3280
    %v3339 = vpack.c.b16 %v3285, %v3283
    %v3340 = vpack.c.b16 %v3286, %v3284
    %v3341 = vpack.c.b16 %v3289, %v3287
    %v3342 = vpack.c.b16 %v3290, %v3288
    %v3343 = vpack.c.b16 %v3293, %v3291
    %v3344 = vpack.c.b16 %v3294, %v3292
    %v3345 = vpack.c.b16 %v3297, %v3295
    %v3346 = vpack.c.b16 %v3298, %v3296
    %v3347 = vpack.c.b16 %v3301, %v3299
    %v3348 = vpack.c.b16 %v3302, %v3300
    %v3349 = vpack.c.b16 %v3305, %v3303
    %v3350 = vpack.c.b16 %v3306, %v3304
    %v3351 = vpack.c.b16 %v3309, %v3307
    %v3352 = vpack.c.b16 %v3310, %v3308
    %v3353 = vpack.c.b16 %v3313, %v3311
    %v3354 = vpack.c.b16 %v3314, %v3312
    %v3396 = vsel %vm435, %v2813, 0
    %3398 = vmatprep.subr.bf16.mxu0 %v3330
    %3399 = vmatpush1.bf16.msra.mxu0 %v3329
    %3400 = vmatprep.subr.bf16.mxu0 %v3328
    %3401 = vmatpush1.bf16.msra.mxu0 %v3327
    %3402 = vmatprep.subr.bf16.mxu0 %v3326
    %3403 = vmatpush1.bf16.msra.mxu0 %v3325
    %3404 = vmatprep.subr.bf16.mxu0 %v3324
    %3405 = vmatpush1.bf16.msra.mxu0 %v3323
    %3406 = vmatprep.subr.bf16.mxu0 %v3322
    %3407 = vmatpush1.bf16.msra.mxu0 %v3321
    %3408 = vmatprep.subr.bf16.mxu0 %v3320
    %3409 = vmatpush1.bf16.msra.mxu0 %v3319
    %3410 = vmatprep.subr.bf16.mxu0 %v3318
    %3411 = vmatpush1.bf16.msra.mxu0 %v3317
    %3412 = vmatprep.subr.bf16.mxu0 %v3316
    %3413 = vmatpush1.bf16.msra.mxu0 %v3315
    %3414 = vmatprep.subr.bf16.mxu0 %v3346
    %3415 = vmatpush2.bf16.msra.mxu0 %v3345
    %3416 = vmatprep.subr.bf16.mxu0 %v3344
    %3417 = vmatpush2.bf16.msra.mxu0 %v3343
    %3418 = vmatprep.subr.bf16.mxu0 %v3342
    %3419 = vmatpush2.bf16.msra.mxu0 %v3341
    %3420 = vmatprep.subr.bf16.mxu0 %v3340
    %3421 = vmatpush2.bf16.msra.mxu0 %v3339
    %3422 = vmatprep.subr.bf16.mxu0 %v3338
    %3423 = vmatpush2.bf16.msra.mxu0 %v3337
    %3424 = vmatprep.subr.bf16.mxu0 %v3336
    %3425 = vmatpush2.bf16.msra.mxu0 %v3335
    %3426 = vmatprep.subr.bf16.mxu0 %v3334
    %3427 = vmatpush2.bf16.msra.mxu0 %v3333
    %3428 = vmatprep.subr.bf16.mxu0 %v3332
    %3429 = vmatpush2.bf16.msra.mxu0 %v3331
    %3430 = vmatprep.mubr.bf16.mxu0 %v2812
    %3431 = vmatmul.mubr.bf16.gmra.mxu0 %v2811
    %v3432 = vpop.f32.mrf.mxu0
    %v3433 = vadd.f32 %v3187, %v3432
    %v3434 = vpop.f32.mrf.mxu0
    %v3435 = vadd.f32 %v3189, %v3434
    %v3436 = vpop.f32.mrf.mxu0
    %v3437 = vadd.f32 %v3191, %v3436
    %v3438 = vpop.f32.mrf.mxu0
    %v3439 = vadd.f32 %v3193, %v3438
    %3440 = vdwg.mxu0
    %3441 = vmatprep.subr.bf16.mxu0 0
    %3442 = vmatpush1.bf16.msra.mxu0 0
    %3443 = vmatprep.subr.bf16.mxu0 0
    %3444 = vmatpush1.bf16.msra.mxu0 0
    %3445 = vmatprep.subr.bf16.mxu0 0
    %3446 = vmatpush1.bf16.msra.mxu0 0
    %3447 = vmatprep.subr.bf16.mxu0 0
    %3448 = vmatpush1.bf16.msra.mxu0 0
    %3449 = vmatprep.subr.bf16.mxu0 %v3354
    %3450 = vmatpush1.bf16.msra.mxu0 %v3353
    %3451 = vmatprep.subr.bf16.mxu0 %v3352
    %3452 = vmatpush1.bf16.msra.mxu0 %v3351
    %3453 = vmatprep.subr.bf16.mxu0 %v3350
    %3454 = vmatpush1.bf16.msra.mxu0 %v3349
    %3455 = vmatprep.subr.bf16.mxu0 %v3348
    %3456 = vmatpush1.bf16.msra.mxu0 %v3347
    %3457 = vmatprep.subr.bf16.mxu0 0
    %3458 = vmatpush2.bf16.msra.mxu0 0
    %3459 = vmatprep.subr.bf16.mxu0 0
    %3460 = vmatpush2.bf16.msra.mxu0 0
    %3461 = vmatprep.subr.bf16.mxu0 0
    %3462 = vmatpush2.bf16.msra.mxu0 0
    %3463 = vmatprep.subr.bf16.mxu0 0
    %3464 = vmatpush2.bf16.msra.mxu0 0
    %3465 = vmatprep.subr.bf16.mxu0 0
    %3466 = vmatpush2.bf16.msra.mxu0 0
    %3467 = vmatprep.subr.bf16.mxu0 0
    %3468 = vmatpush2.bf16.msra.mxu0 0
    %3469 = vmatprep.subr.bf16.mxu0 0
    %3470 = vmatpush2.bf16.msra.mxu0 0
    %3471 = vmatprep.subr.bf16.mxu0 0
    %3472 = vmatpush2.bf16.msra.mxu0 0
    %3473 = vmatprep.mubr.bf16.mxu0 0
    %3474 = vmatmul.mubr.bf16.gmra.mxu0 %v3396
    %v3475 = vpop.f32.mrf.mxu0
    %v3476 = vadd.f32 %v3433, %v3475
    %v3477 = vpop.f32.mrf.mxu0
    %v3478 = vadd.f32 %v3435, %v3477
    %v3479 = vpop.f32.mrf.mxu0
    %v3480 = vadd.f32 %v3437, %v3479
    %v3481 = vpop.f32.mrf.mxu0
    %v3482 = vadd.f32 %v3439, %v3481
    %3483 = vdwg.mxu0
    %v3484 = vld [vmem:[#allocation3] sm:$0xfc]
    %v3485 = vld [vmem:[#allocation3 + $0x8] sm:$0xfc]
    %v3486 = vld [vmem:[#allocation3 + $0x10] sm:$0xfc]
    %v3487 = vld [vmem:[#allocation3 + $0x18] sm:$0x3]
    %v3488 = vld [vmem:[#allocation3 + $0x20] sm:$0x3]
    %v3489 = vld [vmem:[#allocation3 + $0x28] sm:$0x3]
    %v3490 = vld [vmem:[#allocation3 + $0x30] sm:$0xfc]
    %v3491 = vld [vmem:[#allocation3 + $0x38] sm:$0xfc]
    %v3492 = vld [vmem:[#allocation3 + $0x40] sm:$0xfc]
    %v3493 = vld [vmem:[#allocation3 + $0x48] sm:$0x3]
    %v3494 = vld [vmem:[#allocation3 + $0x50] sm:$0x3]
    %v3495 = vld [vmem:[#allocation3 + $0x58] sm:$0x3]
    %v3508 = vrot.slane %v3484, 2
    %v3509 = vrot.slane %v3487, 2
    %v3510 = vsel %vm1211, %v3508, %v3509
    %v3511 = vrot.slane %v3485, 2
    %v3512 = vrot.slane %v3488, 2
    %v3513 = vsel %vm1211, %v3511, %v3512
    %v3514 = vrot.slane %v3486, 2
    %v3515 = vrot.slane %v3489, 2
    %v3516 = vsel %vm1211, %v3514, %v3515
    %v3517 = vrot.slane %v3490, 2
    %v3518 = vrot.slane %v3493, 2
    %v3519 = vsel %vm1211, %v3517, %v3518
    %v3520 = vrot.slane %v3491, 2
    %v3521 = vrot.slane %v3494, 2
    %v3522 = vsel %vm1211, %v3520, %v3521
    %v3523 = vrot.slane %v3492, 2
    %v3524 = vrot.slane %v3495, 2
    %v3525 = vsel %vm1211, %v3523, %v3524
    %s3532 = scalar_lea.vmem [#allocation10], 2560
    %v3533 = vld [vmem:[%s3532] sm:$0xff]
    %v3534 = vld [vmem:[%s3532 + $0x8] sm:$0xff]
    %v3535 = vld [vmem:[%s3532 + $0x10] sm:$0xff]
    %v3536 = vld [vmem:[%s3532 + $0x18] sm:$0xff]
    %v3537 = vld [vmem:[%s3532 + $0x20] sm:$0xff]
    %v3538 = vld [vmem:[%s3532 + $0x28] sm:$0xff]
    %v3539 = vld [vmem:[%s3532 + $0x30] sm:$0xff]
    %v3540 = vld [vmem:[%s3532 + $0x38] sm:$0xff]
    %v3541 = vld [vmem:[%s3532 + $0x40] sm:$0xff]
    %v3542 = vld [vmem:[%s3532 + $0x48] sm:$0xff]
    %v3543 = vld [vmem:[%s3532 + $0x50] sm:$0xff]
    %v3544 = vld [vmem:[%s3532 + $0x58] sm:$0xff]
    %v3545 = vld [vmem:[%s3532 + $0x60] sm:$0xff]
    %v3546 = vld [vmem:[%s3532 + $0x68] sm:$0xff]
    %v3547 = vld [vmem:[%s3532 + $0x70] sm:$0xff]
    %v3548 = vld [vmem:[%s3532 + $0x78] sm:$0xff]
    %v3549 = vld [vmem:[%s3532 + $0x80] sm:$0xff]
    %v3550 = vld [vmem:[%s3532 + $0x88] sm:$0xff]
    %v3551 = vld [vmem:[%s3532 + $0x90] sm:$0xff]
    %v3552 = vld [vmem:[%s3532 + $0x98] sm:$0xff]
    %v3553 = vld [vmem:[%s3532 + $0xa0] sm:$0xff]
    %v3554 = vld [vmem:[%s3532 + $0xa8] sm:$0xff]
    %v3555 = vld [vmem:[%s3532 + $0xb0] sm:$0xff]
    %v3556 = vld [vmem:[%s3532 + $0xb8] sm:$0xff]
    %v3557 = vld [vmem:[%s3532 + $0xc0] sm:$0xff]
    %v3558 = vld [vmem:[%s3532 + $0xc8] sm:$0xff]
    %v3559 = vld [vmem:[%s3532 + $0xd0] sm:$0xff]
    %v3560 = vld [vmem:[%s3532 + $0xd8] sm:$0xff]
    %v3561 = vld [vmem:[%s3532 + $0xe0] sm:$0xff]
    %v3562 = vld [vmem:[%s3532 + $0xe8] sm:$0xff]
    %v3563 = vld [vmem:[%s3532 + $0xf0] sm:$0xff]
    %v3564 = vld [vmem:[%s3532 + $0xf8] sm:$0xff]
    %v3565 = vld [vmem:[%s3532 + $0x100] sm:$0xff]
    %v3566 = vld [vmem:[%s3532 + $0x108] sm:$0xff]
    %v3567 = vld [vmem:[%s3532 + $0x110] sm:$0xff]
    %v3568 = vld [vmem:[%s3532 + $0x118] sm:$0xff]
    %v3569 = vld [vmem:[%s3532 + $0x120] sm:$0xff]
    %v3570 = vld [vmem:[%s3532 + $0x128] sm:$0xff]
    %v3571 = vld [vmem:[%s3532 + $0x130] sm:$0xff]
    %v3572 = vld [vmem:[%s3532 + $0x138] sm:$0xff]
    %v3573 = vpack.c.bf16 %v3519, %v3510
    %v3574 = vpack.c.bf16 %v3522, %v3513
    %v3575 = vpack.c.bf16 %v3525, %v3516
    %v3616 = vunpack.c.l.b16 %v3533
    %v3617 = vunpack.c.h.b16 %v3533
    %v3618 = vunpack.c.l.b16 %v3534
    %v3619 = vunpack.c.h.b16 %v3534
    %v3620 = vunpack.c.l.b16 %v3535
    %v3621 = vunpack.c.h.b16 %v3535
    %v3622 = vunpack.c.l.b16 %v3536
    %v3623 = vunpack.c.h.b16 %v3536
    %v3624 = vunpack.c.l.b16 %v3537
    %v3625 = vunpack.c.h.b16 %v3537
    %v3626 = vunpack.c.l.b16 %v3538
    %v3627 = vunpack.c.h.b16 %v3538
    %v3628 = vunpack.c.l.b16 %v3539
    %v3629 = vunpack.c.h.b16 %v3539
    %v3630 = vunpack.c.l.b16 %v3540
    %v3631 = vunpack.c.h.b16 %v3540
    %v3632 = vunpack.c.l.b16 %v3541
    %v3633 = vunpack.c.h.b16 %v3541
    %v3634 = vunpack.c.l.b16 %v3542
    %v3635 = vunpack.c.h.b16 %v3542
    %v3636 = vunpack.c.l.b16 %v3543
    %v3637 = vunpack.c.h.b16 %v3543
    %v3638 = vunpack.c.l.b16 %v3544
    %v3639 = vunpack.c.h.b16 %v3544
    %v3640 = vunpack.c.l.b16 %v3545
    %v3641 = vunpack.c.h.b16 %v3545
    %v3642 = vunpack.c.l.b16 %v3546
    %v3643 = vunpack.c.h.b16 %v3546
    %v3644 = vunpack.c.l.b16 %v3547
    %v3645 = vunpack.c.h.b16 %v3547
    %v3646 = vunpack.c.l.b16 %v3548
    %v3647 = vunpack.c.h.b16 %v3548
    %v3648 = vunpack.c.l.b16 %v3549
    %v3649 = vunpack.c.h.b16 %v3549
    %v3650 = vunpack.c.l.b16 %v3550
    %v3651 = vunpack.c.h.b16 %v3550
    %v3652 = vunpack.c.l.b16 %v3551
    %v3653 = vunpack.c.h.b16 %v3551
    %v3654 = vunpack.c.l.b16 %v3552
    %v3655 = vunpack.c.h.b16 %v3552
    %v3656 = vunpack.c.l.b16 %v3553
    %v3657 = vunpack.c.h.b16 %v3553
    %v3658 = vunpack.c.l.b16 %v3554
    %v3659 = vunpack.c.h.b16 %v3554
    %v3660 = vunpack.c.l.b16 %v3555
    %v3661 = vunpack.c.h.b16 %v3555
    %v3662 = vunpack.c.l.b16 %v3556
    %v3663 = vunpack.c.h.b16 %v3556
    %v3664 = vunpack.c.l.b16 %v3557
    %v3665 = vunpack.c.h.b16 %v3557
    %v3666 = vunpack.c.l.b16 %v3558
    %v3667 = vunpack.c.h.b16 %v3558
    %v3668 = vunpack.c.l.b16 %v3559
    %v3669 = vunpack.c.h.b16 %v3559
    %v3670 = vunpack.c.l.b16 %v3560
    %v3671 = vunpack.c.h.b16 %v3560
    %v3672 = vunpack.c.l.b16 %v3561
    %v3673 = vunpack.c.h.b16 %v3561
    %v3674 = vunpack.c.l.b16 %v3562
    %v3675 = vunpack.c.h.b16 %v3562
    %v3676 = vunpack.c.l.b16 %v3563
    %v3677 = vunpack.c.h.b16 %v3563
    %v3678 = vunpack.c.l.b16 %v3564
    %v3679 = vunpack.c.h.b16 %v3564
    %v3680 = vunpack.c.l.b16 %v3565
    %v3681 = vunpack.c.h.b16 %v3565
    %v3682 = vunpack.c.l.b16 %v3566
    %v3683 = vunpack.c.h.b16 %v3566
    %v3684 = vunpack.c.l.b16 %v3567
    %v3685 = vunpack.c.h.b16 %v3567
    %v3686 = vunpack.c.l.b16 %v3568
    %v3687 = vunpack.c.h.b16 %v3568
    %v3688 = vunpack.c.l.b16 %v3569
    %v3689 = vunpack.c.h.b16 %v3569
    %v3690 = vunpack.c.l.b16 %v3570
    %v3691 = vunpack.c.h.b16 %v3570
    %v3692 = vunpack.c.l.b16 %v3571
    %v3693 = vunpack.c.h.b16 %v3571
    %v3694 = vunpack.c.l.b16 %v3572
    %v3695 = vunpack.c.h.b16 %v3572
    %v3696 = vpack.c.b16 %v3618, %v3616
    %v3697 = vpack.c.b16 %v3619, %v3617
    %v3698 = vpack.c.b16 %v3622, %v3620
    %v3699 = vpack.c.b16 %v3623, %v3621
    %v3700 = vpack.c.b16 %v3626, %v3624
    %v3701 = vpack.c.b16 %v3627, %v3625
    %v3702 = vpack.c.b16 %v3630, %v3628
    %v3703 = vpack.c.b16 %v3631, %v3629
    %v3704 = vpack.c.b16 %v3634, %v3632
    %v3705 = vpack.c.b16 %v3635, %v3633
    %v3706 = vpack.c.b16 %v3638, %v3636
    %v3707 = vpack.c.b16 %v3639, %v3637
    %v3708 = vpack.c.b16 %v3642, %v3640
    %v3709 = vpack.c.b16 %v3643, %v3641
    %v3710 = vpack.c.b16 %v3646, %v3644
    %v3711 = vpack.c.b16 %v3647, %v3645
    %v3712 = vpack.c.b16 %v3650, %v3648
    %v3713 = vpack.c.b16 %v3651, %v3649
    %v3714 = vpack.c.b16 %v3654, %v3652
    %v3715 = vpack.c.b16 %v3655, %v3653
    %v3716 = vpack.c.b16 %v3658, %v3656
    %v3717 = vpack.c.b16 %v3659, %v3657
    %v3718 = vpack.c.b16 %v3662, %v3660
    %v3719 = vpack.c.b16 %v3663, %v3661
    %v3720 = vpack.c.b16 %v3666, %v3664
    %v3721 = vpack.c.b16 %v3667, %v3665
    %v3722 = vpack.c.b16 %v3670, %v3668
    %v3723 = vpack.c.b16 %v3671, %v3669
    %v3724 = vpack.c.b16 %v3674, %v3672
    %v3725 = vpack.c.b16 %v3675, %v3673
    %v3726 = vpack.c.b16 %v3678, %v3676
    %v3727 = vpack.c.b16 %v3679, %v3677
    %v3728 = vpack.c.b16 %v3682, %v3680
    %v3729 = vpack.c.b16 %v3683, %v3681
    %v3730 = vpack.c.b16 %v3686, %v3684
    %v3731 = vpack.c.b16 %v3687, %v3685
    %v3732 = vpack.c.b16 %v3690, %v3688
    %v3733 = vpack.c.b16 %v3691, %v3689
    %v3734 = vpack.c.b16 %v3694, %v3692
    %v3735 = vpack.c.b16 %v3695, %v3693
    %v3777 = vsel %vm435, %v3575, 0
    %3779 = vmatprep.subr.bf16.mxu0 %v3711
    %3780 = vmatpush1.bf16.msra.mxu0 %v3710
    %3781 = vmatprep.subr.bf16.mxu0 %v3709
    %3782 = vmatpush1.bf16.msra.mxu0 %v3708
    %3783 = vmatprep.subr.bf16.mxu0 %v3707
    %3784 = vmatpush1.bf16.msra.mxu0 %v3706
    %3785 = vmatprep.subr.bf16.mxu0 %v3705
    %3786 = vmatpush1.bf16.msra.mxu0 %v3704
    %3787 = vmatprep.subr.bf16.mxu0 %v3703
    %3788 = vmatpush1.bf16.msra.mxu0 %v3702
    %3789 = vmatprep.subr.bf16.mxu0 %v3701
    %3790 = vmatpush1.bf16.msra.mxu0 %v3700
    %3791 = vmatprep.subr.bf16.mxu0 %v3699
    %3792 = vmatpush1.bf16.msra.mxu0 %v3698
    %3793 = vmatprep.subr.bf16.mxu0 %v3697
    %3794 = vmatpush1.bf16.msra.mxu0 %v3696
    %3795 = vmatprep.subr.bf16.mxu0 %v3727
    %3796 = vmatpush2.bf16.msra.mxu0 %v3726
    %3797 = vmatprep.subr.bf16.mxu0 %v3725
    %3798 = vmatpush2.bf16.msra.mxu0 %v3724
    %3799 = vmatprep.subr.bf16.mxu0 %v3723
    %3800 = vmatpush2.bf16.msra.mxu0 %v3722
    %3801 = vmatprep.subr.bf16.mxu0 %v3721
    %3802 = vmatpush2.bf16.msra.mxu0 %v3720
    %3803 = vmatprep.subr.bf16.mxu0 %v3719
    %3804 = vmatpush2.bf16.msra.mxu0 %v3718
    %3805 = vmatprep.subr.bf16.mxu0 %v3717
    %3806 = vmatpush2.bf16.msra.mxu0 %v3716
    %3807 = vmatprep.subr.bf16.mxu0 %v3715
    %3808 = vmatpush2.bf16.msra.mxu0 %v3714
    %3809 = vmatprep.subr.bf16.mxu0 %v3713
    %3810 = vmatpush2.bf16.msra.mxu0 %v3712
    %3811 = vmatprep.mubr.bf16.mxu0 %v3574
    %3812 = vmatmul.mubr.bf16.gmra.mxu0 %v3573
    %v3813 = vpop.f32.mrf.mxu0
    %v3814 = vadd.f32 0.0, %v3813
    %v3815 = vpop.f32.mrf.mxu0
    %v3816 = vadd.f32 0.0, %v3815
    %v3817 = vpop.f32.mrf.mxu0
    %v3818 = vadd.f32 0.0, %v3817
    %v3819 = vpop.f32.mrf.mxu0
    %v3820 = vadd.f32 0.0, %v3819
    %3821 = vdwg.mxu0
    %3822 = vmatprep.subr.bf16.mxu0 0
    %3823 = vmatpush1.bf16.msra.mxu0 0
    %3824 = vmatprep.subr.bf16.mxu0 0
    %3825 = vmatpush1.bf16.msra.mxu0 0
    %3826 = vmatprep.subr.bf16.mxu0 0
    %3827 = vmatpush1.bf16.msra.mxu0 0
    %3828 = vmatprep.subr.bf16.mxu0 0
    %3829 = vmatpush1.bf16.msra.mxu0 0
    %3830 = vmatprep.subr.bf16.mxu0 %v3735
    %3831 = vmatpush1.bf16.msra.mxu0 %v3734
    %3832 = vmatprep.subr.bf16.mxu0 %v3733
    %3833 = vmatpush1.bf16.msra.mxu0 %v3732
    %3834 = vmatprep.subr.bf16.mxu0 %v3731
    %3835 = vmatpush1.bf16.msra.mxu0 %v3730
    %3836 = vmatprep.subr.bf16.mxu0 %v3729
    %3837 = vmatpush1.bf16.msra.mxu0 %v3728
    %3838 = vmatprep.subr.bf16.mxu0 0
    %3839 = vmatpush2.bf16.msra.mxu0 0
    %3840 = vmatprep.subr.bf16.mxu0 0
    %3841 = vmatpush2.bf16.msra.mxu0 0
    %3842 = vmatprep.subr.bf16.mxu0 0
    %3843 = vmatpush2.bf16.msra.mxu0 0
    %3844 = vmatprep.subr.bf16.mxu0 0
    %3845 = vmatpush2.bf16.msra.mxu0 0
    %3846 = vmatprep.subr.bf16.mxu0 0
    %3847 = vmatpush2.bf16.msra.mxu0 0
    %3848 = vmatprep.subr.bf16.mxu0 0
    %3849 = vmatpush2.bf16.msra.mxu0 0
    %3850 = vmatprep.subr.bf16.mxu0 0
    %3851 = vmatpush2.bf16.msra.mxu0 0
    %3852 = vmatprep.subr.bf16.mxu0 0
    %3853 = vmatpush2.bf16.msra.mxu0 0
    %3854 = vmatprep.mubr.bf16.mxu0 0
    %3855 = vmatmul.mubr.bf16.gmra.mxu0 %v3777
    %v3856 = vpop.f32.mrf.mxu0
    %v3857 = vadd.f32 %v3814, %v3856
    %v3858 = vpop.f32.mrf.mxu0
    %v3859 = vadd.f32 %v3816, %v3858
    %v3860 = vpop.f32.mrf.mxu0
    %v3861 = vadd.f32 %v3818, %v3860
    %v3862 = vpop.f32.mrf.mxu0
    %v3863 = vadd.f32 %v3820, %v3862
    %3864 = vdwg.mxu0
    %v3865 = vadd.f32 %v3476, %v3857
    %v3866 = vadd.f32 %v3478, %v3859
    %v3867 = vadd.f32 %v3480, %v3861
    %v3868 = vadd.f32 %v3482, %v3863
    %v3870 = vlaneseq
    %v3871 = vshrl.u32 %v3870, 7
    %v3872 = vsub.s32 0, %v3871
    %v3873 = vrot.slane %v2763, %v3872
    %v3874 = vlaneseq
    %v3875 = vshrl.u32 %v3874, 7
    %v3876 = vsub.s32 1, %v3875
    %v3877 = vrot.slane %v2763, %v3876
    %v3880 = vadd.f32 %v3865, %v3873
    %v3881 = vadd.f32 %v3866, %v3877
    %v3882 = vadd.f32 %v3867, %v3873
    %v3883 = vadd.f32 %v3868, %v3877
    %v3884 = vmax.f32 %v3880, 0.0
    %v3885 = vmax.f32 %v3881, 0.0
    %v3886 = vmax.f32 %v3882, 0.0
    %v3887 = vmax.f32 %v3883, 0.0
    %v3892 = vrot.slane %v3884, 7
    %v3893 = vrot.slane %v3885, 7
    %v3894 = vrot.slane %v3886, 7
    %v3895 = vrot.slane %v3887, 7
    %3900 = vst [vmem:[#allocation3] sm:$0xfe] %v3892
    %3901 = vst [vmem:[#allocation3 + $0x8] sm:$0xfe] %v3893
    %3902 = vst [vmem:[#allocation3 + $0x18] sm:$0x1] %v3892
    %3903 = vst [vmem:[#allocation3 + $0x20] sm:$0x1] %v3893
    %3904 = vst [vmem:[#allocation3 + $0x30] sm:$0xfe] %v3894
    %3905 = vst [vmem:[#allocation3 + $0x38] sm:$0xfe] %v3895
    %3906 = vst [vmem:[#allocation3 + $0x48] sm:$0x1] %v3894
    %3907 = vst [vmem:[#allocation3 + $0x50] sm:$0x1] %v3895
    %s3908 = scalar_lea.vmem [#allocation11], 6
    %v3909 = vld [vmem:[%s3908] sm:$0x3]
    %v3910 = vld [vmem:[#allocation3] sm:$0xff]
    %v3911 = vld [vmem:[#allocation3 + $0x8] sm:$0xff]
    %v3912 = vld [vmem:[#allocation3 + $0x10] sm:$0xff]
    %v3913 = vld [vmem:[#allocation3 + $0x30] sm:$0xff]
    %v3914 = vld [vmem:[#allocation3 + $0x38] sm:$0xff]
    %v3915 = vld [vmem:[#allocation3 + $0x40] sm:$0xff]
    %s3916 = scalar_lea.vmem [#allocation10], 2880
    %v3917 = vld [vmem:[%s3916] sm:$0xff]
    %v3918 = vld [vmem:[%s3916 + $0x8] sm:$0xff]
    %v3919 = vld [vmem:[%s3916 + $0x10] sm:$0xff]
    %v3920 = vld [vmem:[%s3916 + $0x18] sm:$0xff]
    %v3921 = vld [vmem:[%s3916 + $0x20] sm:$0xff]
    %v3922 = vld [vmem:[%s3916 + $0x28] sm:$0xff]
    %v3923 = vld [vmem:[%s3916 + $0x30] sm:$0xff]
    %v3924 = vld [vmem:[%s3916 + $0x38] sm:$0xff]
    %v3925 = vld [vmem:[%s3916 + $0x40] sm:$0xff]
    %v3926 = vld [vmem:[%s3916 + $0x48] sm:$0xff]
    %v3927 = vld [vmem:[%s3916 + $0x50] sm:$0xff]
    %v3928 = vld [vmem:[%s3916 + $0x58] sm:$0xff]
    %v3929 = vld [vmem:[%s3916 + $0x60] sm:$0xff]
    %v3930 = vld [vmem:[%s3916 + $0x68] sm:$0xff]
    %v3931 = vld [vmem:[%s3916 + $0x70] sm:$0xff]
    %v3932 = vld [vmem:[%s3916 + $0x78] sm:$0xff]
    %v3933 = vld [vmem:[%s3916 + $0x80] sm:$0xff]
    %v3934 = vld [vmem:[%s3916 + $0x88] sm:$0xff]
    %v3935 = vld [vmem:[%s3916 + $0x90] sm:$0xff]
    %v3936 = vld [vmem:[%s3916 + $0x98] sm:$0xff]
    %v3937 = vld [vmem:[%s3916 + $0xa0] sm:$0xff]
    %v3938 = vld [vmem:[%s3916 + $0xa8] sm:$0xff]
    %v3939 = vld [vmem:[%s3916 + $0xb0] sm:$0xff]
    %v3940 = vld [vmem:[%s3916 + $0xb8] sm:$0xff]
    %v3941 = vld [vmem:[%s3916 + $0xc0] sm:$0xff]
    %v3942 = vld [vmem:[%s3916 + $0xc8] sm:$0xff]
    %v3943 = vld [vmem:[%s3916 + $0xd0] sm:$0xff]
    %v3944 = vld [vmem:[%s3916 + $0xd8] sm:$0xff]
    %v3945 = vld [vmem:[%s3916 + $0xe0] sm:$0xff]
    %v3946 = vld [vmem:[%s3916 + $0xe8] sm:$0xff]
    %v3947 = vld [vmem:[%s3916 + $0xf0] sm:$0xff]
    %v3948 = vld [vmem:[%s3916 + $0xf8] sm:$0xff]
    %v3949 = vld [vmem:[%s3916 + $0x100] sm:$0xff]
    %v3950 = vld [vmem:[%s3916 + $0x108] sm:$0xff]
    %v3951 = vld [vmem:[%s3916 + $0x110] sm:$0xff]
    %v3952 = vld [vmem:[%s3916 + $0x118] sm:$0xff]
    %v3953 = vld [vmem:[%s3916 + $0x120] sm:$0xff]
    %v3954 = vld [vmem:[%s3916 + $0x128] sm:$0xff]
    %v3955 = vld [vmem:[%s3916 + $0x130] sm:$0xff]
    %v3956 = vld [vmem:[%s3916 + $0x138] sm:$0xff]
    %v3957 = vpack.c.bf16 %v3913, %v3910
    %v3958 = vpack.c.bf16 %v3914, %v3911
    %v3959 = vpack.c.bf16 %v3915, %v3912
    %v3960 = vld [vmem:[#allocation3] sm:$0xfe]
    %v3961 = vld [vmem:[#allocation3 + $0x8] sm:$0xfe]
    %v3962 = vld [vmem:[#allocation3 + $0x10] sm:$0xfe]
    %v3963 = vld [vmem:[#allocation3 + $0x18] sm:$0x1]
    %v3964 = vld [vmem:[#allocation3 + $0x20] sm:$0x1]
    %v3965 = vld [vmem:[#allocation3 + $0x28] sm:$0x1]
    %v3966 = vld [vmem:[#allocation3 + $0x30] sm:$0xfe]
    %v3967 = vld [vmem:[#allocation3 + $0x38] sm:$0xfe]
    %v3968 = vld [vmem:[#allocation3 + $0x40] sm:$0xfe]
    %v3969 = vld [vmem:[#allocation3 + $0x48] sm:$0x1]
    %v3970 = vld [vmem:[#allocation3 + $0x50] sm:$0x1]
    %v3971 = vld [vmem:[#allocation3 + $0x58] sm:$0x1]
    %v3984 = vrot.slane %v3960, 1
    %v3985 = vrot.slane %v3963, 1
    %v3986 = vsel %vm212, %v3984, %v3985
    %v3987 = vrot.slane %v3961, 1
    %v3988 = vrot.slane %v3964, 1
    %v3989 = vsel %vm212, %v3987, %v3988
    %v3990 = vrot.slane %v3962, 1
    %v3991 = vrot.slane %v3965, 1
    %v3992 = vsel %vm212, %v3990, %v3991
    %v3993 = vrot.slane %v3966, 1
    %v3994 = vrot.slane %v3969, 1
    %v3995 = vsel %vm212, %v3993, %v3994
    %v3996 = vrot.slane %v3967, 1
    %v3997 = vrot.slane %v3970, 1
    %v3998 = vsel %vm212, %v3996, %v3997
    %v3999 = vrot.slane %v3968, 1
    %v4000 = vrot.slane %v3971, 1
    %v4001 = vsel %vm212, %v3999, %v4000
    %s4008 = scalar_lea.vmem [#allocation10], 3200
    %v4009 = vld [vmem:[%s4008] sm:$0xff]
    %v4010 = vld [vmem:[%s4008 + $0x8] sm:$0xff]
    %v4011 = vld [vmem:[%s4008 + $0x10] sm:$0xff]
    %v4012 = vld [vmem:[%s4008 + $0x18] sm:$0xff]
    %v4013 = vld [vmem:[%s4008 + $0x20] sm:$0xff]
    %v4014 = vld [vmem:[%s4008 + $0x28] sm:$0xff]
    %v4015 = vld [vmem:[%s4008 + $0x30] sm:$0xff]
    %v4016 = vld [vmem:[%s4008 + $0x38] sm:$0xff]
    %v4017 = vld [vmem:[%s4008 + $0x40] sm:$0xff]
    %v4018 = vld [vmem:[%s4008 + $0x48] sm:$0xff]
    %v4019 = vld [vmem:[%s4008 + $0x50] sm:$0xff]
    %v4020 = vld [vmem:[%s4008 + $0x58] sm:$0xff]
    %v4021 = vld [vmem:[%s4008 + $0x60] sm:$0xff]
    %v4022 = vld [vmem:[%s4008 + $0x68] sm:$0xff]
    %v4023 = vld [vmem:[%s4008 + $0x70] sm:$0xff]
    %v4024 = vld [vmem:[%s4008 + $0x78] sm:$0xff]
    %v4025 = vld [vmem:[%s4008 + $0x80] sm:$0xff]
    %v4026 = vld [vmem:[%s4008 + $0x88] sm:$0xff]
    %v4027 = vld [vmem:[%s4008 + $0x90] sm:$0xff]
    %v4028 = vld [vmem:[%s4008 + $0x98] sm:$0xff]
    %v4029 = vld [vmem:[%s4008 + $0xa0] sm:$0xff]
    %v4030 = vld [vmem:[%s4008 + $0xa8] sm:$0xff]
    %v4031 = vld [vmem:[%s4008 + $0xb0] sm:$0xff]
    %v4032 = vld [vmem:[%s4008 + $0xb8] sm:$0xff]
    %v4033 = vld [vmem:[%s4008 + $0xc0] sm:$0xff]
    %v4034 = vld [vmem:[%s4008 + $0xc8] sm:$0xff]
    %v4035 = vld [vmem:[%s4008 + $0xd0] sm:$0xff]
    %v4036 = vld [vmem:[%s4008 + $0xd8] sm:$0xff]
    %v4037 = vld [vmem:[%s4008 + $0xe0] sm:$0xff]
    %v4038 = vld [vmem:[%s4008 + $0xe8] sm:$0xff]
    %v4039 = vld [vmem:[%s4008 + $0xf0] sm:$0xff]
    %v4040 = vld [vmem:[%s4008 + $0xf8] sm:$0xff]
    %v4041 = vld [vmem:[%s4008 + $0x100] sm:$0xff]
    %v4042 = vld [vmem:[%s4008 + $0x108] sm:$0xff]
    %v4043 = vld [vmem:[%s4008 + $0x110] sm:$0xff]
    %v4044 = vld [vmem:[%s4008 + $0x118] sm:$0xff]
    %v4045 = vld [vmem:[%s4008 + $0x120] sm:$0xff]
    %v4046 = vld [vmem:[%s4008 + $0x128] sm:$0xff]
    %v4047 = vld [vmem:[%s4008 + $0x130] sm:$0xff]
    %v4048 = vld [vmem:[%s4008 + $0x138] sm:$0xff]
    %v4049 = vpack.c.bf16 %v3995, %v3986
    %v4050 = vpack.c.bf16 %v3998, %v3989
    %v4051 = vpack.c.bf16 %v4001, %v3992
    %v4092 = vunpack.c.l.b16 %v4009
    %v4093 = vunpack.c.h.b16 %v4009
    %v4094 = vunpack.c.l.b16 %v4010
    %v4095 = vunpack.c.h.b16 %v4010
    %v4096 = vunpack.c.l.b16 %v4011
    %v4097 = vunpack.c.h.b16 %v4011
    %v4098 = vunpack.c.l.b16 %v4012
    %v4099 = vunpack.c.h.b16 %v4012
    %v4100 = vunpack.c.l.b16 %v4013
    %v4101 = vunpack.c.h.b16 %v4013
    %v4102 = vunpack.c.l.b16 %v4014
    %v4103 = vunpack.c.h.b16 %v4014
    %v4104 = vunpack.c.l.b16 %v4015
    %v4105 = vunpack.c.h.b16 %v4015
    %v4106 = vunpack.c.l.b16 %v4016
    %v4107 = vunpack.c.h.b16 %v4016
    %v4108 = vunpack.c.l.b16 %v4017
    %v4109 = vunpack.c.h.b16 %v4017
    %v4110 = vunpack.c.l.b16 %v4018
    %v4111 = vunpack.c.h.b16 %v4018
    %v4112 = vunpack.c.l.b16 %v4019
    %v4113 = vunpack.c.h.b16 %v4019
    %v4114 = vunpack.c.l.b16 %v4020
    %v4115 = vunpack.c.h.b16 %v4020
    %v4116 = vunpack.c.l.b16 %v4021
    %v4117 = vunpack.c.h.b16 %v4021
    %v4118 = vunpack.c.l.b16 %v4022
    %v4119 = vunpack.c.h.b16 %v4022
    %v4120 = vunpack.c.l.b16 %v4023
    %v4121 = vunpack.c.h.b16 %v4023
    %v4122 = vunpack.c.l.b16 %v4024
    %v4123 = vunpack.c.h.b16 %v4024
    %v4124 = vunpack.c.l.b16 %v4025
    %v4125 = vunpack.c.h.b16 %v4025
    %v4126 = vunpack.c.l.b16 %v4026
    %v4127 = vunpack.c.h.b16 %v4026
    %v4128 = vunpack.c.l.b16 %v4027
    %v4129 = vunpack.c.h.b16 %v4027
    %v4130 = vunpack.c.l.b16 %v4028
    %v4131 = vunpack.c.h.b16 %v4028
    %v4132 = vunpack.c.l.b16 %v4029
    %v4133 = vunpack.c.h.b16 %v4029
    %v4134 = vunpack.c.l.b16 %v4030
    %v4135 = vunpack.c.h.b16 %v4030
    %v4136 = vunpack.c.l.b16 %v4031
    %v4137 = vunpack.c.h.b16 %v4031
    %v4138 = vunpack.c.l.b16 %v4032
    %v4139 = vunpack.c.h.b16 %v4032
    %v4140 = vunpack.c.l.b16 %v4033
    %v4141 = vunpack.c.h.b16 %v4033
    %v4142 = vunpack.c.l.b16 %v4034
    %v4143 = vunpack.c.h.b16 %v4034
    %v4144 = vunpack.c.l.b16 %v4035
    %v4145 = vunpack.c.h.b16 %v4035
    %v4146 = vunpack.c.l.b16 %v4036
    %v4147 = vunpack.c.h.b16 %v4036
    %v4148 = vunpack.c.l.b16 %v4037
    %v4149 = vunpack.c.h.b16 %v4037
    %v4150 = vunpack.c.l.b16 %v4038
    %v4151 = vunpack.c.h.b16 %v4038
    %v4152 = vunpack.c.l.b16 %v4039
    %v4153 = vunpack.c.h.b16 %v4039
    %v4154 = vunpack.c.l.b16 %v4040
    %v4155 = vunpack.c.h.b16 %v4040
    %v4156 = vunpack.c.l.b16 %v4041
    %v4157 = vunpack.c.h.b16 %v4041
    %v4158 = vunpack.c.l.b16 %v4042
    %v4159 = vunpack.c.h.b16 %v4042
    %v4160 = vunpack.c.l.b16 %v4043
    %v4161 = vunpack.c.h.b16 %v4043
    %v4162 = vunpack.c.l.b16 %v4044
    %v4163 = vunpack.c.h.b16 %v4044
    %v4164 = vunpack.c.l.b16 %v4045
    %v4165 = vunpack.c.h.b16 %v4045
    %v4166 = vunpack.c.l.b16 %v4046
    %v4167 = vunpack.c.h.b16 %v4046
    %v4168 = vunpack.c.l.b16 %v4047
    %v4169 = vunpack.c.h.b16 %v4047
    %v4170 = vunpack.c.l.b16 %v4048
    %v4171 = vunpack.c.h.b16 %v4048
    %v4172 = vpack.c.b16 %v4094, %v4092
    %v4173 = vpack.c.b16 %v4095, %v4093
    %v4174 = vpack.c.b16 %v4098, %v4096
    %v4175 = vpack.c.b16 %v4099, %v4097
    %v4176 = vpack.c.b16 %v4102, %v4100
    %v4177 = vpack.c.b16 %v4103, %v4101
    %v4178 = vpack.c.b16 %v4106, %v4104
    %v4179 = vpack.c.b16 %v4107, %v4105
    %v4180 = vpack.c.b16 %v4110, %v4108
    %v4181 = vpack.c.b16 %v4111, %v4109
    %v4182 = vpack.c.b16 %v4114, %v4112
    %v4183 = vpack.c.b16 %v4115, %v4113
    %v4184 = vpack.c.b16 %v4118, %v4116
    %v4185 = vpack.c.b16 %v4119, %v4117
    %v4186 = vpack.c.b16 %v4122, %v4120
    %v4187 = vpack.c.b16 %v4123, %v4121
    %v4188 = vpack.c.b16 %v4126, %v4124
    %v4189 = vpack.c.b16 %v4127, %v4125
    %v4190 = vpack.c.b16 %v4130, %v4128
    %v4191 = vpack.c.b16 %v4131, %v4129
    %v4192 = vpack.c.b16 %v4134, %v4132
    %v4193 = vpack.c.b16 %v4135, %v4133
    %v4194 = vpack.c.b16 %v4138, %v4136
    %v4195 = vpack.c.b16 %v4139, %v4137
    %v4196 = vpack.c.b16 %v4142, %v4140
    %v4197 = vpack.c.b16 %v4143, %v4141
    %v4198 = vpack.c.b16 %v4146, %v4144
    %v4199 = vpack.c.b16 %v4147, %v4145
    %v4200 = vpack.c.b16 %v4150, %v4148
    %v4201 = vpack.c.b16 %v4151, %v4149
    %v4202 = vpack.c.b16 %v4154, %v4152
    %v4203 = vpack.c.b16 %v4155, %v4153
    %v4204 = vpack.c.b16 %v4158, %v4156
    %v4205 = vpack.c.b16 %v4159, %v4157
    %v4206 = vpack.c.b16 %v4162, %v4160
    %v4207 = vpack.c.b16 %v4163, %v4161
    %v4208 = vpack.c.b16 %v4166, %v4164
    %v4209 = vpack.c.b16 %v4167, %v4165
    %v4210 = vpack.c.b16 %v4170, %v4168
    %v4211 = vpack.c.b16 %v4171, %v4169
    %v4253 = vsel %vm435, %v4051, 0
    %4255 = vmatprep.subr.bf16.mxu0 %v4187
    %4256 = vmatpush1.bf16.msra.mxu0 %v4186
    %4257 = vmatprep.subr.bf16.mxu0 %v4185
    %4258 = vmatpush1.bf16.msra.mxu0 %v4184
    %4259 = vmatprep.subr.bf16.mxu0 %v4183
    %4260 = vmatpush1.bf16.msra.mxu0 %v4182
    %4261 = vmatprep.subr.bf16.mxu0 %v4181
    %4262 = vmatpush1.bf16.msra.mxu0 %v4180
    %4263 = vmatprep.subr.bf16.mxu0 %v4179
    %4264 = vmatpush1.bf16.msra.mxu0 %v4178
    %4265 = vmatprep.subr.bf16.mxu0 %v4177
    %4266 = vmatpush1.bf16.msra.mxu0 %v4176
    %4267 = vmatprep.subr.bf16.mxu0 %v4175
    %4268 = vmatpush1.bf16.msra.mxu0 %v4174
    %4269 = vmatprep.subr.bf16.mxu0 %v4173
    %4270 = vmatpush1.bf16.msra.mxu0 %v4172
    %4271 = vmatprep.subr.bf16.mxu0 %v4203
    %4272 = vmatpush2.bf16.msra.mxu0 %v4202
    %4273 = vmatprep.subr.bf16.mxu0 %v4201
    %4274 = vmatpush2.bf16.msra.mxu0 %v4200
    %4275 = vmatprep.subr.bf16.mxu0 %v4199
    %4276 = vmatpush2.bf16.msra.mxu0 %v4198
    %4277 = vmatprep.subr.bf16.mxu0 %v4197
    %4278 = vmatpush2.bf16.msra.mxu0 %v4196
    %4279 = vmatprep.subr.bf16.mxu0 %v4195
    %4280 = vmatpush2.bf16.msra.mxu0 %v4194
    %4281 = vmatprep.subr.bf16.mxu0 %v4193
    %4282 = vmatpush2.bf16.msra.mxu0 %v4192
    %4283 = vmatprep.subr.bf16.mxu0 %v4191
    %4284 = vmatpush2.bf16.msra.mxu0 %v4190
    %4285 = vmatprep.subr.bf16.mxu0 %v4189
    %4286 = vmatpush2.bf16.msra.mxu0 %v4188
    %4287 = vmatprep.mubr.bf16.mxu0 %v4050
    %4288 = vmatmul.mubr.bf16.gmra.mxu0 %v4049
    %v4289 = vpop.f32.mrf.mxu0
    %v4290 = vadd.f32 0.0, %v4289
    %v4291 = vpop.f32.mrf.mxu0
    %v4292 = vadd.f32 0.0, %v4291
    %v4293 = vpop.f32.mrf.mxu0
    %v4294 = vadd.f32 0.0, %v4293
    %v4295 = vpop.f32.mrf.mxu0
    %v4296 = vadd.f32 0.0, %v4295
    %4297 = vdwg.mxu0
    %4298 = vmatprep.subr.bf16.mxu0 0
    %4299 = vmatpush1.bf16.msra.mxu0 0
    %4300 = vmatprep.subr.bf16.mxu0 0
    %4301 = vmatpush1.bf16.msra.mxu0 0
    %4302 = vmatprep.subr.bf16.mxu0 0
    %4303 = vmatpush1.bf16.msra.mxu0 0
    %4304 = vmatprep.subr.bf16.mxu0 0
    %4305 = vmatpush1.bf16.msra.mxu0 0
    %4306 = vmatprep.subr.bf16.mxu0 %v4211
    %4307 = vmatpush1.bf16.msra.mxu0 %v4210
    %4308 = vmatprep.subr.bf16.mxu0 %v4209
    %4309 = vmatpush1.bf16.msra.mxu0 %v4208
    %4310 = vmatprep.subr.bf16.mxu0 %v4207
    %4311 = vmatpush1.bf16.msra.mxu0 %v4206
    %4312 = vmatprep.subr.bf16.mxu0 %v4205
    %4313 = vmatpush1.bf16.msra.mxu0 %v4204
    %4314 = vmatprep.subr.bf16.mxu0 0
    %4315 = vmatpush2.bf16.msra.mxu0 0
    %4316 = vmatprep.subr.bf16.mxu0 0
    %4317 = vmatpush2.bf16.msra.mxu0 0
    %4318 = vmatprep.subr.bf16.mxu0 0
    %4319 = vmatpush2.bf16.msra.mxu0 0
    %4320 = vmatprep.subr.bf16.mxu0 0
    %4321 = vmatpush2.bf16.msra.mxu0 0
    %4322 = vmatprep.subr.bf16.mxu0 0
    %4323 = vmatpush2.bf16.msra.mxu0 0
    %4324 = vmatprep.subr.bf16.mxu0 0
    %4325 = vmatpush2.bf16.msra.mxu0 0
    %4326 = vmatprep.subr.bf16.mxu0 0
    %4327 = vmatpush2.bf16.msra.mxu0 0
    %4328 = vmatprep.subr.bf16.mxu0 0
    %4329 = vmatpush2.bf16.msra.mxu0 0
    %4330 = vmatprep.mubr.bf16.mxu0 0
    %4331 = vmatmul.mubr.bf16.gmra.mxu0 %v4253
    %v4332 = vpop.f32.mrf.mxu0
    %v4333 = vadd.f32 %v4290, %v4332
    %v4334 = vpop.f32.mrf.mxu0
    %v4335 = vadd.f32 %v4292, %v4334
    %v4336 = vpop.f32.mrf.mxu0
    %v4337 = vadd.f32 %v4294, %v4336
    %v4338 = vpop.f32.mrf.mxu0
    %v4339 = vadd.f32 %v4296, %v4338
    %4340 = vdwg.mxu0
    %v4381 = vunpack.c.l.b16 %v3917
    %v4382 = vunpack.c.h.b16 %v3917
    %v4383 = vunpack.c.l.b16 %v3918
    %v4384 = vunpack.c.h.b16 %v3918
    %v4385 = vunpack.c.l.b16 %v3919
    %v4386 = vunpack.c.h.b16 %v3919
    %v4387 = vunpack.c.l.b16 %v3920
    %v4388 = vunpack.c.h.b16 %v3920
    %v4389 = vunpack.c.l.b16 %v3921
    %v4390 = vunpack.c.h.b16 %v3921
    %v4391 = vunpack.c.l.b16 %v3922
    %v4392 = vunpack.c.h.b16 %v3922
    %v4393 = vunpack.c.l.b16 %v3923
    %v4394 = vunpack.c.h.b16 %v3923
    %v4395 = vunpack.c.l.b16 %v3924
    %v4396 = vunpack.c.h.b16 %v3924
    %v4397 = vunpack.c.l.b16 %v3925
    %v4398 = vunpack.c.h.b16 %v3925
    %v4399 = vunpack.c.l.b16 %v3926
    %v4400 = vunpack.c.h.b16 %v3926
    %v4401 = vunpack.c.l.b16 %v3927
    %v4402 = vunpack.c.h.b16 %v3927
    %v4403 = vunpack.c.l.b16 %v3928
    %v4404 = vunpack.c.h.b16 %v3928
    %v4405 = vunpack.c.l.b16 %v3929
    %v4406 = vunpack.c.h.b16 %v3929
    %v4407 = vunpack.c.l.b16 %v3930
    %v4408 = vunpack.c.h.b16 %v3930
    %v4409 = vunpack.c.l.b16 %v3931
    %v4410 = vunpack.c.h.b16 %v3931
    %v4411 = vunpack.c.l.b16 %v3932
    %v4412 = vunpack.c.h.b16 %v3932
    %v4413 = vunpack.c.l.b16 %v3933
    %v4414 = vunpack.c.h.b16 %v3933
    %v4415 = vunpack.c.l.b16 %v3934
    %v4416 = vunpack.c.h.b16 %v3934
    %v4417 = vunpack.c.l.b16 %v3935
    %v4418 = vunpack.c.h.b16 %v3935
    %v4419 = vunpack.c.l.b16 %v3936
    %v4420 = vunpack.c.h.b16 %v3936
    %v4421 = vunpack.c.l.b16 %v3937
    %v4422 = vunpack.c.h.b16 %v3937
    %v4423 = vunpack.c.l.b16 %v3938
    %v4424 = vunpack.c.h.b16 %v3938
    %v4425 = vunpack.c.l.b16 %v3939
    %v4426 = vunpack.c.h.b16 %v3939
    %v4427 = vunpack.c.l.b16 %v3940
    %v4428 = vunpack.c.h.b16 %v3940
    %v4429 = vunpack.c.l.b16 %v3941
    %v4430 = vunpack.c.h.b16 %v3941
    %v4431 = vunpack.c.l.b16 %v3942
    %v4432 = vunpack.c.h.b16 %v3942
    %v4433 = vunpack.c.l.b16 %v3943
    %v4434 = vunpack.c.h.b16 %v3943
    %v4435 = vunpack.c.l.b16 %v3944
    %v4436 = vunpack.c.h.b16 %v3944
    %v4437 = vunpack.c.l.b16 %v3945
    %v4438 = vunpack.c.h.b16 %v3945
    %v4439 = vunpack.c.l.b16 %v3946
    %v4440 = vunpack.c.h.b16 %v3946
    %v4441 = vunpack.c.l.b16 %v3947
    %v4442 = vunpack.c.h.b16 %v3947
    %v4443 = vunpack.c.l.b16 %v3948
    %v4444 = vunpack.c.h.b16 %v3948
    %v4445 = vunpack.c.l.b16 %v3949
    %v4446 = vunpack.c.h.b16 %v3949
    %v4447 = vunpack.c.l.b16 %v3950
    %v4448 = vunpack.c.h.b16 %v3950
    %v4449 = vunpack.c.l.b16 %v3951
    %v4450 = vunpack.c.h.b16 %v3951
    %v4451 = vunpack.c.l.b16 %v3952
    %v4452 = vunpack.c.h.b16 %v3952
    %v4453 = vunpack.c.l.b16 %v3953
    %v4454 = vunpack.c.h.b16 %v3953
    %v4455 = vunpack.c.l.b16 %v3954
    %v4456 = vunpack.c.h.b16 %v3954
    %v4457 = vunpack.c.l.b16 %v3955
    %v4458 = vunpack.c.h.b16 %v3955
    %v4459 = vunpack.c.l.b16 %v3956
    %v4460 = vunpack.c.h.b16 %v3956
    %v4461 = vpack.c.b16 %v4383, %v4381
    %v4462 = vpack.c.b16 %v4384, %v4382
    %v4463 = vpack.c.b16 %v4387, %v4385
    %v4464 = vpack.c.b16 %v4388, %v4386
    %v4465 = vpack.c.b16 %v4391, %v4389
    %v4466 = vpack.c.b16 %v4392, %v4390
    %v4467 = vpack.c.b16 %v4395, %v4393
    %v4468 = vpack.c.b16 %v4396, %v4394
    %v4469 = vpack.c.b16 %v4399, %v4397
    %v4470 = vpack.c.b16 %v4400, %v4398
    %v4471 = vpack.c.b16 %v4403, %v4401
    %v4472 = vpack.c.b16 %v4404, %v4402
    %v4473 = vpack.c.b16 %v4407, %v4405
    %v4474 = vpack.c.b16 %v4408, %v4406
    %v4475 = vpack.c.b16 %v4411, %v4409
    %v4476 = vpack.c.b16 %v4412, %v4410
    %v4477 = vpack.c.b16 %v4415, %v4413
    %v4478 = vpack.c.b16 %v4416, %v4414
    %v4479 = vpack.c.b16 %v4419, %v4417
    %v4480 = vpack.c.b16 %v4420, %v4418
    %v4481 = vpack.c.b16 %v4423, %v4421
    %v4482 = vpack.c.b16 %v4424, %v4422
    %v4483 = vpack.c.b16 %v4427, %v4425
    %v4484 = vpack.c.b16 %v4428, %v4426
    %v4485 = vpack.c.b16 %v4431, %v4429
    %v4486 = vpack.c.b16 %v4432, %v4430
    %v4487 = vpack.c.b16 %v4435, %v4433
    %v4488 = vpack.c.b16 %v4436, %v4434
    %v4489 = vpack.c.b16 %v4439, %v4437
    %v4490 = vpack.c.b16 %v4440, %v4438
    %v4491 = vpack.c.b16 %v4443, %v4441
    %v4492 = vpack.c.b16 %v4444, %v4442
    %v4493 = vpack.c.b16 %v4447, %v4445
    %v4494 = vpack.c.b16 %v4448, %v4446
    %v4495 = vpack.c.b16 %v4451, %v4449
    %v4496 = vpack.c.b16 %v4452, %v4450
    %v4497 = vpack.c.b16 %v4455, %v4453
    %v4498 = vpack.c.b16 %v4456, %v4454
    %v4499 = vpack.c.b16 %v4459, %v4457
    %v4500 = vpack.c.b16 %v4460, %v4458
    %v4542 = vsel %vm435, %v3959, 0
    %4544 = vmatprep.subr.bf16.mxu0 %v4476
    %4545 = vmatpush1.bf16.msra.mxu0 %v4475
    %4546 = vmatprep.subr.bf16.mxu0 %v4474
    %4547 = vmatpush1.bf16.msra.mxu0 %v4473
    %4548 = vmatprep.subr.bf16.mxu0 %v4472
    %4549 = vmatpush1.bf16.msra.mxu0 %v4471
    %4550 = vmatprep.subr.bf16.mxu0 %v4470
    %4551 = vmatpush1.bf16.msra.mxu0 %v4469
    %4552 = vmatprep.subr.bf16.mxu0 %v4468
    %4553 = vmatpush1.bf16.msra.mxu0 %v4467
    %4554 = vmatprep.subr.bf16.mxu0 %v4466
    %4555 = vmatpush1.bf16.msra.mxu0 %v4465
    %4556 = vmatprep.subr.bf16.mxu0 %v4464
    %4557 = vmatpush1.bf16.msra.mxu0 %v4463
    %4558 = vmatprep.subr.bf16.mxu0 %v4462
    %4559 = vmatpush1.bf16.msra.mxu0 %v4461
    %4560 = vmatprep.subr.bf16.mxu0 %v4492
    %4561 = vmatpush2.bf16.msra.mxu0 %v4491
    %4562 = vmatprep.subr.bf16.mxu0 %v4490
    %4563 = vmatpush2.bf16.msra.mxu0 %v4489
    %4564 = vmatprep.subr.bf16.mxu0 %v4488
    %4565 = vmatpush2.bf16.msra.mxu0 %v4487
    %4566 = vmatprep.subr.bf16.mxu0 %v4486
    %4567 = vmatpush2.bf16.msra.mxu0 %v4485
    %4568 = vmatprep.subr.bf16.mxu0 %v4484
    %4569 = vmatpush2.bf16.msra.mxu0 %v4483
    %4570 = vmatprep.subr.bf16.mxu0 %v4482
    %4571 = vmatpush2.bf16.msra.mxu0 %v4481
    %4572 = vmatprep.subr.bf16.mxu0 %v4480
    %4573 = vmatpush2.bf16.msra.mxu0 %v4479
    %4574 = vmatprep.subr.bf16.mxu0 %v4478
    %4575 = vmatpush2.bf16.msra.mxu0 %v4477
    %4576 = vmatprep.mubr.bf16.mxu0 %v3958
    %4577 = vmatmul.mubr.bf16.gmra.mxu0 %v3957
    %v4578 = vpop.f32.mrf.mxu0
    %v4579 = vadd.f32 %v4333, %v4578
    %v4580 = vpop.f32.mrf.mxu0
    %v4581 = vadd.f32 %v4335, %v4580
    %v4582 = vpop.f32.mrf.mxu0
    %v4583 = vadd.f32 %v4337, %v4582
    %v4584 = vpop.f32.mrf.mxu0
    %v4585 = vadd.f32 %v4339, %v4584
    %4586 = vdwg.mxu0
    %4587 = vmatprep.subr.bf16.mxu0 0
    %4588 = vmatpush1.bf16.msra.mxu0 0
    %4589 = vmatprep.subr.bf16.mxu0 0
    %4590 = vmatpush1.bf16.msra.mxu0 0
    %4591 = vmatprep.subr.bf16.mxu0 0
    %4592 = vmatpush1.bf16.msra.mxu0 0
    %4593 = vmatprep.subr.bf16.mxu0 0
    %4594 = vmatpush1.bf16.msra.mxu0 0
    %4595 = vmatprep.subr.bf16.mxu0 %v4500
    %4596 = vmatpush1.bf16.msra.mxu0 %v4499
    %4597 = vmatprep.subr.bf16.mxu0 %v4498
    %4598 = vmatpush1.bf16.msra.mxu0 %v4497
    %4599 = vmatprep.subr.bf16.mxu0 %v4496
    %4600 = vmatpush1.bf16.msra.mxu0 %v4495
    %4601 = vmatprep.subr.bf16.mxu0 %v4494
    %4602 = vmatpush1.bf16.msra.mxu0 %v4493
    %4603 = vmatprep.subr.bf16.mxu0 0
    %4604 = vmatpush2.bf16.msra.mxu0 0
    %4605 = vmatprep.subr.bf16.mxu0 0
    %4606 = vmatpush2.bf16.msra.mxu0 0
    %4607 = vmatprep.subr.bf16.mxu0 0
    %4608 = vmatpush2.bf16.msra.mxu0 0
    %4609 = vmatprep.subr.bf16.mxu0 0
    %4610 = vmatpush2.bf16.msra.mxu0 0
    %4611 = vmatprep.subr.bf16.mxu0 0
    %4612 = vmatpush2.bf16.msra.mxu0 0
    %4613 = vmatprep.subr.bf16.mxu0 0
    %4614 = vmatpush2.bf16.msra.mxu0 0
    %4615 = vmatprep.subr.bf16.mxu0 0
    %4616 = vmatpush2.bf16.msra.mxu0 0
    %4617 = vmatprep.subr.bf16.mxu0 0
    %4618 = vmatpush2.bf16.msra.mxu0 0
    %4619 = vmatprep.mubr.bf16.mxu0 0
    %4620 = vmatmul.mubr.bf16.gmra.mxu0 %v4542
    %v4621 = vpop.f32.mrf.mxu0
    %v4622 = vadd.f32 %v4579, %v4621
    %v4623 = vpop.f32.mrf.mxu0
    %v4624 = vadd.f32 %v4581, %v4623
    %v4625 = vpop.f32.mrf.mxu0
    %v4626 = vadd.f32 %v4583, %v4625
    %v4627 = vpop.f32.mrf.mxu0
    %v4628 = vadd.f32 %v4585, %v4627
    %4629 = vdwg.mxu0
    %v4630 = vld [vmem:[#allocation3] sm:$0xfc]
    %v4631 = vld [vmem:[#allocation3 + $0x8] sm:$0xfc]
    %v4632 = vld [vmem:[#allocation3 + $0x10] sm:$0xfc]
    %v4633 = vld [vmem:[#allocation3 + $0x18] sm:$0x3]
    %v4634 = vld [vmem:[#allocation3 + $0x20] sm:$0x3]
    %v4635 = vld [vmem:[#allocation3 + $0x28] sm:$0x3]
    %v4636 = vld [vmem:[#allocation3 + $0x30] sm:$0xfc]
    %v4637 = vld [vmem:[#allocation3 + $0x38] sm:$0xfc]
    %v4638 = vld [vmem:[#allocation3 + $0x40] sm:$0xfc]
    %v4639 = vld [vmem:[#allocation3 + $0x48] sm:$0x3]
    %v4640 = vld [vmem:[#allocation3 + $0x50] sm:$0x3]
    %v4641 = vld [vmem:[#allocation3 + $0x58] sm:$0x3]
    %v4654 = vrot.slane %v4630, 2
    %v4655 = vrot.slane %v4633, 2
    %v4656 = vsel %vm1211, %v4654, %v4655
    %v4657 = vrot.slane %v4631, 2
    %v4658 = vrot.slane %v4634, 2
    %v4659 = vsel %vm1211, %v4657, %v4658
    %v4660 = vrot.slane %v4632, 2
    %v4661 = vrot.slane %v4635, 2
    %v4662 = vsel %vm1211, %v4660, %v4661
    %v4663 = vrot.slane %v4636, 2
    %v4664 = vrot.slane %v4639, 2
    %v4665 = vsel %vm1211, %v4663, %v4664
    %v4666 = vrot.slane %v4637, 2
    %v4667 = vrot.slane %v4640, 2
    %v4668 = vsel %vm1211, %v4666, %v4667
    %v4669 = vrot.slane %v4638, 2
    %v4670 = vrot.slane %v4641, 2
    %v4671 = vsel %vm1211, %v4669, %v4670
    %s4678 = scalar_lea.vmem [#allocation10], 3520
    %v4679 = vld [vmem:[%s4678] sm:$0xff]
    %v4680 = vld [vmem:[%s4678 + $0x8] sm:$0xff]
    %v4681 = vld [vmem:[%s4678 + $0x10] sm:$0xff]
    %v4682 = vld [vmem:[%s4678 + $0x18] sm:$0xff]
    %v4683 = vld [vmem:[%s4678 + $0x20] sm:$0xff]
    %v4684 = vld [vmem:[%s4678 + $0x28] sm:$0xff]
    %v4685 = vld [vmem:[%s4678 + $0x30] sm:$0xff]
    %v4686 = vld [vmem:[%s4678 + $0x38] sm:$0xff]
    %v4687 = vld [vmem:[%s4678 + $0x40] sm:$0xff]
    %v4688 = vld [vmem:[%s4678 + $0x48] sm:$0xff]
    %v4689 = vld [vmem:[%s4678 + $0x50] sm:$0xff]
    %v4690 = vld [vmem:[%s4678 + $0x58] sm:$0xff]
    %v4691 = vld [vmem:[%s4678 + $0x60] sm:$0xff]
    %v4692 = vld [vmem:[%s4678 + $0x68] sm:$0xff]
    %v4693 = vld [vmem:[%s4678 + $0x70] sm:$0xff]
    %v4694 = vld [vmem:[%s4678 + $0x78] sm:$0xff]
    %v4695 = vld [vmem:[%s4678 + $0x80] sm:$0xff]
    %v4696 = vld [vmem:[%s4678 + $0x88] sm:$0xff]
    %v4697 = vld [vmem:[%s4678 + $0x90] sm:$0xff]
    %v4698 = vld [vmem:[%s4678 + $0x98] sm:$0xff]
    %v4699 = vld [vmem:[%s4678 + $0xa0] sm:$0xff]
    %v4700 = vld [vmem:[%s4678 + $0xa8] sm:$0xff]
    %v4701 = vld [vmem:[%s4678 + $0xb0] sm:$0xff]
    %v4702 = vld [vmem:[%s4678 + $0xb8] sm:$0xff]
    %v4703 = vld [vmem:[%s4678 + $0xc0] sm:$0xff]
    %v4704 = vld [vmem:[%s4678 + $0xc8] sm:$0xff]
    %v4705 = vld [vmem:[%s4678 + $0xd0] sm:$0xff]
    %v4706 = vld [vmem:[%s4678 + $0xd8] sm:$0xff]
    %v4707 = vld [vmem:[%s4678 + $0xe0] sm:$0xff]
    %v4708 = vld [vmem:[%s4678 + $0xe8] sm:$0xff]
    %v4709 = vld [vmem:[%s4678 + $0xf0] sm:$0xff]
    %v4710 = vld [vmem:[%s4678 + $0xf8] sm:$0xff]
    %v4711 = vld [vmem:[%s4678 + $0x100] sm:$0xff]
    %v4712 = vld [vmem:[%s4678 + $0x108] sm:$0xff]
    %v4713 = vld [vmem:[%s4678 + $0x110] sm:$0xff]
    %v4714 = vld [vmem:[%s4678 + $0x118] sm:$0xff]
    %v4715 = vld [vmem:[%s4678 + $0x120] sm:$0xff]
    %v4716 = vld [vmem:[%s4678 + $0x128] sm:$0xff]
    %v4717 = vld [vmem:[%s4678 + $0x130] sm:$0xff]
    %v4718 = vld [vmem:[%s4678 + $0x138] sm:$0xff]
    %v4719 = vpack.c.bf16 %v4665, %v4656
    %v4720 = vpack.c.bf16 %v4668, %v4659
    %v4721 = vpack.c.bf16 %v4671, %v4662
    %v4762 = vunpack.c.l.b16 %v4679
    %v4763 = vunpack.c.h.b16 %v4679
    %v4764 = vunpack.c.l.b16 %v4680
    %v4765 = vunpack.c.h.b16 %v4680
    %v4766 = vunpack.c.l.b16 %v4681
    %v4767 = vunpack.c.h.b16 %v4681
    %v4768 = vunpack.c.l.b16 %v4682
    %v4769 = vunpack.c.h.b16 %v4682
    %v4770 = vunpack.c.l.b16 %v4683
    %v4771 = vunpack.c.h.b16 %v4683
    %v4772 = vunpack.c.l.b16 %v4684
    %v4773 = vunpack.c.h.b16 %v4684
    %v4774 = vunpack.c.l.b16 %v4685
    %v4775 = vunpack.c.h.b16 %v4685
    %v4776 = vunpack.c.l.b16 %v4686
    %v4777 = vunpack.c.h.b16 %v4686
    %v4778 = vunpack.c.l.b16 %v4687
    %v4779 = vunpack.c.h.b16 %v4687
    %v4780 = vunpack.c.l.b16 %v4688
    %v4781 = vunpack.c.h.b16 %v4688
    %v4782 = vunpack.c.l.b16 %v4689
    %v4783 = vunpack.c.h.b16 %v4689
    %v4784 = vunpack.c.l.b16 %v4690
    %v4785 = vunpack.c.h.b16 %v4690
    %v4786 = vunpack.c.l.b16 %v4691
    %v4787 = vunpack.c.h.b16 %v4691
    %v4788 = vunpack.c.l.b16 %v4692
    %v4789 = vunpack.c.h.b16 %v4692
    %v4790 = vunpack.c.l.b16 %v4693
    %v4791 = vunpack.c.h.b16 %v4693
    %v4792 = vunpack.c.l.b16 %v4694
    %v4793 = vunpack.c.h.b16 %v4694
    %v4794 = vunpack.c.l.b16 %v4695
    %v4795 = vunpack.c.h.b16 %v4695
    %v4796 = vunpack.c.l.b16 %v4696
    %v4797 = vunpack.c.h.b16 %v4696
    %v4798 = vunpack.c.l.b16 %v4697
    %v4799 = vunpack.c.h.b16 %v4697
    %v4800 = vunpack.c.l.b16 %v4698
    %v4801 = vunpack.c.h.b16 %v4698
    %v4802 = vunpack.c.l.b16 %v4699
    %v4803 = vunpack.c.h.b16 %v4699
    %v4804 = vunpack.c.l.b16 %v4700
    %v4805 = vunpack.c.h.b16 %v4700
    %v4806 = vunpack.c.l.b16 %v4701
    %v4807 = vunpack.c.h.b16 %v4701
    %v4808 = vunpack.c.l.b16 %v4702
    %v4809 = vunpack.c.h.b16 %v4702
    %v4810 = vunpack.c.l.b16 %v4703
    %v4811 = vunpack.c.h.b16 %v4703
    %v4812 = vunpack.c.l.b16 %v4704
    %v4813 = vunpack.c.h.b16 %v4704
    %v4814 = vunpack.c.l.b16 %v4705
    %v4815 = vunpack.c.h.b16 %v4705
    %v4816 = vunpack.c.l.b16 %v4706
    %v4817 = vunpack.c.h.b16 %v4706
    %v4818 = vunpack.c.l.b16 %v4707
    %v4819 = vunpack.c.h.b16 %v4707
    %v4820 = vunpack.c.l.b16 %v4708
    %v4821 = vunpack.c.h.b16 %v4708
    %v4822 = vunpack.c.l.b16 %v4709
    %v4823 = vunpack.c.h.b16 %v4709
    %v4824 = vunpack.c.l.b16 %v4710
    %v4825 = vunpack.c.h.b16 %v4710
    %v4826 = vunpack.c.l.b16 %v4711
    %v4827 = vunpack.c.h.b16 %v4711
    %v4828 = vunpack.c.l.b16 %v4712
    %v4829 = vunpack.c.h.b16 %v4712
    %v4830 = vunpack.c.l.b16 %v4713
    %v4831 = vunpack.c.h.b16 %v4713
    %v4832 = vunpack.c.l.b16 %v4714
    %v4833 = vunpack.c.h.b16 %v4714
    %v4834 = vunpack.c.l.b16 %v4715
    %v4835 = vunpack.c.h.b16 %v4715
    %v4836 = vunpack.c.l.b16 %v4716
    %v4837 = vunpack.c.h.b16 %v4716
    %v4838 = vunpack.c.l.b16 %v4717
    %v4839 = vunpack.c.h.b16 %v4717
    %v4840 = vunpack.c.l.b16 %v4718
    %v4841 = vunpack.c.h.b16 %v4718
    %v4842 = vpack.c.b16 %v4764, %v4762
    %v4843 = vpack.c.b16 %v4765, %v4763
    %v4844 = vpack.c.b16 %v4768, %v4766
    %v4845 = vpack.c.b16 %v4769, %v4767
    %v4846 = vpack.c.b16 %v4772, %v4770
    %v4847 = vpack.c.b16 %v4773, %v4771
    %v4848 = vpack.c.b16 %v4776, %v4774
    %v4849 = vpack.c.b16 %v4777, %v4775
    %v4850 = vpack.c.b16 %v4780, %v4778
    %v4851 = vpack.c.b16 %v4781, %v4779
    %v4852 = vpack.c.b16 %v4784, %v4782
    %v4853 = vpack.c.b16 %v4785, %v4783
    %v4854 = vpack.c.b16 %v4788, %v4786
    %v4855 = vpack.c.b16 %v4789, %v4787
    %v4856 = vpack.c.b16 %v4792, %v4790
    %v4857 = vpack.c.b16 %v4793, %v4791
    %v4858 = vpack.c.b16 %v4796, %v4794
    %v4859 = vpack.c.b16 %v4797, %v4795
    %v4860 = vpack.c.b16 %v4800, %v4798
    %v4861 = vpack.c.b16 %v4801, %v4799
    %v4862 = vpack.c.b16 %v4804, %v4802
    %v4863 = vpack.c.b16 %v4805, %v4803
    %v4864 = vpack.c.b16 %v4808, %v4806
    %v4865 = vpack.c.b16 %v4809, %v4807
    %v4866 = vpack.c.b16 %v4812, %v4810
    %v4867 = vpack.c.b16 %v4813, %v4811
    %v4868 = vpack.c.b16 %v4816, %v4814
    %v4869 = vpack.c.b16 %v4817, %v4815
    %v4870 = vpack.c.b16 %v4820, %v4818
    %v4871 = vpack.c.b16 %v4821, %v4819
    %v4872 = vpack.c.b16 %v4824, %v4822
    %v4873 = vpack.c.b16 %v4825, %v4823
    %v4874 = vpack.c.b16 %v4828, %v4826
    %v4875 = vpack.c.b16 %v4829, %v4827
    %v4876 = vpack.c.b16 %v4832, %v4830
    %v4877 = vpack.c.b16 %v4833, %v4831
    %v4878 = vpack.c.b16 %v4836, %v4834
    %v4879 = vpack.c.b16 %v4837, %v4835
    %v4880 = vpack.c.b16 %v4840, %v4838
    %v4881 = vpack.c.b16 %v4841, %v4839
    %v4923 = vsel %vm435, %v4721, 0
    %4925 = vmatprep.subr.bf16.mxu0 %v4857
    %4926 = vmatpush1.bf16.msra.mxu0 %v4856
    %4927 = vmatprep.subr.bf16.mxu0 %v4855
    %4928 = vmatpush1.bf16.msra.mxu0 %v4854
    %4929 = vmatprep.subr.bf16.mxu0 %v4853
    %4930 = vmatpush1.bf16.msra.mxu0 %v4852
    %4931 = vmatprep.subr.bf16.mxu0 %v4851
    %4932 = vmatpush1.bf16.msra.mxu0 %v4850
    %4933 = vmatprep.subr.bf16.mxu0 %v4849
    %4934 = vmatpush1.bf16.msra.mxu0 %v4848
    %4935 = vmatprep.subr.bf16.mxu0 %v4847
    %4936 = vmatpush1.bf16.msra.mxu0 %v4846
    %4937 = vmatprep.subr.bf16.mxu0 %v4845
    %4938 = vmatpush1.bf16.msra.mxu0 %v4844
    %4939 = vmatprep.subr.bf16.mxu0 %v4843
    %4940 = vmatpush1.bf16.msra.mxu0 %v4842
    %4941 = vmatprep.subr.bf16.mxu0 %v4873
    %4942 = vmatpush2.bf16.msra.mxu0 %v4872
    %4943 = vmatprep.subr.bf16.mxu0 %v4871
    %4944 = vmatpush2.bf16.msra.mxu0 %v4870
    %4945 = vmatprep.subr.bf16.mxu0 %v4869
    %4946 = vmatpush2.bf16.msra.mxu0 %v4868
    %4947 = vmatprep.subr.bf16.mxu0 %v4867
    %4948 = vmatpush2.bf16.msra.mxu0 %v4866
    %4949 = vmatprep.subr.bf16.mxu0 %v4865
    %4950 = vmatpush2.bf16.msra.mxu0 %v4864
    %4951 = vmatprep.subr.bf16.mxu0 %v4863
    %4952 = vmatpush2.bf16.msra.mxu0 %v4862
    %4953 = vmatprep.subr.bf16.mxu0 %v4861
    %4954 = vmatpush2.bf16.msra.mxu0 %v4860
    %4955 = vmatprep.subr.bf16.mxu0 %v4859
    %4956 = vmatpush2.bf16.msra.mxu0 %v4858
    %4957 = vmatprep.mubr.bf16.mxu0 %v4720
    %4958 = vmatmul.mubr.bf16.gmra.mxu0 %v4719
    %v4959 = vpop.f32.mrf.mxu0
    %v4960 = vadd.f32 0.0, %v4959
    %v4961 = vpop.f32.mrf.mxu0
    %v4962 = vadd.f32 0.0, %v4961
    %v4963 = vpop.f32.mrf.mxu0
    %v4964 = vadd.f32 0.0, %v4963
    %v4965 = vpop.f32.mrf.mxu0
    %v4966 = vadd.f32 0.0, %v4965
    %4967 = vdwg.mxu0
    %4968 = vmatprep.subr.bf16.mxu0 0
    %4969 = vmatpush1.bf16.msra.mxu0 0
    %4970 = vmatprep.subr.bf16.mxu0 0
    %4971 = vmatpush1.bf16.msra.mxu0 0
    %4972 = vmatprep.subr.bf16.mxu0 0
    %4973 = vmatpush1.bf16.msra.mxu0 0
    %4974 = vmatprep.subr.bf16.mxu0 0
    %4975 = vmatpush1.bf16.msra.mxu0 0
    %4976 = vmatprep.subr.bf16.mxu0 %v4881
    %4977 = vmatpush1.bf16.msra.mxu0 %v4880
    %4978 = vmatprep.subr.bf16.mxu0 %v4879
    %4979 = vmatpush1.bf16.msra.mxu0 %v4878
    %4980 = vmatprep.subr.bf16.mxu0 %v4877
    %4981 = vmatpush1.bf16.msra.mxu0 %v4876
    %4982 = vmatprep.subr.bf16.mxu0 %v4875
    %4983 = vmatpush1.bf16.msra.mxu0 %v4874
    %4984 = vmatprep.subr.bf16.mxu0 0
    %4985 = vmatpush2.bf16.msra.mxu0 0
    %4986 = vmatprep.subr.bf16.mxu0 0
    %4987 = vmatpush2.bf16.msra.mxu0 0
    %4988 = vmatprep.subr.bf16.mxu0 0
    %4989 = vmatpush2.bf16.msra.mxu0 0
    %4990 = vmatprep.subr.bf16.mxu0 0
    %4991 = vmatpush2.bf16.msra.mxu0 0
    %4992 = vmatprep.subr.bf16.mxu0 0
    %4993 = vmatpush2.bf16.msra.mxu0 0
    %4994 = vmatprep.subr.bf16.mxu0 0
    %4995 = vmatpush2.bf16.msra.mxu0 0
    %4996 = vmatprep.subr.bf16.mxu0 0
    %4997 = vmatpush2.bf16.msra.mxu0 0
    %4998 = vmatprep.subr.bf16.mxu0 0
    %4999 = vmatpush2.bf16.msra.mxu0 0
    %5000 = vmatprep.mubr.bf16.mxu0 0
    %5001 = vmatmul.mubr.bf16.gmra.mxu0 %v4923
    %v5002 = vpop.f32.mrf.mxu0
    %v5003 = vadd.f32 %v4960, %v5002
    %v5004 = vpop.f32.mrf.mxu0
    %v5005 = vadd.f32 %v4962, %v5004
    %v5006 = vpop.f32.mrf.mxu0
    %v5007 = vadd.f32 %v4964, %v5006
    %v5008 = vpop.f32.mrf.mxu0
    %v5009 = vadd.f32 %v4966, %v5008
    %5010 = vdwg.mxu0
    %v5011 = vadd.f32 %v4622, %v5003
    %v5012 = vadd.f32 %v4624, %v5005
    %v5013 = vadd.f32 %v4626, %v5007
    %v5014 = vadd.f32 %v4628, %v5009
    %v5016 = vlaneseq
    %v5017 = vshrl.u32 %v5016, 7
    %v5018 = vsub.s32 0, %v5017
    %v5019 = vrot.slane %v3909, %v5018
    %v5020 = vlaneseq
    %v5021 = vshrl.u32 %v5020, 7
    %v5022 = vsub.s32 1, %v5021
    %v5023 = vrot.slane %v3909, %v5022
    %v5026 = vadd.f32 %v5011, %v5019
    %v5027 = vadd.f32 %v5012, %v5023
    %v5028 = vadd.f32 %v5013, %v5019
    %v5029 = vadd.f32 %v5014, %v5023
    %v5030 = vadd.f32 %v5026, %v2738
    %v5031 = vadd.f32 %v5027, %v2739
    %v5032 = vadd.f32 %v5028, %v2740
    %v5033 = vadd.f32 %v5029, %v2741
    %v5034 = vmax.f32 %v5030, 0.0
    %v5035 = vmax.f32 %v5031, 0.0
    %v5036 = vmax.f32 %v5032, 0.0
    %v5037 = vmax.f32 %v5033, 0.0
    %v5038 = vld [vmem:[%s5] sm:$0xf]
    %v5039 = vld [vmem:[%s5 + $0x4] sm:$0xf]
    %v5040 = vld [vmem:[%s5 + $0x8] sm:$0xf]
    %v5041 = vld [vmem:[%s5 + $0xc] sm:$0xf]
    %v5042 = vld [vmem:[%s5 + $0x10] sm:$0xf]
    %v5043 = vld [vmem:[%s5 + $0x14] sm:$0xf]
    %v5044 = vld [vmem:[%s5 + $0x18] sm:$0xf]
    %v5045 = vld [vmem:[%s5 + $0x1c] sm:$0xf]
    %v5046 = vld [vmem:[%s5 + $0x20] sm:$0xf]
    %v5047 = vld [vmem:[%s5 + $0x24] sm:$0xf]
    %v5048 = vld [vmem:[%s5 + $0x28] sm:$0xf]
    %v5049 = vld [vmem:[%s5 + $0x2c] sm:$0xf]
    %v5050 = vld [vmem:[%s5 + $0x30] sm:$0xf]
    %v5051 = vld [vmem:[%s5 + $0x34] sm:$0xf]
    %v5052 = vld [vmem:[%s5 + $0x38] sm:$0xf]
    %v5053 = vld [vmem:[%s5 + $0x3c] sm:$0xf]
    %v5054 = vld [vmem:[%s5 + $0x40] sm:$0xf]
    %v5055 = vld [vmem:[%s5 + $0x44] sm:$0xf]
    %v5056 = vld [vmem:[%s5 + $0x48] sm:$0xf]
    %v5057 = vld [vmem:[%s5 + $0x4c] sm:$0xf]
    %v5058 = vld [vmem:[%s5 + $0x50] sm:$0xf]
    %v5059 = vld [vmem:[%s5 + $0x54] sm:$0xf]
    %v5060 = vld [vmem:[%s5 + $0x58] sm:$0xf]
    %v5061 = vld [vmem:[%s5 + $0x5c] sm:$0xf]
    %v5062 = vld [vmem:[%s5 + $0x60] sm:$0xf]
    %v5063 = vld [vmem:[%s5 + $0x64] sm:$0xf]
    %v5064 = vld [vmem:[%s5 + $0x68] sm:$0xf]
    %v5065 = vld [vmem:[%s5 + $0x6c] sm:$0xf]
    %v5066 = vld [vmem:[%s5 + $0x70] sm:$0xf]
    %v5067 = vld [vmem:[%s5 + $0x74] sm:$0xf]
    %v5068 = vld [vmem:[%s5 + $0x78] sm:$0xf]
    %v5069 = vld [vmem:[%s5 + $0x7c] sm:$0xf]
    %v5070 = vpack.c.bf16 %v5036, %v5034
    %v5071 = vpack.c.bf16 %v5037, %v5035
    %v5072 = vld [vmem:[#allocation13] sm:$0x1]
    %v5074 = vlaneseq
    %v5075 = vshrl.u32 %v5074, 7
    %v5076 = vsub.s32 0, %v5075
    %v5077 = vrot.slane %v5072, %v5076
    %v5111 = vunpack.c.l.b16 %v5038
    %v5112 = vunpack.c.l.b16 %v5039
    %v5113 = vunpack.c.l.b16 %v5040
    %v5114 = vunpack.c.l.b16 %v5041
    %v5115 = vunpack.c.l.b16 %v5042
    %v5116 = vunpack.c.l.b16 %v5043
    %v5117 = vunpack.c.l.b16 %v5044
    %v5118 = vunpack.c.l.b16 %v5045
    %v5119 = vunpack.c.l.b16 %v5046
    %v5120 = vunpack.c.l.b16 %v5047
    %v5121 = vunpack.c.l.b16 %v5048
    %v5122 = vunpack.c.l.b16 %v5049
    %v5123 = vunpack.c.l.b16 %v5050
    %v5124 = vunpack.c.l.b16 %v5051
    %v5125 = vunpack.c.l.b16 %v5052
    %v5126 = vunpack.c.l.b16 %v5053
    %v5127 = vunpack.c.l.b16 %v5054
    %v5128 = vunpack.c.l.b16 %v5055
    %v5129 = vunpack.c.l.b16 %v5056
    %v5130 = vunpack.c.l.b16 %v5057
    %v5131 = vunpack.c.l.b16 %v5058
    %v5132 = vunpack.c.l.b16 %v5059
    %v5133 = vunpack.c.l.b16 %v5060
    %v5134 = vunpack.c.l.b16 %v5061
    %v5135 = vunpack.c.l.b16 %v5062
    %v5136 = vunpack.c.l.b16 %v5063
    %v5137 = vunpack.c.l.b16 %v5064
    %v5138 = vunpack.c.l.b16 %v5065
    %v5139 = vunpack.c.l.b16 %v5066
    %v5140 = vunpack.c.l.b16 %v5067
    %v5141 = vunpack.c.l.b16 %v5068
    %v5142 = vunpack.c.l.b16 %v5069
    %v5143 = vpack.c.b16 %v5112, %v5111
    %v5144 = vpack.c.b16 %v5114, %v5113
    %v5145 = vpack.c.b16 %v5116, %v5115
    %v5146 = vpack.c.b16 %v5118, %v5117
    %v5147 = vpack.c.b16 %v5120, %v5119
    %v5148 = vpack.c.b16 %v5122, %v5121
    %v5149 = vpack.c.b16 %v5124, %v5123
    %v5150 = vpack.c.b16 %v5126, %v5125
    %v5151 = vpack.c.b16 %v5128, %v5127
    %v5152 = vpack.c.b16 %v5130, %v5129
    %v5153 = vpack.c.b16 %v5132, %v5131
    %v5154 = vpack.c.b16 %v5134, %v5133
    %v5155 = vpack.c.b16 %v5136, %v5135
    %v5156 = vpack.c.b16 %v5138, %v5137
    %v5157 = vpack.c.b16 %v5140, %v5139
    %v5158 = vpack.c.b16 %v5142, %v5141
    %5175 = vmatprep.subr.bf16.mxu0 0
    %5176 = vmatpush1.bf16.msra.mxu0 %v5150
    %5177 = vmatprep.subr.bf16.mxu0 0
    %5178 = vmatpush1.bf16.msra.mxu0 %v5149
    %5179 = vmatprep.subr.bf16.mxu0 0
    %5180 = vmatpush1.bf16.msra.mxu0 %v5148
    %5181 = vmatprep.subr.bf16.mxu0 0
    %5182 = vmatpush1.bf16.msra.mxu0 %v5147
    %5183 = vmatprep.subr.bf16.mxu0 0
    %5184 = vmatpush1.bf16.msra.mxu0 %v5146
    %5185 = vmatprep.subr.bf16.mxu0 0
    %5186 = vmatpush1.bf16.msra.mxu0 %v5145
    %5187 = vmatprep.subr.bf16.mxu0 0
    %5188 = vmatpush1.bf16.msra.mxu0 %v5144
    %5189 = vmatprep.subr.bf16.mxu0 0
    %5190 = vmatpush1.bf16.msra.mxu0 %v5143
    %5191 = vmatprep.subr.bf16.mxu0 0
    %5192 = vmatpush2.bf16.msra.mxu0 %v5158
    %5193 = vmatprep.subr.bf16.mxu0 0
    %5194 = vmatpush2.bf16.msra.mxu0 %v5157
    %5195 = vmatprep.subr.bf16.mxu0 0
    %5196 = vmatpush2.bf16.msra.mxu0 %v5156
    %5197 = vmatprep.subr.bf16.mxu0 0
    %5198 = vmatpush2.bf16.msra.mxu0 %v5155
    %5199 = vmatprep.subr.bf16.mxu0 0
    %5200 = vmatpush2.bf16.msra.mxu0 %v5154
    %5201 = vmatprep.subr.bf16.mxu0 0
    %5202 = vmatpush2.bf16.msra.mxu0 %v5153
    %5203 = vmatprep.subr.bf16.mxu0 0
    %5204 = vmatpush2.bf16.msra.mxu0 %v5152
    %5205 = vmatprep.subr.bf16.mxu0 0
    %5206 = vmatpush2.bf16.msra.mxu0 %v5151
    %5207 = vmatprep.mubr.bf16.mxu0 %v5071
    %5208 = vmatmul.mubr.bf16.gmra.mxu0 %v5070
    %v5209 = vpop.f32.mrf.mxu0
    %v5210 = vadd.f32 %v5077, %v5209
    %v5211 = vpop.f32.mrf.mxu0
    %v5212 = vpop.f32.mrf.mxu0
    %v5213 = vadd.f32 %v5077, %v5212
    %v5214 = vpop.f32.mrf.mxu0
    %5215 = vdwg.mxu0
    %v5216 = vmax.f32 %v5210, 0.0
    %v5217 = vmax.f32 %v5213, 0.0
    %5220 = vrot.lane.b32.xlu0 %v5216, 24
    %v5221 = vpop.permute.xlu0 %5220
    %5222 = vrot.lane.b32.xlu0 %v5217, 24
    %v5223 = vpop.permute.xlu0 %5222
    %5226 = vrot.lane.b32.xlu0 %v5216, 48
    %v5227 = vpop.permute.xlu0 %5226
    %5228 = vrot.lane.b32.xlu0 %v5217, 48
    %v5229 = vpop.permute.xlu0 %5228
    %5232 = vrot.lane.b32.xlu0 %v5216, 72
    %v5233 = vpop.permute.xlu0 %5232
    %5234 = vrot.lane.b32.xlu0 %v5217, 72
    %v5235 = vpop.permute.xlu0 %5234
    %5238 = vrot.lane.b32.xlu0 %v5216, 96
    %v5239 = vpop.permute.xlu0 %5238
    %5240 = vrot.lane.b32.xlu0 %v5217, 96
    %v5241 = vpop.permute.xlu0 %5240
    %5244 = vrot.lane.b32.xlu0 %v5216, 120
    %v5245 = vpop.permute.xlu0 %5244
    %5246 = vrot.lane.b32.xlu0 %v5217, 120
    %v5247 = vpop.permute.xlu0 %5246
    %5250 = vrot.lane.b32.xlu0 %v5216, 16
    %v5251 = vpop.permute.xlu0 %5250
    %5252 = vrot.lane.b32.xlu0 %v5217, 16
    %v5253 = vpop.permute.xlu0 %5252
    %5256 = vrot.lane.b32.xlu0 %v5216, 40
    %v5257 = vpop.permute.xlu0 %5256
    %5258 = vrot.lane.b32.xlu0 %v5217, 40
    %v5259 = vpop.permute.xlu0 %5258
    %v5262 = vsel %vm172, %v5216, %v5221
    %v5263 = vsel %vm172, %v5217, %v5223
    %vm5264 = vcmask 392192
    %v5265 = vsel %vm5264, %v5262, %v5227
    %v5266 = vsel %vm5264, %v5263, %v5229
    %vm5267 = vcmask 588800
    %v5268 = vsel %vm5267, %v5265, %v5233
    %v5269 = vsel %vm5267, %v5266, %v5235
    %vm5270 = vcmask 785408
    %v5271 = vsel %vm5270, %v5268, %v5239
    %v5272 = vsel %vm5270, %v5269, %v5241
    %vm5273 = vcmask 982016
    %v5274 = vsel %vm5273, %v5271, %v5245
    %v5275 = vsel %vm5273, %v5272, %v5247
    %vm5276 = vcmask 130048
    %v5277 = vsel %vm5276, %v5245, %v5251
    %v5278 = vsel %vm5276, %v5247, %v5253
    %vm5279 = vcmask 326656
    %v5280 = vsel %vm5279, %v5277, %v5257
    %v5281 = vsel %vm5279, %v5278, %v5259
    %v5282 = vld [vmem:[#allocation14] sm:$0xff]
    %v5283 = vld [vmem:[#allocation14 + $0x8] sm:$0xff]
    %v5284 = vld [vmem:[#allocation14 + $0x10] sm:$0xff]
    %v5285 = vld [vmem:[#allocation14 + $0x18] sm:$0xff]
    %v5286 = vmul.f32 %v5274, %v5282
    %v5287 = vmul.f32 %v5280, %v5283
    %v5288 = vmul.f32 %v5275, %v5284
    %v5289 = vmul.f32 %v5281, %v5285
    %v5290 = vld [vmem:[#allocation16] sm:$0x3]
    %v5291 = vpack.c.bf16 %v5290, %v5290
    %v5292 = vpack.c.bf16 %v5288, %v5286
    %v5293 = vpack.c.bf16 %v5289, %v5287
    %v5295 = vsel %vm5276, %v5291, 0
    %5297 = vmatprep.subr.bf16.mxu0 0
    %5298 = vmatpush1.bf16.msra.mxu0 0
    %5299 = vmatprep.subr.bf16.mxu0 0
    %5300 = vmatpush1.bf16.msra.mxu0 0
    %5301 = vmatprep.subr.bf16.mxu0 0
    %5302 = vmatpush1.bf16.msra.mxu0 0
    %5303 = vmatprep.subr.bf16.mxu0 0
    %5304 = vmatpush1.bf16.msra.mxu0 0
    %5305 = vmatprep.subr.bf16.mxu0 0
    %5306 = vmatpush1.bf16.msra.mxu0 0
    %5307 = vmatprep.subr.bf16.mxu0 0
    %5308 = vmatpush1.bf16.msra.mxu0 0
    %5309 = vmatprep.subr.bf16.mxu0 0
    %5310 = vmatpush1.bf16.msra.mxu0 0
    %5311 = vmatprep.subr.bf16.mxu0 %v5293
    %5312 = vmatpush1.bf16.msra.mxu0 %v5292
    %5313 = vmatprep.subr.bf16.mxu0 0
    %5314 = vmatpush2.bf16.msra.mxu0 0
    %5315 = vmatprep.subr.bf16.mxu0 0
    %5316 = vmatpush2.bf16.msra.mxu0 0
    %5317 = vmatprep.subr.bf16.mxu0 0
    %5318 = vmatpush2.bf16.msra.mxu0 0
    %5319 = vmatprep.subr.bf16.mxu0 0
    %5320 = vmatpush2.bf16.msra.mxu0 0
    %5321 = vmatprep.subr.bf16.mxu0 0
    %5322 = vmatpush2.bf16.msra.mxu0 0
    %5323 = vmatprep.subr.bf16.mxu0 0
    %5324 = vmatpush2.bf16.msra.mxu0 0
    %5325 = vmatprep.subr.bf16.mxu0 0
    %5326 = vmatpush2.bf16.msra.mxu0 0
    %5327 = vmatprep.subr.bf16.mxu0 0
    %5328 = vmatpush2.bf16.msra.mxu0 0
    %5329 = vmatprep.mubr.bf16.mxu0 0
    %5330 = vmatmul.mubr.bf16.gmra.mxu0 %v5295
    %v5331 = vpop.f32.mrf.mxu0
    %v5332 = vadd.f32 0.0, %v5331
    %v5333 = vpop.f32.mrf.mxu0
    %v5334 = vadd.f32 0.0, %v5333
    %v5335 = vpop.f32.mrf.mxu0
    %v5336 = vpop.f32.mrf.mxu0
    %5337 = vdwg.mxu0
    %v5338 = vld [vmem:[#allocation17] sm:$0xf]
    %v5339 = vld [vmem:[#allocation17 + $0x4] sm:$0xf]
    %v5340 = vld [vmem:[#allocation17 + $0x8] sm:$0xf]
    %v5341 = vld [vmem:[#allocation17 + $0xc] sm:$0xf]
    %v5342 = vld [vmem:[#allocation17 + $0x10] sm:$0xf]
    %v5343 = vld [vmem:[#allocation17 + $0x14] sm:$0xf]
    %v5344 = vld [vmem:[#allocation17 + $0x18] sm:$0xf]
    %v5345 = vld [vmem:[#allocation17 + $0x1c] sm:$0xf]
    %v5346 = vld [vmem:[#allocation17 + $0x20] sm:$0xf]
    %v5347 = vld [vmem:[#allocation17 + $0x24] sm:$0xf]
    %v5348 = vld [vmem:[#allocation17 + $0x28] sm:$0xf]
    %v5349 = vld [vmem:[#allocation17 + $0x2c] sm:$0xf]
    %v5350 = vld [vmem:[#allocation17 + $0x30] sm:$0xf]
    %v5351 = vld [vmem:[#allocation17 + $0x34] sm:$0xf]
    %v5352 = vld [vmem:[#allocation17 + $0x38] sm:$0xf]
    %v5353 = vld [vmem:[#allocation17 + $0x3c] sm:$0xf]
    %v5354 = vld [vmem:[#allocation17 + $0x40] sm:$0xf]
    %v5355 = vld [vmem:[#allocation17 + $0x44] sm:$0xf]
    %v5356 = vld [vmem:[#allocation17 + $0x48] sm:$0xf]
    %v5357 = vld [vmem:[#allocation17 + $0x4c] sm:$0xf]
    %v5358 = vld [vmem:[#allocation17 + $0x50] sm:$0xf]
    %v5359 = vld [vmem:[#allocation17 + $0x54] sm:$0xf]
    %v5360 = vld [vmem:[#allocation17 + $0x58] sm:$0xf]
    %v5361 = vld [vmem:[#allocation17 + $0x5c] sm:$0xf]
    %v5362 = vpack.c.bf16 %v5332, %v5332
    %v5363 = vpack.c.bf16 %v5334, %v5334
    %v5364 = vld [vmem:[#allocation19] sm:$0x1]
    %v5366 = vlaneseq
    %v5367 = vshrl.u32 %v5366, 7
    %v5368 = vsub.s32 0, %v5367
    %v5369 = vrot.slane %v5364, %v5368
    %v5395 = vunpack.c.l.b16 %v5338
    %v5396 = vunpack.c.l.b16 %v5339
    %v5397 = vunpack.c.l.b16 %v5340
    %v5398 = vunpack.c.l.b16 %v5341
    %v5399 = vunpack.c.l.b16 %v5342
    %v5400 = vunpack.c.l.b16 %v5343
    %v5401 = vunpack.c.l.b16 %v5344
    %v5402 = vunpack.c.l.b16 %v5345
    %v5403 = vunpack.c.l.b16 %v5346
    %v5404 = vunpack.c.l.b16 %v5347
    %v5405 = vunpack.c.l.b16 %v5348
    %v5406 = vunpack.c.l.b16 %v5349
    %v5407 = vunpack.c.l.b16 %v5350
    %v5408 = vunpack.c.l.b16 %v5351
    %v5409 = vunpack.c.l.b16 %v5352
    %v5410 = vunpack.c.l.b16 %v5353
    %v5411 = vunpack.c.l.b16 %v5354
    %v5412 = vunpack.c.l.b16 %v5355
    %v5413 = vunpack.c.l.b16 %v5356
    %v5414 = vunpack.c.l.b16 %v5357
    %v5415 = vunpack.c.l.b16 %v5358
    %v5416 = vunpack.c.l.b16 %v5359
    %v5417 = vunpack.c.l.b16 %v5360
    %v5418 = vunpack.c.l.b16 %v5361
    %v5419 = vpack.c.b16 %v5396, %v5395
    %v5420 = vpack.c.b16 %v5398, %v5397
    %v5421 = vpack.c.b16 %v5400, %v5399
    %v5422 = vpack.c.b16 %v5402, %v5401
    %v5423 = vpack.c.b16 %v5404, %v5403
    %v5424 = vpack.c.b16 %v5406, %v5405
    %v5425 = vpack.c.b16 %v5408, %v5407
    %v5426 = vpack.c.b16 %v5410, %v5409
    %v5427 = vpack.c.b16 %v5412, %v5411
    %v5428 = vpack.c.b16 %v5414, %v5413
    %v5429 = vpack.c.b16 %v5416, %v5415
    %v5430 = vpack.c.b16 %v5418, %v5417
    %v5444 = vsel %vm435, %v5363, 0
    %5446 = vmatprep.subr.bf16.mxu0 0
    %5447 = vmatpush1.bf16.msra.mxu0 %v5426
    %5448 = vmatprep.subr.bf16.mxu0 0
    %5449 = vmatpush1.bf16.msra.mxu0 %v5425
    %5450 = vmatprep.subr.bf16.mxu0 0
    %5451 = vmatpush1.bf16.msra.mxu0 %v5424
    %5452 = vmatprep.subr.bf16.mxu0 0
    %5453 = vmatpush1.bf16.msra.mxu0 %v5423
    %5454 = vmatprep.subr.bf16.mxu0 0
    %5455 = vmatpush1.bf16.msra.mxu0 %v5422
    %5456 = vmatprep.subr.bf16.mxu0 0
    %5457 = vmatpush1.bf16.msra.mxu0 %v5421
    %5458 = vmatprep.subr.bf16.mxu0 0
    %5459 = vmatpush1.bf16.msra.mxu0 %v5420
    %5460 = vmatprep.subr.bf16.mxu0 0
    %5461 = vmatpush1.bf16.msra.mxu0 %v5419
    %5462 = vmatprep.subr.bf16.mxu0 0
    %5463 = vmatpush2.bf16.msra.mxu0 0
    %5464 = vmatprep.subr.bf16.mxu0 0
    %5465 = vmatpush2.bf16.msra.mxu0 0
    %5466 = vmatprep.subr.bf16.mxu0 0
    %5467 = vmatpush2.bf16.msra.mxu0 0
    %5468 = vmatprep.subr.bf16.mxu0 0
    %5469 = vmatpush2.bf16.msra.mxu0 0
    %5470 = vmatprep.subr.bf16.mxu0 0
    %5471 = vmatpush2.bf16.msra.mxu0 %v5430
    %5472 = vmatprep.subr.bf16.mxu0 0
    %5473 = vmatpush2.bf16.msra.mxu0 %v5429
    %5474 = vmatprep.subr.bf16.mxu0 0
    %5475 = vmatpush2.bf16.msra.mxu0 %v5428
    %5476 = vmatprep.subr.bf16.mxu0 0
    %5477 = vmatpush2.bf16.msra.mxu0 %v5427
    %5478 = vmatprep.mubr.bf16.mxu0 %v5444
    %5479 = vmatmul.mubr.bf16.gmra.mxu0 %v5362
    %v5480 = vpop.f32.mrf.mxu0
    %v5481 = vadd.f32 %v5369, %v5480
    %v5482 = vpop.f32.mrf.mxu0
    %v5483 = vpop.f32.mrf.mxu0
    %v5484 = vpop.f32.mrf.mxu0
    %5485 = vdwg.mxu0
    %v5486 = vmax.f32 %v5481, 0.0
    %v5487 = vld [vmem:[%s11] sm:$0xf]
    %v5488 = vld [vmem:[%s11 + $0x4] sm:$0xf]
    %v5489 = vld [vmem:[%s11 + $0x8] sm:$0xf]
    %v5490 = vld [vmem:[%s11 + $0xc] sm:$0xf]
    %v5491 = vpack.c.bf16 %v5486, %v5486
    %v5492 = vld [vmem:[#allocation4] sm:$0x1]
    %v5494 = vlaneseq
    %v5495 = vshrl.u32 %v5494, 7
    %v5496 = vsub.s32 0, %v5495
    %v5497 = vrot.slane %v5492, %v5496
    %5500 = vrot.lane.b32.xlu0 %v5491, 64
    %v5501 = vpop.permute.xlu0 %5500
    %v5506 = vunpack.c.l.b16 %v5487
    %v5507 = vunpack.c.l.b16 %v5488
    %v5508 = vunpack.c.l.b16 %v5489
    %v5509 = vunpack.c.l.b16 %v5490
    %v5510 = vpack.c.b16 %v5507, %v5506
    %v5511 = vpack.c.b16 %v5509, %v5508
    %vm5514 = vcmask 261120
    %v5516 = vsel %vm5514, %v5501, 0
    %5518 = vmatprep.subr.bf16.mxu0 0
    %5519 = vmatpush1.bf16.msra.mxu0 0
    %5520 = vmatprep.subr.bf16.mxu0 0
    %5521 = vmatpush1.bf16.msra.mxu0 0
    %5522 = vmatprep.subr.bf16.mxu0 0
    %5523 = vmatpush1.bf16.msra.mxu0 0
    %5524 = vmatprep.subr.bf16.mxu0 0
    %5525 = vmatpush1.bf16.msra.mxu0 0
    %5526 = vmatprep.subr.bf16.mxu0 0
    %5527 = vmatpush1.bf16.msra.mxu0 0
    %5528 = vmatprep.subr.bf16.mxu0 0
    %5529 = vmatpush1.bf16.msra.mxu0 0
    %5530 = vmatprep.subr.bf16.mxu0 0
    %5531 = vmatpush1.bf16.msra.mxu0 %v5511
    %5532 = vmatprep.subr.bf16.mxu0 0
    %5533 = vmatpush1.bf16.msra.mxu0 %v5510
    %5534 = vmatprep.subr.bf16.mxu0 0
    %5535 = vmatpush2.bf16.msra.mxu0 0
    %5536 = vmatprep.subr.bf16.mxu0 0
    %5537 = vmatpush2.bf16.msra.mxu0 0
    %5538 = vmatprep.subr.bf16.mxu0 0
    %5539 = vmatpush2.bf16.msra.mxu0 0
    %5540 = vmatprep.subr.bf16.mxu0 0
    %5541 = vmatpush2.bf16.msra.mxu0 0
    %5542 = vmatprep.subr.bf16.mxu0 0
    %5543 = vmatpush2.bf16.msra.mxu0 0
    %5544 = vmatprep.subr.bf16.mxu0 0
    %5545 = vmatpush2.bf16.msra.mxu0 0
    %5546 = vmatprep.subr.bf16.mxu0 0
    %5547 = vmatpush2.bf16.msra.mxu0 0
    %5548 = vmatprep.subr.bf16.mxu0 0
    %5549 = vmatpush2.bf16.msra.mxu0 0
    %5550 = vmatprep.mubr.bf16.mxu0 0
    %5551 = vmatmul.mubr.bf16.gmra.mxu0 %v5516
    %v5552 = vpop.f32.mrf.mxu0
    %v5553 = vadd.f32 %v5497, %v5552
    %v5554 = vpop.f32.mrf.mxu0
    %v5555 = vpop.f32.mrf.mxu0
    %v5556 = vpop.f32.mrf.mxu0
    %5557 = vdwg.mxu0
    %v5558 = vtanh.pop %v5553
    %vm5559 = vcmask 1024
    %5560 = vst.msk [vmem:[%s14] sm:$0x3] %vm5559, %v5558
    %v5561 = vsel %vm439, %v5481, -inf
    %5562 = vmax.xlane.f32.xlu0 %v5561
    %v5563 = vpop.xlane.xlu0 %5562
    %v5564 = vsub.f32 %v5481, %v5563
    %v5565 = vmul.f32 %v5564, 1.442695
    %v5566 = vpow.pop %v5565
    %v5567 = vsel %vm439, %v5566, 0.0
    %5568 = vadd.xlane.f32.xlu0 %v5567
    %v5569 = vpop.xlane.xlu0 %5568
    %v5570 = vrcp.pop %v5569
    %v5571 = vmul.f32 %v5566, %v5570
    %5572 = vst.msk [vmem:[#allocation20] sm:$0x3] %vm439, %v5571
    // Predicated region
    $region90: #{residual_alpha_forward.1} parent=1 // pred_check
      _
    $region91: #{residual_alpha_forward.1} parent=1 // pred_check_branch
      %5574 = sbr.rel (0) target = $region93
    $region92: #{residual_alpha_forward.1} parent=1 // pred_region
      %s5576 = ssub.s32 32, 32
      %5577 = vsyncadd [#allocation7], %s5576
      %s5579 = sshll.u32 [#allocation20], 4
      %s5580 = int_to_ptr.vmem [resolvable:$true] %s5579
      %5582 = dma.vmem_to_hbm [thread:$0]  %s5580, 32, %s13, [#allocation7]
    $region93: #{residual_alpha_forward.1} parent=1 // pred_fallthru
      _
    // Predicated region
    $region94: #{residual_alpha_forward.1} parent=1 // pred_check
      _
    $region95: #{residual_alpha_forward.1} parent=1 // pred_check_branch
      %5584 = sbr.rel (0) target = $region97
    $region96: #{residual_alpha_forward.1} parent=1 // pred_region
      _
    $region97: #{residual_alpha_forward.1} parent=1 // pred_fallthru
      _
    // Predicated region
    $region98: #{residual_alpha_forward.1} parent=1 // pred_check
      _
    $region99: #{residual_alpha_forward.1} parent=1 // pred_check_branch
      %5586 = sbr.rel (0) target = $region101
    $region100: #{residual_alpha_forward.1} parent=1 // pred_region
      %5587 = dma.done [#allocation7], 32
    $region101: #{residual_alpha_forward.1} parent=1 // pred_fallthru
      _
    // Predicated region
    $region102: #{residual_alpha_forward.1} parent=1 // pred_check
      _
    $region103: #{residual_alpha_forward.1} parent=1 // pred_check_branch
      %5589 = sbr.rel (0) target = $region105
    $region104: #{residual_alpha_forward.1} parent=1 // pred_region
      _
    $region105: #{residual_alpha_forward.1} parent=1 // pred_fallthru
      _
    %5590 = vsyncpa [#allocation6], 1
    %5591 = vsyncpa [#allocation9], 1
    %5592 = vsyncpa [#allocation12], 1
    %5593 = vsyncpa [#allocation15], 1
    %5594 = vsyncpa [#allocation18], 1
    %5595 = vsyncpa [#allocation7], 1

</llo_original>
